<compile_context>
chip_gen: v7x
topology: tpu7x:2x2x1
jax: 0.10.0
libtpu: 0.0.40
codegen_flags: <defaults>
</compile_context>

<pallas_src>
import functools

import jax
import jax.numpy as jnp
import numpy as np
from jax.experimental import pallas as pl
from jax.experimental.pallas import tpu as pltpu


# ----------------------------------------------------------------------------
# In-kernel helpers
# ----------------------------------------------------------------------------
def _mish_fast(x):
    # mish(x) = x * tanh(softplus(x)).  With e = exp(x):
    #   tanh(log1p(e)) = ((1+e)^2 - 1) / ((1+e)^2 + 1) = (e^2 + 2e) / (e^2 + 2e + 2)
    # -> a single transcendental.  Keep PyTorch's softplus threshold: for
    # x > 20, softplus == x and tanh(x) == 1 in f32, so mish(x) == x (also
    # avoids overflowing e^2).
    e = jnp.exp(jnp.minimum(x, 20.0))
    num = e * (e + 2.0)
    return jnp.where(x > 20.0, x, x * (num / (num + 2.0)))


def _conv3x3(x_flat, w_ref, m_ref, width):
    """3x3 conv (padding=1, stride=1) on lane-dense (Cin, H*W) input.

    w_ref : (9, Cout, Cin)  tap weights, tap t = 3*ky + kx
    m_ref : (9, 1, H*W)     validity masks (0 where the tap would read padding)
    """
    acc = None
    for t in range(9):
        dy, dx = t // 3 - 1, t % 3 - 1
        shift = dy * width + dx
        xs = x_flat if shift == 0 else jnp.roll(x_flat, -shift, axis=1)
        c = jnp.dot(w_ref[t], xs, preferred_element_type=jnp.float32)
        if shift != 0:
            c = c * m_ref[t]
        acc = c if acc is None else acc + c
    return acc


def _group_norm(acc, gamma, beta, groups, eps=1e-5):
    """GroupNorm on (C, HW); channels of a group are contiguous rows.

    Lane-reduce to per-channel sums, then per-group sums via static sublane
    slices (matmul-free, reshape-free group reduction).  Two-pass mean/var.
    """
    c, hw = acc.shape
    cpg = c // groups
    inv_n = 1.0 / (cpg * hw)

    def per_channel_group_mean(col):              # col: (C, 1) per-channel sums
        parts = []
        for g in range(groups):
            s = jnp.sum(col[g * cpg:(g + 1) * cpg, :], axis=0, keepdims=True)
            parts.append(jnp.broadcast_to(s, (cpg, 1)))
        return jnp.concatenate(parts, axis=0) * inv_n        # (C, 1)

    mean_c = per_channel_group_mean(jnp.sum(acc, axis=1, keepdims=True))
    diff = acc - mean_c
    var_c = per_channel_group_mean(jnp.sum(diff * diff, axis=1, keepdims=True))
    return diff * jax.lax.rsqrt(var_c + eps) * gamma + beta


# ----------------------------------------------------------------------------
# Fused kernel: time-MLP + block1 + block2 + residual, one batch element/step
# ----------------------------------------------------------------------------
def fused_resnet_block_kernel(x_ref, t_ref, w1_ref, w2_ref, wl_ref, pp_ref,
                              m_ref, *rest, groups, width, identity_res):
    if identity_res:
        (out_ref,) = rest
        wr_ref = None
    else:
        wr_ref, out_ref = rest

    x = x_ref[0]                       # (Cin, HW)
    pp = pp_ref[...]                   # (Cout, 8): b1 g1 be1 b2 g2 be2 bl br

    # ---- time MLP: Mish -> Linear, produced directly as a (Cout, 1) column
    temb = jnp.dot(wl_ref[...], _mish_fast(t_ref[0]),
                   preferred_element_type=jnp.float32) + pp[:, 6:7]

    # ---- block1: conv3x3 + GroupNorm + Mish, then + mlp(time_emb) broadcast
    acc1 = _conv3x3(x, w1_ref, m_ref, width) + pp[:, 0:1]
    h1 = _mish_fast(_group_norm(acc1, pp[:, 1:2], pp[:, 2:3], groups)) + temb

    # ---- block2: conv3x3 + GroupNorm + Mish
    acc2 = _conv3x3(h1, w2_ref, m_ref, width) + pp[:, 3:4]
    h2 = _mish_fast(_group_norm(acc2, pp[:, 4:5], pp[:, 5:6], groups))

    # ---- residual
    if identity_res:
        res = x                        # nn.Identity(): plain add, no 1x1 matmul
    else:
        res = jnp.dot(wr_ref[...], x, preferred_element_type=jnp.float32) + pp[:, 7:8]
    out_ref[0] = h2 + res


# ----------------------------------------------------------------------------
# Wrapper (plain-JAX glue: layout plumbing only)
# ----------------------------------------------------------------------------
def _tap_masks(h, w):
    hw = h * w
    ys, xs = np.divmod(np.arange(hw), w)
    m = np.zeros((9, 1, hw), np.float32)
    for t in range(9):
        dy, dx = t // 3 - 1, t % 3 - 1
        valid = (ys + dy >= 0) & (ys + dy < h) & (xs + dx >= 0) & (xs + dx < w)
        m[t, 0] = valid.astype(np.float32)
    return jnp.asarray(m)


def resnet_block_forward(x, time_emb, params, *, groups):
    """Pallas implementation of ResnetBlock.forward.  x: (B, dim, H, W) NCHW."""
    B, Cin, H, W = x.shape
    HW = H * W
    Cout = params["w1"].shape[0]
    T = time_emb.shape[1]
    identity_res = (Cin == Cout)

    x_flat = x.reshape(B, Cin, HW).astype(jnp.float32)
    t_col = time_emb.astype(jnp.float32)[:, :, None]                    # (B, T, 1)
    w1_taps = jnp.transpose(params["w1"], (2, 3, 0, 1)).reshape(9, Cout, Cin)
    w2_taps = jnp.transpose(params["w2"], (2, 3, 0, 1)).reshape(9, Cout, Cout)
    wl = params["wl"]                                                   # (Cout, T)

    br = jnp.zeros((Cout,), jnp.float32) if identity_res else params["br"]
    pp = jnp.stack([params["b1"], params["g1"], params["be1"],
                    params["b2"], params["g2"], params["be2"],
                    params["bl"], br], axis=1)                          # (Cout, 8)

    masks = _tap_masks(H, W)                                            # (9, 1, HW)

    kernel = functools.partial(fused_resnet_block_kernel, groups=groups,
                               width=W, identity_res=identity_res)

    operands = [x_flat, t_col, w1_taps, w2_taps, wl, pp, masks]
    in_specs = [
        pl.BlockSpec((1, Cin, HW), lambda i: (i, 0, 0)),
        pl.BlockSpec((1, T, 1), lambda i: (i, 0, 0)),
        pl.BlockSpec((9, Cout, Cin), lambda i: (0, 0, 0)),
        pl.BlockSpec((9, Cout, Cout), lambda i: (0, 0, 0)),
        pl.BlockSpec((Cout, T), lambda i: (0, 0)),
        pl.BlockSpec((Cout, 8), lambda i: (0, 0)),
        pl.BlockSpec((9, 1, HW), lambda i: (0, 0, 0)),
    ]
    if not identity_res:
        operands.append(params["wr"].reshape(Cout, Cin))
        in_specs.append(pl.BlockSpec((Cout, Cin), lambda i: (0, 0)))

    out = pl.pallas_call(
        kernel,
        out_shape=jax.ShapeDtypeStruct((B, Cout, HW), jnp.float32),
        grid=(B,),
        in_specs=in_specs,
        out_specs=pl.BlockSpec((1, Cout, HW), lambda i: (i, 0, 0)),
        compiler_params=pltpu.CompilerParams(
            dimension_semantics=("parallel",),   # v7x: one batch element per TC
            vmem_limit_bytes=32 * 1024 * 1024,   # explicit budget; fits all gens
        ),
    )(*operands)
    return out.reshape(B, Cout, H, W)


# ----------------------------------------------------------------------------
# Pure-JAX reference (exact Mish) for correctness check
# ----------------------------------------------------------------------------
def _mish_exact(x):
    sp = jnp.where(x > 20.0, x, jnp.log1p(jnp.exp(jnp.minimum(x, 20.0))))
    return x * jnp.tanh(sp)


def _ref_block(x, w, b, gamma, beta, groups):
    y = jax.lax.conv_general_dilated(
        x, w, (1, 1), ((1, 1), (1, 1)),
        dimension_numbers=("NCHW", "OIHW", "NCHW"),
        precision=jax.lax.Precision.HIGHEST) + b[None, :, None, None]
    B, C, H, W = y.shape
    yg = y.reshape(B, groups, C // groups, H, W)
    mean = yg.mean(axis=(2, 3, 4), keepdims=True)
    var = ((yg - mean) ** 2).mean(axis=(2, 3, 4), keepdims=True)
    yn = ((yg - mean) / jnp.sqrt(var + 1e-5)).reshape(B, C, H, W)
    yn = yn * gamma[None, :, None, None] + beta[None, :, None, None]
    return _mish_exact(yn)


def ref_forward(x, time_emb, params, *, groups):
    h = _ref_block(x, params["w1"], params["b1"], params["g1"], params["be1"], groups)
    te = _mish_exact(time_emb) @ params["wl"].T + params["bl"]
    h = h + te[:, :, None, None]
    h = _ref_block(h, params["w2"], params["b2"], params["g2"], params["be2"], groups)
    Cin, Cout = x.shape[1], params["w1"].shape[0]
    if Cin == Cout:
        res = x
    else:
        res = jax.lax.conv_general_dilated(
            x, params["wr"], (1, 1), ((0, 0), (0, 0)),
            dimension_numbers=("NCHW", "OIHW", "NCHW"),
            precision=jax.lax.Precision.HIGHEST) + params["br"][None, :, None, None]
    return h + res


# ----------------------------------------------------------------------------
# Main
# ----------------------------------------------------------------------------
if __name__ == "__main__":
    B, dim, dim_out, H, W = 2, 4, 16, 16, 16
    time_emb_dim, groups = 32, 8

    keys = jax.random.split(jax.random.PRNGKey(0), 14)
    params = {
        "w1": 0.1 * jax.random.normal(keys[0], (dim_out, dim, 3, 3), jnp.float32),
        "b1": 0.05 * jax.random.normal(keys[1], (dim_out,), jnp.float32),
        "g1": 1.0 + 0.1 * jax.random.normal(keys[2], (dim_out,), jnp.float32),
        "be1": 0.1 * jax.random.normal(keys[3], (dim_out,), jnp.float32),
        "w2": 0.1 * jax.random.normal(keys[4], (dim_out, dim_out, 3, 3), jnp.float32),
        "b2": 0.05 * jax.random.normal(keys[5], (dim_out,), jnp.float32),
        "g2": 1.0 + 0.1 * jax.random.normal(keys[6], (dim_out,), jnp.float32),
        "be2": 0.1 * jax.random.normal(keys[7], (dim_out,), jnp.float32),
        "wl": 0.1 * jax.random.normal(keys[8], (dim_out, time_emb_dim), jnp.float32),
        "bl": 0.05 * jax.random.normal(keys[9], (dim_out,), jnp.float32),
        "wr": 0.1 * jax.random.normal(keys[10], (dim_out, dim, 1, 1), jnp.float32),
        "br": 0.05 * jax.random.normal(keys[11], (dim_out,), jnp.float32),
    }
    x = jax.random.normal(keys[12], (B, dim, H, W), jnp.float32)
    time_emb = jax.random.normal(keys[13], (B, time_emb_dim), jnp.float32)

    out = jax.block_until_ready(resnet_block_forward(x, time_emb, params, groups=groups))
    ref = jax.block_until_ready(ref_forward(x, time_emb, params, groups=groups))
    np.testing.assert_allclose(np.asarray(out), np.asarray(ref), rtol=5e-3, atol=5e-3)

    print("KERNEL_OK")
</pallas_src>

<mosaic_0001>
module attributes {stable_mosaic.version = 11 : i64} {
  func.func @fused_resnet_block_kernel(%arg0: i32, %arg1: memref<1x4x256xf32, #tpu.memory_space<vmem>>, %arg2: memref<1x32x1xf32, #tpu.memory_space<vmem>>, %arg3: memref<9x16x4xf32, #tpu.memory_space<vmem>>, %arg4: memref<9x16x16xf32, #tpu.memory_space<vmem>>, %arg5: memref<16x32xf32, #tpu.memory_space<vmem>>, %arg6: memref<16x8xf32, #tpu.memory_space<vmem>>, %arg7: memref<9x1x256xf32, #tpu.memory_space<vmem>>, %arg8: memref<16x4xf32, #tpu.memory_space<vmem>>, %arg9: memref<1x16x256xf32, #tpu.memory_space<vmem>>) attributes {dimension_semantics = [#tpu.dimension_semantics<parallel>], iteration_bounds = array<i64: 2>, scalar_prefetch = 0 : i64, scratch_operands = 0 : i64, tpu.core_type = #tpu.core_type<tc>, window_params = [{transform_indices = @transform_0, window_bounds = array<i64: 1, 4, 256>}, {transform_indices = @transform_1, window_bounds = array<i64: 1, 32, 1>}, {pipeline_mode = #tpu.pipeline_mode<synchronous>, transform_indices = @transform_2, window_bounds = array<i64: 9, 16, 4>}, {pipeline_mode = #tpu.pipeline_mode<synchronous>, transform_indices = @transform_3, window_bounds = array<i64: 9, 16, 16>}, {pipeline_mode = #tpu.pipeline_mode<synchronous>, transform_indices = @transform_4, window_bounds = array<i64: 16, 32>}, {pipeline_mode = #tpu.pipeline_mode<synchronous>, transform_indices = @transform_5, window_bounds = array<i64: 16, 8>}, {pipeline_mode = #tpu.pipeline_mode<synchronous>, transform_indices = @transform_6, window_bounds = array<i64: 9, 1, 256>}, {pipeline_mode = #tpu.pipeline_mode<synchronous>, transform_indices = @transform_7, window_bounds = array<i64: 16, 4>}, {transform_indices = @transform_8, window_bounds = array<i64: 1, 16, 256>}]} {
    %c0 = arith.constant 0 : index
    %c0_0 = arith.constant 0 : index
    %c0_1 = arith.constant 0 : index
    %0 = vector.load %arg1[%c0, %c0_0, %c0_1] : memref<1x4x256xf32, #tpu.memory_space<vmem>>, vector<1x4x256xf32>
    %1 = vector.shape_cast %0 : vector<1x4x256xf32> to vector<4x256xf32>
    %c0_2 = arith.constant 0 : index
    %c0_3 = arith.constant 0 : index
    %2 = vector.load %arg6[%c0_2, %c0_3] : memref<16x8xf32, #tpu.memory_space<vmem>>, vector<16x8xf32>
    %c0_4 = arith.constant 0 : index
    %c0_5 = arith.constant 0 : index
    %3 = vector.load %arg5[%c0_4, %c0_5] : memref<16x32xf32, #tpu.memory_space<vmem>>, vector<16x32xf32>
    %c0_6 = arith.constant 0 : index
    %c0_7 = arith.constant 0 : index
    %c0_8 = arith.constant 0 : index
    %4 = vector.load %arg2[%c0_6, %c0_7, %c0_8] : memref<1x32x1xf32, #tpu.memory_space<vmem>>, vector<1x32x1xf32>
    %5 = vector.shape_cast %4 : vector<1x32x1xf32> to vector<32x1xf32>
    %cst = arith.constant 2.000000e+01 : f32
    %6 = vector.broadcast %cst : f32 to vector<32x1xf32>
    %7 = arith.minimumf %5, %6 : vector<32x1xf32>
    %8 = math.exp %7 : vector<32x1xf32>
    %cst_9 = arith.constant 2.000000e+00 : f32
    %9 = vector.broadcast %cst_9 : f32 to vector<32x1xf32>
    %10 = arith.addf %8, %9 : vector<32x1xf32>
    %11 = arith.mulf %8, %10 : vector<32x1xf32>
    %cst_10 = arith.constant 2.000000e+01 : f32
    %12 = vector.broadcast %cst_10 : f32 to vector<32x1xf32>
    %13 = arith.cmpf ogt, %5, %12 : vector<32x1xf32>
    %cst_11 = arith.constant 2.000000e+00 : f32
    %14 = vector.broadcast %cst_11 : f32 to vector<32x1xf32>
    %15 = arith.addf %11, %14 : vector<32x1xf32>
    %16 = arith.divf %11, %15 : vector<32x1xf32>
    %17 = arith.mulf %5, %16 : vector<32x1xf32>
    %18 = arith.select %13, %5, %17 : vector<32x1xi1>, vector<32x1xf32>
    %cst_12 = arith.constant dense<0.000000e+00> : vector<16x1xf32>
    %19 = tpu.matmul %3, %18, %cst_12 {dimension_numbers = #tpu.dot_dimension_numbers<[1], [0], [0], [1], [0, 0, 1, 1], [], []>} : vector<16x32xf32>, vector<32x1xf32>, vector<16x1xf32> -> vector<16x1xf32>
    %20 = vector.extract_strided_slice %2 {offsets = [0, 6], sizes = [16, 1], strides = [1, 1]} : vector<16x8xf32> to vector<16x1xf32>
    %21 = arith.addf %19, %20 : vector<16x1xf32>
    %22 = vector.extract_strided_slice %1 {offsets = [0, 239], sizes = [4, 17], strides = [1, 1]} : vector<4x256xf32> to vector<4x17xf32>
    %23 = vector.extract_strided_slice %1 {offsets = [0, 0], sizes = [4, 239], strides = [1, 1]} : vector<4x256xf32> to vector<4x239xf32>
    %24 = tpu.concatenate %22, %23 in 1 : vector<4x17xf32>, vector<4x239xf32> -> vector<4x256xf32>
    %c0_13 = arith.constant 0 : index
    %c0_14 = arith.constant 0 : index
    %c0_15 = arith.constant 0 : index
    %25 = vector.load %arg3[%c0_13, %c0_14, %c0_15] : memref<9x16x4xf32, #tpu.memory_space<vmem>>, vector<1x16x4xf32>
    %26 = vector.shape_cast %25 : vector<1x16x4xf32> to vector<16x4xf32>
    %cst_16 = arith.constant dense<0.000000e+00> : vector<16x256xf32>
    %27 = tpu.matmul %26, %24, %cst_16 {dimension_numbers = #tpu.dot_dimension_numbers<[1], [0], [0], [1], [0, 0, 1, 1], [], []>} : vector<16x4xf32>, vector<4x256xf32>, vector<16x256xf32> -> vector<16x256xf32>
    %c0_17 = arith.constant 0 : index
    %c0_18 = arith.constant 0 : index
    %c0_19 = arith.constant 0 : index
    %28 = vector.load %arg7[%c0_17, %c0_18, %c0_19] : memref<9x1x256xf32, #tpu.memory_space<vmem>>, vector<1x1x256xf32>
    %29 = vector.shape_cast %28 : vector<1x1x256xf32> to vector<1x256xf32>
    %30 = vector.broadcast %29 : vector<1x256xf32> to vector<16x256xf32>
    %31 = arith.mulf %27, %30 : vector<16x256xf32>
    %32 = vector.extract_strided_slice %1 {offsets = [0, 240], sizes = [4, 16], strides = [1, 1]} : vector<4x256xf32> to vector<4x16xf32>
    %33 = vector.extract_strided_slice %1 {offsets = [0, 0], sizes = [4, 240], strides = [1, 1]} : vector<4x256xf32> to vector<4x240xf32>
    %34 = tpu.concatenate %32, %33 in 1 : vector<4x16xf32>, vector<4x240xf32> -> vector<4x256xf32>
    %c1 = arith.constant 1 : index
    %c0_20 = arith.constant 0 : index
    %c0_21 = arith.constant 0 : index
    %35 = vector.load %arg3[%c1, %c0_20, %c0_21] : memref<9x16x4xf32, #tpu.memory_space<vmem>>, vector<1x16x4xf32>
    %36 = vector.shape_cast %35 : vector<1x16x4xf32> to vector<16x4xf32>
    %cst_22 = arith.constant dense<0.000000e+00> : vector<16x256xf32>
    %37 = tpu.matmul %36, %34, %cst_22 {dimension_numbers = #tpu.dot_dimension_numbers<[1], [0], [0], [1], [0, 0, 1, 1], [], []>} : vector<16x4xf32>, vector<4x256xf32>, vector<16x256xf32> -> vector<16x256xf32>
    %c1_23 = arith.constant 1 : index
    %c0_24 = arith.constant 0 : index
    %c0_25 = arith.constant 0 : index
    %38 = vector.load %arg7[%c1_23, %c0_24, %c0_25] : memref<9x1x256xf32, #tpu.memory_space<vmem>>, vector<1x1x256xf32>
    %39 = vector.shape_cast %38 : vector<1x1x256xf32> to vector<1x256xf32>
    %40 = vector.broadcast %39 : vector<1x256xf32> to vector<16x256xf32>
    %41 = arith.mulf %37, %40 : vector<16x256xf32>
    %42 = arith.addf %31, %41 : vector<16x256xf32>
    %43 = vector.extract_strided_slice %1 {offsets = [0, 241], sizes = [4, 15], strides = [1, 1]} : vector<4x256xf32> to vector<4x15xf32>
    %44 = vector.extract_strided_slice %1 {offsets = [0, 0], sizes = [4, 241], strides = [1, 1]} : vector<4x256xf32> to vector<4x241xf32>
    %45 = tpu.concatenate %43, %44 in 1 : vector<4x15xf32>, vector<4x241xf32> -> vector<4x256xf32>
    %c2 = arith.constant 2 : index
    %c0_26 = arith.constant 0 : index
    %c0_27 = arith.constant 0 : index
    %46 = vector.load %arg3[%c2, %c0_26, %c0_27] : memref<9x16x4xf32, #tpu.memory_space<vmem>>, vector<1x16x4xf32>
    %47 = vector.shape_cast %46 : vector<1x16x4xf32> to vector<16x4xf32>
    %cst_28 = arith.constant dense<0.000000e+00> : vector<16x256xf32>
    %48 = tpu.matmul %47, %45, %cst_28 {dimension_numbers = #tpu.dot_dimension_numbers<[1], [0], [0], [1], [0, 0, 1, 1], [], []>} : vector<16x4xf32>, vector<4x256xf32>, vector<16x256xf32> -> vector<16x256xf32>
    %c2_29 = arith.constant 2 : index
    %c0_30 = arith.constant 0 : index
    %c0_31 = arith.constant 0 : index
    %49 = vector.load %arg7[%c2_29, %c0_30, %c0_31] : memref<9x1x256xf32, #tpu.memory_space<vmem>>, vector<1x1x256xf32>
    %50 = vector.shape_cast %49 : vector<1x1x256xf32> to vector<1x256xf32>
    %51 = vector.broadcast %50 : vector<1x256xf32> to vector<16x256xf32>
    %52 = arith.mulf %48, %51 : vector<16x256xf32>
    %53 = arith.addf %42, %52 : vector<16x256xf32>
    %54 = vector.extract_strided_slice %1 {offsets = [0, 255], sizes = [4, 1], strides = [1, 1]} : vector<4x256xf32> to vector<4x1xf32>
    %55 = vector.extract_strided_slice %1 {offsets = [0, 0], sizes = [4, 255], strides = [1, 1]} : vector<4x256xf32> to vector<4x255xf32>
    %56 = tpu.concatenate %54, %55 in 1 : vector<4x1xf32>, vector<4x255xf32> -> vector<4x256xf32>
    %c3 = arith.constant 3 : index
    %c0_32 = arith.constant 0 : index
    %c0_33 = arith.constant 0 : index
    %57 = vector.load %arg3[%c3, %c0_32, %c0_33] : memref<9x16x4xf32, #tpu.memory_space<vmem>>, vector<1x16x4xf32>
    %58 = vector.shape_cast %57 : vector<1x16x4xf32> to vector<16x4xf32>
    %cst_34 = arith.constant dense<0.000000e+00> : vector<16x256xf32>
    %59 = tpu.matmul %58, %56, %cst_34 {dimension_numbers = #tpu.dot_dimension_numbers<[1], [0], [0], [1], [0, 0, 1, 1], [], []>} : vector<16x4xf32>, vector<4x256xf32>, vector<16x256xf32> -> vector<16x256xf32>
    %c3_35 = arith.constant 3 : index
    %c0_36 = arith.constant 0 : index
    %c0_37 = arith.constant 0 : index
    %60 = vector.load %arg7[%c3_35, %c0_36, %c0_37] : memref<9x1x256xf32, #tpu.memory_space<vmem>>, vector<1x1x256xf32>
    %61 = vector.shape_cast %60 : vector<1x1x256xf32> to vector<1x256xf32>
    %62 = vector.broadcast %61 : vector<1x256xf32> to vector<16x256xf32>
    %63 = arith.mulf %59, %62 : vector<16x256xf32>
    %64 = arith.addf %53, %63 : vector<16x256xf32>
    %c4 = arith.constant 4 : index
    %c0_38 = arith.constant 0 : index
    %c0_39 = arith.constant 0 : index
    %65 = vector.load %arg3[%c4, %c0_38, %c0_39] : memref<9x16x4xf32, #tpu.memory_space<vmem>>, vector<1x16x4xf32>
    %66 = vector.shape_cast %65 : vector<1x16x4xf32> to vector<16x4xf32>
    %cst_40 = arith.constant dense<0.000000e+00> : vector<16x256xf32>
    %67 = tpu.matmul %66, %1, %cst_40 {dimension_numbers = #tpu.dot_dimension_numbers<[1], [0], [0], [1], [0, 0, 1, 1], [], []>} : vector<16x4xf32>, vector<4x256xf32>, vector<16x256xf32> -> vector<16x256xf32>
    %68 = arith.addf %64, %67 : vector<16x256xf32>
    %69 = vector.extract_strided_slice %1 {offsets = [0, 1], sizes = [4, 255], strides = [1, 1]} : vector<4x256xf32> to vector<4x255xf32>
    %70 = vector.extract_strided_slice %1 {offsets = [0, 0], sizes = [4, 1], strides = [1, 1]} : vector<4x256xf32> to vector<4x1xf32>
    %71 = tpu.concatenate %69, %70 in 1 : vector<4x255xf32>, vector<4x1xf32> -> vector<4x256xf32>
    %c5 = arith.constant 5 : index
    %c0_41 = arith.constant 0 : index
    %c0_42 = arith.constant 0 : index
    %72 = vector.load %arg3[%c5, %c0_41, %c0_42] : memref<9x16x4xf32, #tpu.memory_space<vmem>>, vector<1x16x4xf32>
    %73 = vector.shape_cast %72 : vector<1x16x4xf32> to vector<16x4xf32>
    %cst_43 = arith.constant dense<0.000000e+00> : vector<16x256xf32>
    %74 = tpu.matmul %73, %71, %cst_43 {dimension_numbers = #tpu.dot_dimension_numbers<[1], [0], [0], [1], [0, 0, 1, 1], [], []>} : vector<16x4xf32>, vector<4x256xf32>, vector<16x256xf32> -> vector<16x256xf32>
    %c5_44 = arith.constant 5 : index
    %c0_45 = arith.constant 0 : index
    %c0_46 = arith.constant 0 : index
    %75 = vector.load %arg7[%c5_44, %c0_45, %c0_46] : memref<9x1x256xf32, #tpu.memory_space<vmem>>, vector<1x1x256xf32>
    %76 = vector.shape_cast %75 : vector<1x1x256xf32> to vector<1x256xf32>
    %77 = vector.broadcast %76 : vector<1x256xf32> to vector<16x256xf32>
    %78 = arith.mulf %74, %77 : vector<16x256xf32>
    %79 = arith.addf %68, %78 : vector<16x256xf32>
    %80 = vector.extract_strided_slice %1 {offsets = [0, 15], sizes = [4, 241], strides = [1, 1]} : vector<4x256xf32> to vector<4x241xf32>
    %81 = vector.extract_strided_slice %1 {offsets = [0, 0], sizes = [4, 15], strides = [1, 1]} : vector<4x256xf32> to vector<4x15xf32>
    %82 = tpu.concatenate %80, %81 in 1 : vector<4x241xf32>, vector<4x15xf32> -> vector<4x256xf32>
    %c6 = arith.constant 6 : index
    %c0_47 = arith.constant 0 : index
    %c0_48 = arith.constant 0 : index
    %83 = vector.load %arg3[%c6, %c0_47, %c0_48] : memref<9x16x4xf32, #tpu.memory_space<vmem>>, vector<1x16x4xf32>
    %84 = vector.shape_cast %83 : vector<1x16x4xf32> to vector<16x4xf32>
    %cst_49 = arith.constant dense<0.000000e+00> : vector<16x256xf32>
    %85 = tpu.matmul %84, %82, %cst_49 {dimension_numbers = #tpu.dot_dimension_numbers<[1], [0], [0], [1], [0, 0, 1, 1], [], []>} : vector<16x4xf32>, vector<4x256xf32>, vector<16x256xf32> -> vector<16x256xf32>
    %c6_50 = arith.constant 6 : index
    %c0_51 = arith.constant 0 : index
    %c0_52 = arith.constant 0 : index
    %86 = vector.load %arg7[%c6_50, %c0_51, %c0_52] : memref<9x1x256xf32, #tpu.memory_space<vmem>>, vector<1x1x256xf32>
    %87 = vector.shape_cast %86 : vector<1x1x256xf32> to vector<1x256xf32>
    %88 = vector.broadcast %87 : vector<1x256xf32> to vector<16x256xf32>
    %89 = arith.mulf %85, %88 : vector<16x256xf32>
    %90 = arith.addf %79, %89 : vector<16x256xf32>
    %91 = vector.extract_strided_slice %1 {offsets = [0, 16], sizes = [4, 240], strides = [1, 1]} : vector<4x256xf32> to vector<4x240xf32>
    %92 = vector.extract_strided_slice %1 {offsets = [0, 0], sizes = [4, 16], strides = [1, 1]} : vector<4x256xf32> to vector<4x16xf32>
    %93 = tpu.concatenate %91, %92 in 1 : vector<4x240xf32>, vector<4x16xf32> -> vector<4x256xf32>
    %c7 = arith.constant 7 : index
    %c0_53 = arith.constant 0 : index
    %c0_54 = arith.constant 0 : index
    %94 = vector.load %arg3[%c7, %c0_53, %c0_54] : memref<9x16x4xf32, #tpu.memory_space<vmem>>, vector<1x16x4xf32>
    %95 = vector.shape_cast %94 : vector<1x16x4xf32> to vector<16x4xf32>
    %cst_55 = arith.constant dense<0.000000e+00> : vector<16x256xf32>
    %96 = tpu.matmul %95, %93, %cst_55 {dimension_numbers = #tpu.dot_dimension_numbers<[1], [0], [0], [1], [0, 0, 1, 1], [], []>} : vector<16x4xf32>, vector<4x256xf32>, vector<16x256xf32> -> vector<16x256xf32>
    %c7_56 = arith.constant 7 : index
    %c0_57 = arith.constant 0 : index
    %c0_58 = arith.constant 0 : index
    %97 = vector.load %arg7[%c7_56, %c0_57, %c0_58] : memref<9x1x256xf32, #tpu.memory_space<vmem>>, vector<1x1x256xf32>
    %98 = vector.shape_cast %97 : vector<1x1x256xf32> to vector<1x256xf32>
    %99 = vector.broadcast %98 : vector<1x256xf32> to vector<16x256xf32>
    %100 = arith.mulf %96, %99 : vector<16x256xf32>
    %101 = arith.addf %90, %100 : vector<16x256xf32>
    %102 = vector.extract_strided_slice %1 {offsets = [0, 17], sizes = [4, 239], strides = [1, 1]} : vector<4x256xf32> to vector<4x239xf32>
    %103 = vector.extract_strided_slice %1 {offsets = [0, 0], sizes = [4, 17], strides = [1, 1]} : vector<4x256xf32> to vector<4x17xf32>
    %104 = tpu.concatenate %102, %103 in 1 : vector<4x239xf32>, vector<4x17xf32> -> vector<4x256xf32>
    %c8 = arith.constant 8 : index
    %c0_59 = arith.constant 0 : index
    %c0_60 = arith.constant 0 : index
    %105 = vector.load %arg3[%c8, %c0_59, %c0_60] : memref<9x16x4xf32, #tpu.memory_space<vmem>>, vector<1x16x4xf32>
    %106 = vector.shape_cast %105 : vector<1x16x4xf32> to vector<16x4xf32>
    %cst_61 = arith.constant dense<0.000000e+00> : vector<16x256xf32>
    %107 = tpu.matmul %106, %104, %cst_61 {dimension_numbers = #tpu.dot_dimension_numbers<[1], [0], [0], [1], [0, 0, 1, 1], [], []>} : vector<16x4xf32>, vector<4x256xf32>, vector<16x256xf32> -> vector<16x256xf32>
    %c8_62 = arith.constant 8 : index
    %c0_63 = arith.constant 0 : index
    %c0_64 = arith.constant 0 : index
    %108 = vector.load %arg7[%c8_62, %c0_63, %c0_64] : memref<9x1x256xf32, #tpu.memory_space<vmem>>, vector<1x1x256xf32>
    %109 = vector.shape_cast %108 : vector<1x1x256xf32> to vector<1x256xf32>
    %110 = vector.broadcast %109 : vector<1x256xf32> to vector<16x256xf32>
    %111 = arith.mulf %107, %110 : vector<16x256xf32>
    %112 = arith.addf %101, %111 : vector<16x256xf32>
    %113 = vector.extract_strided_slice %2 {offsets = [0, 0], sizes = [16, 1], strides = [1, 1]} : vector<16x8xf32> to vector<16x1xf32>
    %114 = vector.broadcast %113 : vector<16x1xf32> to vector<16x256xf32>
    %115 = arith.addf %112, %114 : vector<16x256xf32>
    %116 = vector.extract_strided_slice %2 {offsets = [0, 1], sizes = [16, 1], strides = [1, 1]} : vector<16x8xf32> to vector<16x1xf32>
    %117 = vector.extract_strided_slice %2 {offsets = [0, 2], sizes = [16, 1], strides = [1, 1]} : vector<16x8xf32> to vector<16x1xf32>
    %cst_65 = arith.constant dense<0.000000e+00> : vector<16xf32>
    %118 = vector.multi_reduction <add>, %115, %cst_65 [1] : vector<16x256xf32> to vector<16xf32>
    %119 = vector.shape_cast %118 : vector<16xf32> to vector<16x1xf32>
    %120 = vector.extract_strided_slice %119 {offsets = [0, 0], sizes = [2, 1], strides = [1, 1]} : vector<16x1xf32> to vector<2x1xf32>
    %cst_66 = arith.constant dense<0.000000e+00> : vector<1xf32>
    %121 = vector.multi_reduction <add>, %120, %cst_66 [0] : vector<2x1xf32> to vector<1xf32>
    %122 = vector.shape_cast %121 : vector<1xf32> to vector<1x1xf32>
    %123 = vector.shape_cast %122 : vector<1x1xf32> to vector<1x1xf32>
    %124 = vector.broadcast %123 : vector<1x1xf32> to vector<2x1xf32>
    %125 = vector.extract_strided_slice %119 {offsets = [2, 0], sizes = [2, 1], strides = [1, 1]} : vector<16x1xf32> to vector<2x1xf32>
    %cst_67 = arith.constant dense<0.000000e+00> : vector<1xf32>
    %126 = vector.multi_reduction <add>, %125, %cst_67 [0] : vector<2x1xf32> to vector<1xf32>
    %127 = vector.shape_cast %126 : vector<1xf32> to vector<1x1xf32>
    %128 = vector.shape_cast %127 : vector<1x1xf32> to vector<1x1xf32>
    %129 = vector.broadcast %128 : vector<1x1xf32> to vector<2x1xf32>
    %130 = vector.extract_strided_slice %119 {offsets = [4, 0], sizes = [2, 1], strides = [1, 1]} : vector<16x1xf32> to vector<2x1xf32>
    %cst_68 = arith.constant dense<0.000000e+00> : vector<1xf32>
    %131 = vector.multi_reduction <add>, %130, %cst_68 [0] : vector<2x1xf32> to vector<1xf32>
    %132 = vector.shape_cast %131 : vector<1xf32> to vector<1x1xf32>
    %133 = vector.shape_cast %132 : vector<1x1xf32> to vector<1x1xf32>
    %134 = vector.broadcast %133 : vector<1x1xf32> to vector<2x1xf32>
    %135 = vector.extract_strided_slice %119 {offsets = [6, 0], sizes = [2, 1], strides = [1, 1]} : vector<16x1xf32> to vector<2x1xf32>
    %cst_69 = arith.constant dense<0.000000e+00> : vector<1xf32>
    %136 = vector.multi_reduction <add>, %135, %cst_69 [0] : vector<2x1xf32> to vector<1xf32>
    %137 = vector.shape_cast %136 : vector<1xf32> to vector<1x1xf32>
    %138 = vector.shape_cast %137 : vector<1x1xf32> to vector<1x1xf32>
    %139 = vector.broadcast %138 : vector<1x1xf32> to vector<2x1xf32>
    %140 = vector.extract_strided_slice %119 {offsets = [8, 0], sizes = [2, 1], strides = [1, 1]} : vector<16x1xf32> to vector<2x1xf32>
    %cst_70 = arith.constant dense<0.000000e+00> : vector<1xf32>
    %141 = vector.multi_reduction <add>, %140, %cst_70 [0] : vector<2x1xf32> to vector<1xf32>
    %142 = vector.shape_cast %141 : vector<1xf32> to vector<1x1xf32>
    %143 = vector.shape_cast %142 : vector<1x1xf32> to vector<1x1xf32>
    %144 = vector.broadcast %143 : vector<1x1xf32> to vector<2x1xf32>
    %145 = vector.extract_strided_slice %119 {offsets = [10, 0], sizes = [2, 1], strides = [1, 1]} : vector<16x1xf32> to vector<2x1xf32>
    %cst_71 = arith.constant dense<0.000000e+00> : vector<1xf32>
    %146 = vector.multi_reduction <add>, %145, %cst_71 [0] : vector<2x1xf32> to vector<1xf32>
    %147 = vector.shape_cast %146 : vector<1xf32> to vector<1x1xf32>
    %148 = vector.shape_cast %147 : vector<1x1xf32> to vector<1x1xf32>
    %149 = vector.broadcast %148 : vector<1x1xf32> to vector<2x1xf32>
    %150 = vector.extract_strided_slice %119 {offsets = [12, 0], sizes = [2, 1], strides = [1, 1]} : vector<16x1xf32> to vector<2x1xf32>
    %cst_72 = arith.constant dense<0.000000e+00> : vector<1xf32>
    %151 = vector.multi_reduction <add>, %150, %cst_72 [0] : vector<2x1xf32> to vector<1xf32>
    %152 = vector.shape_cast %151 : vector<1xf32> to vector<1x1xf32>
    %153 = vector.shape_cast %152 : vector<1x1xf32> to vector<1x1xf32>
    %154 = vector.broadcast %153 : vector<1x1xf32> to vector<2x1xf32>
    %155 = vector.extract_strided_slice %119 {offsets = [14, 0], sizes = [2, 1], strides = [1, 1]} : vector<16x1xf32> to vector<2x1xf32>
    %cst_73 = arith.constant dense<0.000000e+00> : vector<1xf32>
    %156 = vector.multi_reduction <add>, %155, %cst_73 [0] : vector<2x1xf32> to vector<1xf32>
    %157 = vector.shape_cast %156 : vector<1xf32> to vector<1x1xf32>
    %158 = vector.shape_cast %157 : vector<1x1xf32> to vector<1x1xf32>
    %159 = vector.broadcast %158 : vector<1x1xf32> to vector<2x1xf32>
    %160 = tpu.concatenate %124, %129, %134, %139, %144, %149, %154, %159 in 0 : vector<2x1xf32>, vector<2x1xf32>, vector<2x1xf32>, vector<2x1xf32>, vector<2x1xf32>, vector<2x1xf32>, vector<2x1xf32>, vector<2x1xf32> -> vector<16x1xf32>
    %cst_74 = arith.constant 0.001953125 : f32
    %161 = vector.broadcast %cst_74 : f32 to vector<16x1xf32>
    %162 = arith.mulf %160, %161 : vector<16x1xf32>
    %163 = vector.broadcast %162 : vector<16x1xf32> to vector<16x256xf32>
    %164 = arith.subf %115, %163 : vector<16x256xf32>
    %165 = arith.mulf %164, %164 : vector<16x256xf32>
    %cst_75 = arith.constant dense<0.000000e+00> : vector<16xf32>
    %166 = vector.multi_reduction <add>, %165, %cst_75 [1] : vector<16x256xf32> to vector<16xf32>
    %167 = vector.shape_cast %166 : vector<16xf32> to vector<16x1xf32>
    %168 = vector.extract_strided_slice %167 {offsets = [0, 0], sizes = [2, 1], strides = [1, 1]} : vector<16x1xf32> to vector<2x1xf32>
    %cst_76 = arith.constant dense<0.000000e+00> : vector<1xf32>
    %169 = vector.multi_reduction <add>, %168, %cst_76 [0] : vector<2x1xf32> to vector<1xf32>
    %170 = vector.shape_cast %169 : vector<1xf32> to vector<1x1xf32>
    %171 = vector.shape_cast %170 : vector<1x1xf32> to vector<1x1xf32>
    %172 = vector.broadcast %171 : vector<1x1xf32> to vector<2x1xf32>
    %173 = vector.extract_strided_slice %167 {offsets = [2, 0], sizes = [2, 1], strides = [1, 1]} : vector<16x1xf32> to vector<2x1xf32>
    %cst_77 = arith.constant dense<0.000000e+00> : vector<1xf32>
    %174 = vector.multi_reduction <add>, %173, %cst_77 [0] : vector<2x1xf32> to vector<1xf32>
    %175 = vector.shape_cast %174 : vector<1xf32> to vector<1x1xf32>
    %176 = vector.shape_cast %175 : vector<1x1xf32> to vector<1x1xf32>
    %177 = vector.broadcast %176 : vector<1x1xf32> to vector<2x1xf32>
    %178 = vector.extract_strided_slice %167 {offsets = [4, 0], sizes = [2, 1], strides = [1, 1]} : vector<16x1xf32> to vector<2x1xf32>
    %cst_78 = arith.constant dense<0.000000e+00> : vector<1xf32>
    %179 = vector.multi_reduction <add>, %178, %cst_78 [0] : vector<2x1xf32> to vector<1xf32>
    %180 = vector.shape_cast %179 : vector<1xf32> to vector<1x1xf32>
    %181 = vector.shape_cast %180 : vector<1x1xf32> to vector<1x1xf32>
    %182 = vector.broadcast %181 : vector<1x1xf32> to vector<2x1xf32>
    %183 = vector.extract_strided_slice %167 {offsets = [6, 0], sizes = [2, 1], strides = [1, 1]} : vector<16x1xf32> to vector<2x1xf32>
    %cst_79 = arith.constant dense<0.000000e+00> : vector<1xf32>
    %184 = vector.multi_reduction <add>, %183, %cst_79 [0] : vector<2x1xf32> to vector<1xf32>
    %185 = vector.shape_cast %184 : vector<1xf32> to vector<1x1xf32>
    %186 = vector.shape_cast %185 : vector<1x1xf32> to vector<1x1xf32>
    %187 = vector.broadcast %186 : vector<1x1xf32> to vector<2x1xf32>
    %188 = vector.extract_strided_slice %167 {offsets = [8, 0], sizes = [2, 1], strides = [1, 1]} : vector<16x1xf32> to vector<2x1xf32>
    %cst_80 = arith.constant dense<0.000000e+00> : vector<1xf32>
    %189 = vector.multi_reduction <add>, %188, %cst_80 [0] : vector<2x1xf32> to vector<1xf32>
    %190 = vector.shape_cast %189 : vector<1xf32> to vector<1x1xf32>
    %191 = vector.shape_cast %190 : vector<1x1xf32> to vector<1x1xf32>
    %192 = vector.broadcast %191 : vector<1x1xf32> to vector<2x1xf32>
    %193 = vector.extract_strided_slice %167 {offsets = [10, 0], sizes = [2, 1], strides = [1, 1]} : vector<16x1xf32> to vector<2x1xf32>
    %cst_81 = arith.constant dense<0.000000e+00> : vector<1xf32>
    %194 = vector.multi_reduction <add>, %193, %cst_81 [0] : vector<2x1xf32> to vector<1xf32>
    %195 = vector.shape_cast %194 : vector<1xf32> to vector<1x1xf32>
    %196 = vector.shape_cast %195 : vector<1x1xf32> to vector<1x1xf32>
    %197 = vector.broadcast %196 : vector<1x1xf32> to vector<2x1xf32>
    %198 = vector.extract_strided_slice %167 {offsets = [12, 0], sizes = [2, 1], strides = [1, 1]} : vector<16x1xf32> to vector<2x1xf32>
    %cst_82 = arith.constant dense<0.000000e+00> : vector<1xf32>
    %199 = vector.multi_reduction <add>, %198, %cst_82 [0] : vector<2x1xf32> to vector<1xf32>
    %200 = vector.shape_cast %199 : vector<1xf32> to vector<1x1xf32>
    %201 = vector.shape_cast %200 : vector<1x1xf32> to vector<1x1xf32>
    %202 = vector.broadcast %201 : vector<1x1xf32> to vector<2x1xf32>
    %203 = vector.extract_strided_slice %167 {offsets = [14, 0], sizes = [2, 1], strides = [1, 1]} : vector<16x1xf32> to vector<2x1xf32>
    %cst_83 = arith.constant dense<0.000000e+00> : vector<1xf32>
    %204 = vector.multi_reduction <add>, %203, %cst_83 [0] : vector<2x1xf32> to vector<1xf32>
    %205 = vector.shape_cast %204 : vector<1xf32> to vector<1x1xf32>
    %206 = vector.shape_cast %205 : vector<1x1xf32> to vector<1x1xf32>
    %207 = vector.broadcast %206 : vector<1x1xf32> to vector<2x1xf32>
    %208 = tpu.concatenate %172, %177, %182, %187, %192, %197, %202, %207 in 0 : vector<2x1xf32>, vector<2x1xf32>, vector<2x1xf32>, vector<2x1xf32>, vector<2x1xf32>, vector<2x1xf32>, vector<2x1xf32>, vector<2x1xf32> -> vector<16x1xf32>
    %cst_84 = arith.constant 0.001953125 : f32
    %209 = vector.broadcast %cst_84 : f32 to vector<16x1xf32>
    %210 = arith.mulf %208, %209 : vector<16x1xf32>
    %cst_85 = arith.constant 9.99999974E-6 : f32
    %211 = vector.broadcast %cst_85 : f32 to vector<16x1xf32>
    %212 = arith.addf %210, %211 : vector<16x1xf32>
    %213 = math.rsqrt %212 : vector<16x1xf32>
    %214 = vector.broadcast %213 : vector<16x1xf32> to vector<16x256xf32>
    %215 = arith.mulf %164, %214 : vector<16x256xf32>
    %216 = vector.broadcast %116 : vector<16x1xf32> to vector<16x256xf32>
    %217 = arith.mulf %215, %216 : vector<16x256xf32>
    %218 = vector.broadcast %117 : vector<16x1xf32> to vector<16x256xf32>
    %219 = arith.addf %217, %218 : vector<16x256xf32>
    %cst_86 = arith.constant 2.000000e+01 : f32
    %220 = vector.broadcast %cst_86 : f32 to vector<16x256xf32>
    %221 = arith.minimumf %219, %220 : vector<16x256xf32>
    %222 = math.exp %221 : vector<16x256xf32>
    %cst_87 = arith.constant 2.000000e+00 : f32
    %223 = vector.broadcast %cst_87 : f32 to vector<16x256xf32>
    %224 = arith.addf %222, %223 : vector<16x256xf32>
    %225 = arith.mulf %222, %224 : vector<16x256xf32>
    %cst_88 = arith.constant 2.000000e+01 : f32
    %226 = vector.broadcast %cst_88 : f32 to vector<16x256xf32>
    %227 = arith.cmpf ogt, %219, %226 : vector<16x256xf32>
    %cst_89 = arith.constant 2.000000e+00 : f32
    %228 = vector.broadcast %cst_89 : f32 to vector<16x256xf32>
    %229 = arith.addf %225, %228 : vector<16x256xf32>
    %230 = arith.divf %225, %229 : vector<16x256xf32>
    %231 = arith.mulf %219, %230 : vector<16x256xf32>
    %232 = arith.select %227, %219, %231 : vector<16x256xi1>, vector<16x256xf32>
    %233 = vector.broadcast %21 : vector<16x1xf32> to vector<16x256xf32>
    %234 = arith.addf %232, %233 : vector<16x256xf32>
    %235 = vector.extract_strided_slice %234 {offsets = [0, 239], sizes = [16, 17], strides = [1, 1]} : vector<16x256xf32> to vector<16x17xf32>
    %236 = vector.extract_strided_slice %234 {offsets = [0, 0], sizes = [16, 239], strides = [1, 1]} : vector<16x256xf32> to vector<16x239xf32>
    %237 = tpu.concatenate %235, %236 in 1 : vector<16x17xf32>, vector<16x239xf32> -> vector<16x256xf32>
    %c0_90 = arith.constant 0 : index
    %c0_91 = arith.constant 0 : index
    %c0_92 = arith.constant 0 : index
    %238 = vector.load %arg4[%c0_90, %c0_91, %c0_92] : memref<9x16x16xf32, #tpu.memory_space<vmem>>, vector<1x16x16xf32>
    %239 = vector.shape_cast %238 : vector<1x16x16xf32> to vector<16x16xf32>
    %cst_93 = arith.constant dense<0.000000e+00> : vector<16x256xf32>
    %240 = tpu.matmul %239, %237, %cst_93 {dimension_numbers = #tpu.dot_dimension_numbers<[1], [0], [0], [1], [0, 0, 1, 1], [], []>} : vector<16x16xf32>, vector<16x256xf32>, vector<16x256xf32> -> vector<16x256xf32>
    %c0_94 = arith.constant 0 : index
    %c0_95 = arith.constant 0 : index
    %c0_96 = arith.constant 0 : index
    %241 = vector.load %arg7[%c0_94, %c0_95, %c0_96] : memref<9x1x256xf32, #tpu.memory_space<vmem>>, vector<1x1x256xf32>
    %242 = vector.shape_cast %241 : vector<1x1x256xf32> to vector<1x256xf32>
    %243 = vector.broadcast %242 : vector<1x256xf32> to vector<16x256xf32>
    %244 = arith.mulf %240, %243 : vector<16x256xf32>
    %245 = vector.extract_strided_slice %234 {offsets = [0, 240], sizes = [16, 16], strides = [1, 1]} : vector<16x256xf32> to vector<16x16xf32>
    %246 = vector.extract_strided_slice %234 {offsets = [0, 0], sizes = [16, 240], strides = [1, 1]} : vector<16x256xf32> to vector<16x240xf32>
    %247 = tpu.concatenate %245, %246 in 1 : vector<16x16xf32>, vector<16x240xf32> -> vector<16x256xf32>
    %c1_97 = arith.constant 1 : index
    %c0_98 = arith.constant 0 : index
    %c0_99 = arith.constant 0 : index
    %248 = vector.load %arg4[%c1_97, %c0_98, %c0_99] : memref<9x16x16xf32, #tpu.memory_space<vmem>>, vector<1x16x16xf32>
    %249 = vector.shape_cast %248 : vector<1x16x16xf32> to vector<16x16xf32>
    %cst_100 = arith.constant dense<0.000000e+00> : vector<16x256xf32>
    %250 = tpu.matmul %249, %247, %cst_100 {dimension_numbers = #tpu.dot_dimension_numbers<[1], [0], [0], [1], [0, 0, 1, 1], [], []>} : vector<16x16xf32>, vector<16x256xf32>, vector<16x256xf32> -> vector<16x256xf32>
    %c1_101 = arith.constant 1 : index
    %c0_102 = arith.constant 0 : index
    %c0_103 = arith.constant 0 : index
    %251 = vector.load %arg7[%c1_101, %c0_102, %c0_103] : memref<9x1x256xf32, #tpu.memory_space<vmem>>, vector<1x1x256xf32>
    %252 = vector.shape_cast %251 : vector<1x1x256xf32> to vector<1x256xf32>
    %253 = vector.broadcast %252 : vector<1x256xf32> to vector<16x256xf32>
    %254 = arith.mulf %250, %253 : vector<16x256xf32>
    %255 = arith.addf %244, %254 : vector<16x256xf32>
    %256 = vector.extract_strided_slice %234 {offsets = [0, 241], sizes = [16, 15], strides = [1, 1]} : vector<16x256xf32> to vector<16x15xf32>
    %257 = vector.extract_strided_slice %234 {offsets = [0, 0], sizes = [16, 241], strides = [1, 1]} : vector<16x256xf32> to vector<16x241xf32>
    %258 = tpu.concatenate %256, %257 in 1 : vector<16x15xf32>, vector<16x241xf32> -> vector<16x256xf32>
    %c2_104 = arith.constant 2 : index
    %c0_105 = arith.constant 0 : index
    %c0_106 = arith.constant 0 : index
    %259 = vector.load %arg4[%c2_104, %c0_105, %c0_106] : memref<9x16x16xf32, #tpu.memory_space<vmem>>, vector<1x16x16xf32>
    %260 = vector.shape_cast %259 : vector<1x16x16xf32> to vector<16x16xf32>
    %cst_107 = arith.constant dense<0.000000e+00> : vector<16x256xf32>
    %261 = tpu.matmul %260, %258, %cst_107 {dimension_numbers = #tpu.dot_dimension_numbers<[1], [0], [0], [1], [0, 0, 1, 1], [], []>} : vector<16x16xf32>, vector<16x256xf32>, vector<16x256xf32> -> vector<16x256xf32>
    %c2_108 = arith.constant 2 : index
    %c0_109 = arith.constant 0 : index
    %c0_110 = arith.constant 0 : index
    %262 = vector.load %arg7[%c2_108, %c0_109, %c0_110] : memref<9x1x256xf32, #tpu.memory_space<vmem>>, vector<1x1x256xf32>
    %263 = vector.shape_cast %262 : vector<1x1x256xf32> to vector<1x256xf32>
    %264 = vector.broadcast %263 : vector<1x256xf32> to vector<16x256xf32>
    %265 = arith.mulf %261, %264 : vector<16x256xf32>
    %266 = arith.addf %255, %265 : vector<16x256xf32>
    %267 = vector.extract_strided_slice %234 {offsets = [0, 255], sizes = [16, 1], strides = [1, 1]} : vector<16x256xf32> to vector<16x1xf32>
    %268 = vector.extract_strided_slice %234 {offsets = [0, 0], sizes = [16, 255], strides = [1, 1]} : vector<16x256xf32> to vector<16x255xf32>
    %269 = tpu.concatenate %267, %268 in 1 : vector<16x1xf32>, vector<16x255xf32> -> vector<16x256xf32>
    %c3_111 = arith.constant 3 : index
    %c0_112 = arith.constant 0 : index
    %c0_113 = arith.constant 0 : index
    %270 = vector.load %arg4[%c3_111, %c0_112, %c0_113] : memref<9x16x16xf32, #tpu.memory_space<vmem>>, vector<1x16x16xf32>
    %271 = vector.shape_cast %270 : vector<1x16x16xf32> to vector<16x16xf32>
    %cst_114 = arith.constant dense<0.000000e+00> : vector<16x256xf32>
    %272 = tpu.matmul %271, %269, %cst_114 {dimension_numbers = #tpu.dot_dimension_numbers<[1], [0], [0], [1], [0, 0, 1, 1], [], []>} : vector<16x16xf32>, vector<16x256xf32>, vector<16x256xf32> -> vector<16x256xf32>
    %c3_115 = arith.constant 3 : index
    %c0_116 = arith.constant 0 : index
    %c0_117 = arith.constant 0 : index
    %273 = vector.load %arg7[%c3_115, %c0_116, %c0_117] : memref<9x1x256xf32, #tpu.memory_space<vmem>>, vector<1x1x256xf32>
    %274 = vector.shape_cast %273 : vector<1x1x256xf32> to vector<1x256xf32>
    %275 = vector.broadcast %274 : vector<1x256xf32> to vector<16x256xf32>
    %276 = arith.mulf %272, %275 : vector<16x256xf32>
    %277 = arith.addf %266, %276 : vector<16x256xf32>
    %c4_118 = arith.constant 4 : index
    %c0_119 = arith.constant 0 : index
    %c0_120 = arith.constant 0 : index
    %278 = vector.load %arg4[%c4_118, %c0_119, %c0_120] : memref<9x16x16xf32, #tpu.memory_space<vmem>>, vector<1x16x16xf32>
    %279 = vector.shape_cast %278 : vector<1x16x16xf32> to vector<16x16xf32>
    %cst_121 = arith.constant dense<0.000000e+00> : vector<16x256xf32>
    %280 = tpu.matmul %279, %234, %cst_121 {dimension_numbers = #tpu.dot_dimension_numbers<[1], [0], [0], [1], [0, 0, 1, 1], [], []>} : vector<16x16xf32>, vector<16x256xf32>, vector<16x256xf32> -> vector<16x256xf32>
    %281 = arith.addf %277, %280 : vector<16x256xf32>
    %282 = vector.extract_strided_slice %234 {offsets = [0, 1], sizes = [16, 255], strides = [1, 1]} : vector<16x256xf32> to vector<16x255xf32>
    %283 = vector.extract_strided_slice %234 {offsets = [0, 0], sizes = [16, 1], strides = [1, 1]} : vector<16x256xf32> to vector<16x1xf32>
    %284 = tpu.concatenate %282, %283 in 1 : vector<16x255xf32>, vector<16x1xf32> -> vector<16x256xf32>
    %c5_122 = arith.constant 5 : index
    %c0_123 = arith.constant 0 : index
    %c0_124 = arith.constant 0 : index
    %285 = vector.load %arg4[%c5_122, %c0_123, %c0_124] : memref<9x16x16xf32, #tpu.memory_space<vmem>>, vector<1x16x16xf32>
    %286 = vector.shape_cast %285 : vector<1x16x16xf32> to vector<16x16xf32>
    %cst_125 = arith.constant dense<0.000000e+00> : vector<16x256xf32>
    %287 = tpu.matmul %286, %284, %cst_125 {dimension_numbers = #tpu.dot_dimension_numbers<[1], [0], [0], [1], [0, 0, 1, 1], [], []>} : vector<16x16xf32>, vector<16x256xf32>, vector<16x256xf32> -> vector<16x256xf32>
    %c5_126 = arith.constant 5 : index
    %c0_127 = arith.constant 0 : index
    %c0_128 = arith.constant 0 : index
    %288 = vector.load %arg7[%c5_126, %c0_127, %c0_128] : memref<9x1x256xf32, #tpu.memory_space<vmem>>, vector<1x1x256xf32>
    %289 = vector.shape_cast %288 : vector<1x1x256xf32> to vector<1x256xf32>
    %290 = vector.broadcast %289 : vector<1x256xf32> to vector<16x256xf32>
    %291 = arith.mulf %287, %290 : vector<16x256xf32>
    %292 = arith.addf %281, %291 : vector<16x256xf32>
    %293 = vector.extract_strided_slice %234 {offsets = [0, 15], sizes = [16, 241], strides = [1, 1]} : vector<16x256xf32> to vector<16x241xf32>
    %294 = vector.extract_strided_slice %234 {offsets = [0, 0], sizes = [16, 15], strides = [1, 1]} : vector<16x256xf32> to vector<16x15xf32>
    %295 = tpu.concatenate %293, %294 in 1 : vector<16x241xf32>, vector<16x15xf32> -> vector<16x256xf32>
    %c6_129 = arith.constant 6 : index
    %c0_130 = arith.constant 0 : index
    %c0_131 = arith.constant 0 : index
    %296 = vector.load %arg4[%c6_129, %c0_130, %c0_131] : memref<9x16x16xf32, #tpu.memory_space<vmem>>, vector<1x16x16xf32>
    %297 = vector.shape_cast %296 : vector<1x16x16xf32> to vector<16x16xf32>
    %cst_132 = arith.constant dense<0.000000e+00> : vector<16x256xf32>
    %298 = tpu.matmul %297, %295, %cst_132 {dimension_numbers = #tpu.dot_dimension_numbers<[1], [0], [0], [1], [0, 0, 1, 1], [], []>} : vector<16x16xf32>, vector<16x256xf32>, vector<16x256xf32> -> vector<16x256xf32>
    %c6_133 = arith.constant 6 : index
    %c0_134 = arith.constant 0 : index
    %c0_135 = arith.constant 0 : index
    %299 = vector.load %arg7[%c6_133, %c0_134, %c0_135] : memref<9x1x256xf32, #tpu.memory_space<vmem>>, vector<1x1x256xf32>
    %300 = vector.shape_cast %299 : vector<1x1x256xf32> to vector<1x256xf32>
    %301 = vector.broadcast %300 : vector<1x256xf32> to vector<16x256xf32>
    %302 = arith.mulf %298, %301 : vector<16x256xf32>
    %303 = arith.addf %292, %302 : vector<16x256xf32>
    %304 = vector.extract_strided_slice %234 {offsets = [0, 16], sizes = [16, 240], strides = [1, 1]} : vector<16x256xf32> to vector<16x240xf32>
    %305 = vector.extract_strided_slice %234 {offsets = [0, 0], sizes = [16, 16], strides = [1, 1]} : vector<16x256xf32> to vector<16x16xf32>
    %306 = tpu.concatenate %304, %305 in 1 : vector<16x240xf32>, vector<16x16xf32> -> vector<16x256xf32>
    %c7_136 = arith.constant 7 : index
    %c0_137 = arith.constant 0 : index
    %c0_138 = arith.constant 0 : index
    %307 = vector.load %arg4[%c7_136, %c0_137, %c0_138] : memref<9x16x16xf32, #tpu.memory_space<vmem>>, vector<1x16x16xf32>
    %308 = vector.shape_cast %307 : vector<1x16x16xf32> to vector<16x16xf32>
    %cst_139 = arith.constant dense<0.000000e+00> : vector<16x256xf32>
    %309 = tpu.matmul %308, %306, %cst_139 {dimension_numbers = #tpu.dot_dimension_numbers<[1], [0], [0], [1], [0, 0, 1, 1], [], []>} : vector<16x16xf32>, vector<16x256xf32>, vector<16x256xf32> -> vector<16x256xf32>
    %c7_140 = arith.constant 7 : index
    %c0_141 = arith.constant 0 : index
    %c0_142 = arith.constant 0 : index
    %310 = vector.load %arg7[%c7_140, %c0_141, %c0_142] : memref<9x1x256xf32, #tpu.memory_space<vmem>>, vector<1x1x256xf32>
    %311 = vector.shape_cast %310 : vector<1x1x256xf32> to vector<1x256xf32>
    %312 = vector.broadcast %311 : vector<1x256xf32> to vector<16x256xf32>
    %313 = arith.mulf %309, %312 : vector<16x256xf32>
    %314 = arith.addf %303, %313 : vector<16x256xf32>
    %315 = vector.extract_strided_slice %234 {offsets = [0, 17], sizes = [16, 239], strides = [1, 1]} : vector<16x256xf32> to vector<16x239xf32>
    %316 = vector.extract_strided_slice %234 {offsets = [0, 0], sizes = [16, 17], strides = [1, 1]} : vector<16x256xf32> to vector<16x17xf32>
    %317 = tpu.concatenate %315, %316 in 1 : vector<16x239xf32>, vector<16x17xf32> -> vector<16x256xf32>
    %c8_143 = arith.constant 8 : index
    %c0_144 = arith.constant 0 : index
    %c0_145 = arith.constant 0 : index
    %318 = vector.load %arg4[%c8_143, %c0_144, %c0_145] : memref<9x16x16xf32, #tpu.memory_space<vmem>>, vector<1x16x16xf32>
    %319 = vector.shape_cast %318 : vector<1x16x16xf32> to vector<16x16xf32>
    %cst_146 = arith.constant dense<0.000000e+00> : vector<16x256xf32>
    %320 = tpu.matmul %319, %317, %cst_146 {dimension_numbers = #tpu.dot_dimension_numbers<[1], [0], [0], [1], [0, 0, 1, 1], [], []>} : vector<16x16xf32>, vector<16x256xf32>, vector<16x256xf32> -> vector<16x256xf32>
    %c8_147 = arith.constant 8 : index
    %c0_148 = arith.constant 0 : index
    %c0_149 = arith.constant 0 : index
    %321 = vector.load %arg7[%c8_147, %c0_148, %c0_149] : memref<9x1x256xf32, #tpu.memory_space<vmem>>, vector<1x1x256xf32>
    %322 = vector.shape_cast %321 : vector<1x1x256xf32> to vector<1x256xf32>
    %323 = vector.broadcast %322 : vector<1x256xf32> to vector<16x256xf32>
    %324 = arith.mulf %320, %323 : vector<16x256xf32>
    %325 = arith.addf %314, %324 : vector<16x256xf32>
    %326 = vector.extract_strided_slice %2 {offsets = [0, 3], sizes = [16, 1], strides = [1, 1]} : vector<16x8xf32> to vector<16x1xf32>
    %327 = vector.broadcast %326 : vector<16x1xf32> to vector<16x256xf32>
    %328 = arith.addf %325, %327 : vector<16x256xf32>
    %329 = vector.extract_strided_slice %2 {offsets = [0, 4], sizes = [16, 1], strides = [1, 1]} : vector<16x8xf32> to vector<16x1xf32>
    %330 = vector.extract_strided_slice %2 {offsets = [0, 5], sizes = [16, 1], strides = [1, 1]} : vector<16x8xf32> to vector<16x1xf32>
    %cst_150 = arith.constant dense<0.000000e+00> : vector<16xf32>
    %331 = vector.multi_reduction <add>, %328, %cst_150 [1] : vector<16x256xf32> to vector<16xf32>
    %332 = vector.shape_cast %331 : vector<16xf32> to vector<16x1xf32>
    %333 = vector.extract_strided_slice %332 {offsets = [0, 0], sizes = [2, 1], strides = [1, 1]} : vector<16x1xf32> to vector<2x1xf32>
    %cst_151 = arith.constant dense<0.000000e+00> : vector<1xf32>
    %334 = vector.multi_reduction <add>, %333, %cst_151 [0] : vector<2x1xf32> to vector<1xf32>
    %335 = vector.shape_cast %334 : vector<1xf32> to vector<1x1xf32>
    %336 = vector.shape_cast %335 : vector<1x1xf32> to vector<1x1xf32>
    %337 = vector.broadcast %336 : vector<1x1xf32> to vector<2x1xf32>
    %338 = vector.extract_strided_slice %332 {offsets = [2, 0], sizes = [2, 1], strides = [1, 1]} : vector<16x1xf32> to vector<2x1xf32>
    %cst_152 = arith.constant dense<0.000000e+00> : vector<1xf32>
    %339 = vector.multi_reduction <add>, %338, %cst_152 [0] : vector<2x1xf32> to vector<1xf32>
    %340 = vector.shape_cast %339 : vector<1xf32> to vector<1x1xf32>
    %341 = vector.shape_cast %340 : vector<1x1xf32> to vector<1x1xf32>
    %342 = vector.broadcast %341 : vector<1x1xf32> to vector<2x1xf32>
    %343 = vector.extract_strided_slice %332 {offsets = [4, 0], sizes = [2, 1], strides = [1, 1]} : vector<16x1xf32> to vector<2x1xf32>
    %cst_153 = arith.constant dense<0.000000e+00> : vector<1xf32>
    %344 = vector.multi_reduction <add>, %343, %cst_153 [0] : vector<2x1xf32> to vector<1xf32>
    %345 = vector.shape_cast %344 : vector<1xf32> to vector<1x1xf32>
    %346 = vector.shape_cast %345 : vector<1x1xf32> to vector<1x1xf32>
    %347 = vector.broadcast %346 : vector<1x1xf32> to vector<2x1xf32>
    %348 = vector.extract_strided_slice %332 {offsets = [6, 0], sizes = [2, 1], strides = [1, 1]} : vector<16x1xf32> to vector<2x1xf32>
    %cst_154 = arith.constant dense<0.000000e+00> : vector<1xf32>
    %349 = vector.multi_reduction <add>, %348, %cst_154 [0] : vector<2x1xf32> to vector<1xf32>
    %350 = vector.shape_cast %349 : vector<1xf32> to vector<1x1xf32>
    %351 = vector.shape_cast %350 : vector<1x1xf32> to vector<1x1xf32>
    %352 = vector.broadcast %351 : vector<1x1xf32> to vector<2x1xf32>
    %353 = vector.extract_strided_slice %332 {offsets = [8, 0], sizes = [2, 1], strides = [1, 1]} : vector<16x1xf32> to vector<2x1xf32>
    %cst_155 = arith.constant dense<0.000000e+00> : vector<1xf32>
    %354 = vector.multi_reduction <add>, %353, %cst_155 [0] : vector<2x1xf32> to vector<1xf32>
    %355 = vector.shape_cast %354 : vector<1xf32> to vector<1x1xf32>
    %356 = vector.shape_cast %355 : vector<1x1xf32> to vector<1x1xf32>
    %357 = vector.broadcast %356 : vector<1x1xf32> to vector<2x1xf32>
    %358 = vector.extract_strided_slice %332 {offsets = [10, 0], sizes = [2, 1], strides = [1, 1]} : vector<16x1xf32> to vector<2x1xf32>
    %cst_156 = arith.constant dense<0.000000e+00> : vector<1xf32>
    %359 = vector.multi_reduction <add>, %358, %cst_156 [0] : vector<2x1xf32> to vector<1xf32>
    %360 = vector.shape_cast %359 : vector<1xf32> to vector<1x1xf32>
    %361 = vector.shape_cast %360 : vector<1x1xf32> to vector<1x1xf32>
    %362 = vector.broadcast %361 : vector<1x1xf32> to vector<2x1xf32>
    %363 = vector.extract_strided_slice %332 {offsets = [12, 0], sizes = [2, 1], strides = [1, 1]} : vector<16x1xf32> to vector<2x1xf32>
    %cst_157 = arith.constant dense<0.000000e+00> : vector<1xf32>
    %364 = vector.multi_reduction <add>, %363, %cst_157 [0] : vector<2x1xf32> to vector<1xf32>
    %365 = vector.shape_cast %364 : vector<1xf32> to vector<1x1xf32>
    %366 = vector.shape_cast %365 : vector<1x1xf32> to vector<1x1xf32>
    %367 = vector.broadcast %366 : vector<1x1xf32> to vector<2x1xf32>
    %368 = vector.extract_strided_slice %332 {offsets = [14, 0], sizes = [2, 1], strides = [1, 1]} : vector<16x1xf32> to vector<2x1xf32>
    %cst_158 = arith.constant dense<0.000000e+00> : vector<1xf32>
    %369 = vector.multi_reduction <add>, %368, %cst_158 [0] : vector<2x1xf32> to vector<1xf32>
    %370 = vector.shape_cast %369 : vector<1xf32> to vector<1x1xf32>
    %371 = vector.shape_cast %370 : vector<1x1xf32> to vector<1x1xf32>
    %372 = vector.broadcast %371 : vector<1x1xf32> to vector<2x1xf32>
    %373 = tpu.concatenate %337, %342, %347, %352, %357, %362, %367, %372 in 0 : vector<2x1xf32>, vector<2x1xf32>, vector<2x1xf32>, vector<2x1xf32>, vector<2x1xf32>, vector<2x1xf32>, vector<2x1xf32>, vector<2x1xf32> -> vector<16x1xf32>
    %cst_159 = arith.constant 0.001953125 : f32
    %374 = vector.broadcast %cst_159 : f32 to vector<16x1xf32>
    %375 = arith.mulf %373, %374 : vector<16x1xf32>
    %376 = vector.broadcast %375 : vector<16x1xf32> to vector<16x256xf32>
    %377 = arith.subf %328, %376 : vector<16x256xf32>
    %378 = arith.mulf %377, %377 : vector<16x256xf32>
    %cst_160 = arith.constant dense<0.000000e+00> : vector<16xf32>
    %379 = vector.multi_reduction <add>, %378, %cst_160 [1] : vector<16x256xf32> to vector<16xf32>
    %380 = vector.shape_cast %379 : vector<16xf32> to vector<16x1xf32>
    %381 = vector.extract_strided_slice %380 {offsets = [0, 0], sizes = [2, 1], strides = [1, 1]} : vector<16x1xf32> to vector<2x1xf32>
    %cst_161 = arith.constant dense<0.000000e+00> : vector<1xf32>
    %382 = vector.multi_reduction <add>, %381, %cst_161 [0] : vector<2x1xf32> to vector<1xf32>
    %383 = vector.shape_cast %382 : vector<1xf32> to vector<1x1xf32>
    %384 = vector.shape_cast %383 : vector<1x1xf32> to vector<1x1xf32>
    %385 = vector.broadcast %384 : vector<1x1xf32> to vector<2x1xf32>
    %386 = vector.extract_strided_slice %380 {offsets = [2, 0], sizes = [2, 1], strides = [1, 1]} : vector<16x1xf32> to vector<2x1xf32>
    %cst_162 = arith.constant dense<0.000000e+00> : vector<1xf32>
    %387 = vector.multi_reduction <add>, %386, %cst_162 [0] : vector<2x1xf32> to vector<1xf32>
    %388 = vector.shape_cast %387 : vector<1xf32> to vector<1x1xf32>
    %389 = vector.shape_cast %388 : vector<1x1xf32> to vector<1x1xf32>
    %390 = vector.broadcast %389 : vector<1x1xf32> to vector<2x1xf32>
    %391 = vector.extract_strided_slice %380 {offsets = [4, 0], sizes = [2, 1], strides = [1, 1]} : vector<16x1xf32> to vector<2x1xf32>
    %cst_163 = arith.constant dense<0.000000e+00> : vector<1xf32>
    %392 = vector.multi_reduction <add>, %391, %cst_163 [0] : vector<2x1xf32> to vector<1xf32>
    %393 = vector.shape_cast %392 : vector<1xf32> to vector<1x1xf32>
    %394 = vector.shape_cast %393 : vector<1x1xf32> to vector<1x1xf32>
    %395 = vector.broadcast %394 : vector<1x1xf32> to vector<2x1xf32>
    %396 = vector.extract_strided_slice %380 {offsets = [6, 0], sizes = [2, 1], strides = [1, 1]} : vector<16x1xf32> to vector<2x1xf32>
    %cst_164 = arith.constant dense<0.000000e+00> : vector<1xf32>
    %397 = vector.multi_reduction <add>, %396, %cst_164 [0] : vector<2x1xf32> to vector<1xf32>
    %398 = vector.shape_cast %397 : vector<1xf32> to vector<1x1xf32>
    %399 = vector.shape_cast %398 : vector<1x1xf32> to vector<1x1xf32>
    %400 = vector.broadcast %399 : vector<1x1xf32> to vector<2x1xf32>
    %401 = vector.extract_strided_slice %380 {offsets = [8, 0], sizes = [2, 1], strides = [1, 1]} : vector<16x1xf32> to vector<2x1xf32>
    %cst_165 = arith.constant dense<0.000000e+00> : vector<1xf32>
    %402 = vector.multi_reduction <add>, %401, %cst_165 [0] : vector<2x1xf32> to vector<1xf32>
    %403 = vector.shape_cast %402 : vector<1xf32> to vector<1x1xf32>
    %404 = vector.shape_cast %403 : vector<1x1xf32> to vector<1x1xf32>
    %405 = vector.broadcast %404 : vector<1x1xf32> to vector<2x1xf32>
    %406 = vector.extract_strided_slice %380 {offsets = [10, 0], sizes = [2, 1], strides = [1, 1]} : vector<16x1xf32> to vector<2x1xf32>
    %cst_166 = arith.constant dense<0.000000e+00> : vector<1xf32>
    %407 = vector.multi_reduction <add>, %406, %cst_166 [0] : vector<2x1xf32> to vector<1xf32>
    %408 = vector.shape_cast %407 : vector<1xf32> to vector<1x1xf32>
    %409 = vector.shape_cast %408 : vector<1x1xf32> to vector<1x1xf32>
    %410 = vector.broadcast %409 : vector<1x1xf32> to vector<2x1xf32>
    %411 = vector.extract_strided_slice %380 {offsets = [12, 0], sizes = [2, 1], strides = [1, 1]} : vector<16x1xf32> to vector<2x1xf32>
    %cst_167 = arith.constant dense<0.000000e+00> : vector<1xf32>
    %412 = vector.multi_reduction <add>, %411, %cst_167 [0] : vector<2x1xf32> to vector<1xf32>
    %413 = vector.shape_cast %412 : vector<1xf32> to vector<1x1xf32>
    %414 = vector.shape_cast %413 : vector<1x1xf32> to vector<1x1xf32>
    %415 = vector.broadcast %414 : vector<1x1xf32> to vector<2x1xf32>
    %416 = vector.extract_strided_slice %380 {offsets = [14, 0], sizes = [2, 1], strides = [1, 1]} : vector<16x1xf32> to vector<2x1xf32>
    %cst_168 = arith.constant dense<0.000000e+00> : vector<1xf32>
    %417 = vector.multi_reduction <add>, %416, %cst_168 [0] : vector<2x1xf32> to vector<1xf32>
    %418 = vector.shape_cast %417 : vector<1xf32> to vector<1x1xf32>
    %419 = vector.shape_cast %418 : vector<1x1xf32> to vector<1x1xf32>
    %420 = vector.broadcast %419 : vector<1x1xf32> to vector<2x1xf32>
    %421 = tpu.concatenate %385, %390, %395, %400, %405, %410, %415, %420 in 0 : vector<2x1xf32>, vector<2x1xf32>, vector<2x1xf32>, vector<2x1xf32>, vector<2x1xf32>, vector<2x1xf32>, vector<2x1xf32>, vector<2x1xf32> -> vector<16x1xf32>
    %cst_169 = arith.constant 0.001953125 : f32
    %422 = vector.broadcast %cst_169 : f32 to vector<16x1xf32>
    %423 = arith.mulf %421, %422 : vector<16x1xf32>
    %cst_170 = arith.constant 9.99999974E-6 : f32
    %424 = vector.broadcast %cst_170 : f32 to vector<16x1xf32>
    %425 = arith.addf %423, %424 : vector<16x1xf32>
    %426 = math.rsqrt %425 : vector<16x1xf32>
    %427 = vector.broadcast %426 : vector<16x1xf32> to vector<16x256xf32>
    %428 = arith.mulf %377, %427 : vector<16x256xf32>
    %429 = vector.broadcast %329 : vector<16x1xf32> to vector<16x256xf32>
    %430 = arith.mulf %428, %429 : vector<16x256xf32>
    %431 = vector.broadcast %330 : vector<16x1xf32> to vector<16x256xf32>
    %432 = arith.addf %430, %431 : vector<16x256xf32>
    %cst_171 = arith.constant 2.000000e+01 : f32
    %433 = vector.broadcast %cst_171 : f32 to vector<16x256xf32>
    %434 = arith.minimumf %432, %433 : vector<16x256xf32>
    %435 = math.exp %434 : vector<16x256xf32>
    %cst_172 = arith.constant 2.000000e+00 : f32
    %436 = vector.broadcast %cst_172 : f32 to vector<16x256xf32>
    %437 = arith.addf %435, %436 : vector<16x256xf32>
    %438 = arith.mulf %435, %437 : vector<16x256xf32>
    %cst_173 = arith.constant 2.000000e+01 : f32
    %439 = vector.broadcast %cst_173 : f32 to vector<16x256xf32>
    %440 = arith.cmpf ogt, %432, %439 : vector<16x256xf32>
    %cst_174 = arith.constant 2.000000e+00 : f32
    %441 = vector.broadcast %cst_174 : f32 to vector<16x256xf32>
    %442 = arith.addf %438, %441 : vector<16x256xf32>
    %443 = arith.divf %438, %442 : vector<16x256xf32>
    %444 = arith.mulf %432, %443 : vector<16x256xf32>
    %445 = arith.select %440, %432, %444 : vector<16x256xi1>, vector<16x256xf32>
    %c0_175 = arith.constant 0 : index
    %c0_176 = arith.constant 0 : index
    %446 = vector.load %arg8[%c0_175, %c0_176] : memref<16x4xf32, #tpu.memory_space<vmem>>, vector<16x4xf32>
    %cst_177 = arith.constant dense<0.000000e+00> : vector<16x256xf32>
    %447 = tpu.matmul %446, %1, %cst_177 {dimension_numbers = #tpu.dot_dimension_numbers<[1], [0], [0], [1], [0, 0, 1, 1], [], []>} : vector<16x4xf32>, vector<4x256xf32>, vector<16x256xf32> -> vector<16x256xf32>
    %448 = vector.extract_strided_slice %2 {offsets = [0, 7], sizes = [16, 1], strides = [1, 1]} : vector<16x8xf32> to vector<16x1xf32>
    %449 = vector.broadcast %448 : vector<16x1xf32> to vector<16x256xf32>
    %450 = arith.addf %447, %449 : vector<16x256xf32>
    %451 = arith.addf %445, %450 : vector<16x256xf32>
    %c0_178 = arith.constant 0 : index
    %c0_179 = arith.constant 0 : index
    %c0_180 = arith.constant 0 : index
    %452 = vector.load %arg9[%c0_178, %c0_179, %c0_180] : memref<1x16x256xf32, #tpu.memory_space<vmem>>, vector<1x16x256xf32>
    %453 = vector.shape_cast %452 : vector<1x16x256xf32> to vector<16x256xf32>
    %454 = vector.shape_cast %451 : vector<16x256xf32> to vector<1x16x256xf32>
    tpu.vector_store %arg9[%c0_178, %c0_179, %c0_180], %454 {strides = array<i32>} : memref<1x16x256xf32, #tpu.memory_space<vmem>>, vector<1x16x256xf32>,
    return
  }
  func.func @transform_0(%arg0: i32) -> (i32, i32, i32) {
    %c0_i32 = arith.constant 0 : i32
    %c0_i32_0 = arith.constant 0 : i32
    %c0_i32_1 = arith.constant 0 : i32
    return %arg0, %c0_i32, %c0_i32_0 : i32, i32, i32
  }
  func.func @transform_1(%arg0: i32) -> (i32, i32, i32) {
    %c0_i32 = arith.constant 0 : i32
    %c0_i32_0 = arith.constant 0 : i32
    %c0_i32_1 = arith.constant 0 : i32
    return %arg0, %c0_i32, %c0_i32_0 : i32, i32, i32
  }
  func.func @transform_2(%arg0: i32) -> (i32, i32, i32) {
    %c0_i32 = arith.constant 0 : i32
    %c0_i32_0 = arith.constant 0 : i32
    %c0_i32_1 = arith.constant 0 : i32
    %c0_i32_2 = arith.constant 0 : i32
    return %c0_i32, %c0_i32_0, %c0_i32_1 : i32, i32, i32
  }
  func.func @transform_3(%arg0: i32) -> (i32, i32, i32) {
    %c0_i32 = arith.constant 0 : i32
    %c0_i32_0 = arith.constant 0 : i32
    %c0_i32_1 = arith.constant 0 : i32
    %c0_i32_2 = arith.constant 0 : i32
    return %c0_i32, %c0_i32_0, %c0_i32_1 : i32, i32, i32
  }
  func.func @transform_4(%arg0: i32) -> (i32, i32) {
    %c0_i32 = arith.constant 0 : i32
    %c0_i32_0 = arith.constant 0 : i32
    %c0_i32_1 = arith.constant 0 : i32
    return %c0_i32, %c0_i32_0 : i32, i32
  }
  func.func @transform_5(%arg0: i32) -> (i32, i32) {
    %c0_i32 = arith.constant 0 : i32
    %c0_i32_0 = arith.constant 0 : i32
    %c0_i32_1 = arith.constant 0 : i32
    return %c0_i32, %c0_i32_0 : i32, i32
  }
  func.func @transform_6(%arg0: i32) -> (i32, i32, i32) {
    %c0_i32 = arith.constant 0 : i32
    %c0_i32_0 = arith.constant 0 : i32
    %c0_i32_1 = arith.constant 0 : i32
    %c0_i32_2 = arith.constant 0 : i32
    return %c0_i32, %c0_i32_0, %c0_i32_1 : i32, i32, i32
  }
  func.func @transform_7(%arg0: i32) -> (i32, i32) {
    %c0_i32 = arith.constant 0 : i32
    %c0_i32_0 = arith.constant 0 : i32
    %c0_i32_1 = arith.constant 0 : i32
    return %c0_i32, %c0_i32_0 : i32, i32
  }
  func.func @transform_8(%arg0: i32) -> (i32, i32, i32) {
    %c0_i32 = arith.constant 0 : i32
    %c0_i32_0 = arith.constant 0 : i32
    %c0_i32_1 = arith.constant 0 : i32
    return %arg0, %c0_i32, %c0_i32_0 : i32, i32, i32
  }
}

</mosaic_0001>

<llo_original>
// kernel: tpu_custom_call.1
$region0: #{tpu_custom_call.1}
  #allocation0 [shape = 'u32[]', space=smem, size = 0x4, offset = 0x4, fixed_abs, tag = 'smem constant byte address 0x4 - core index']
  #allocation1 [shape = 'u32[144,128]{1,0:T(1,128)}', space=vmem, size = 0x12000, scoped, tag = 'internal scratch']
  %s0 = inlined_call_operand.vmem [shape: f32[2,4,256], index: 0, kind: input, shape index: {}]
  %s1 = inlined_call_operand.vmem [shape: f32[2,32,1], index: 1, kind: input, shape index: {}]
  %s2 = inlined_call_operand.vmem [shape: f32[9,16,4], index: 2, kind: input, shape index: {}]
  %s3 = inlined_call_operand.vmem [shape: f32[9,16,16], index: 3, kind: input, shape index: {}]
  %s4 = inlined_call_operand.vmem [shape: f32[16,32], index: 4, kind: input, shape index: {}]
  %s5 = inlined_call_operand.vmem [shape: f32[16,8], index: 5, kind: input, shape index: {}]
  %s6 = inlined_call_operand.vmem [shape: f32[9,1,256], index: 6, kind: input, shape index: {}]
  %s7 = inlined_call_operand.vmem [shape: f32[16,4], index: 7, kind: input, shape index: {}]
  %s8 = inlined_call_operand.hbm [shape: f32[2,16,256], index: 8, kind: output, shape index: {}]
  %s9 = sld [smem:[#allocation0]]
  $region65: #{tpu_custom_call.1} parent=0
    _
  %s11 = ssub.s32 1, %s9
  %s12 = scalar_select 0, %s11, %s9
  $region1: #{tpu_custom_call.1} parent=0
    #allocation2 [shape = 'u8[32768]{0}', space=vmem, size = 0x8000, scoped, tag = 'output window, operand 0']
    #allocation3 [shape = 's32[2]{0}', space=sflag, size = 0x8, scoped, tag = 'scoped memory for tpu_custom_call.1']
    %13 = vsyncpa [#allocation3], 0
    %s14 = scalar_lea.sflag [#allocation3], 1
    %15 = vsyncpa %s14, 0
    loop: start=0, step=1, limit=4
    $region2: #{tpu_custom_call.1} parent=1 // loop_pre_header
      _
    $region3: #{tpu_custom_call.1} parent=1 // loop_header
      %s17 = sphi 0, %s21
      %p18 = scmp.ge.s32.totalorder %s17, 4
      %s27 = sphi 0, %s29
      %s30 = sphi 0, %s27
      %s31 = sphi 0, %s30
      %s47 = sphi 0, %s31
      %s53 = sphi 0, %s55
      %s56 = sphi 0, %s53
      %s57 = sphi 0, %s56
      %s73 = sphi 0, %s57
      %s77 = sphi 0, %s77
      %s79 = sphi 0, %s77
      %s80 = sphi 0, %s79
      %s94 = sphi 0, %s80
      %s98 = sphi 0, %s98
      %s100 = sphi 0, %s98
      %s101 = sphi 0, %s100
      %s115 = sphi 0, %s101
      %s119 = sphi 0, %s119
      %s121 = sphi 0, %s119
      %s122 = sphi 0, %s121
      %s136 = sphi 0, %s122
      %s140 = sphi 0, %s140
      %s142 = sphi 0, %s140
      %s143 = sphi 0, %s142
      %s157 = sphi 0, %s143
      %s161 = sphi 0, %s161
      %s163 = sphi 0, %s161
      %s164 = sphi 0, %s163
      %s178 = sphi 0, %s164
      %s182 = sphi 0, %s182
      %s184 = sphi 0, %s182
      %s185 = sphi 0, %s184
      %s199 = sphi 0, %s185
      %s205 = sphi 0, %s207
      %s208 = sphi 0, %s205
      %s209 = sphi 0, %s208
      %s225 = sphi 0, %s209
    $region4: #{tpu_custom_call.1} parent=1 // loop_header_branch
      %20 = sbr.rel (%p18) target = $region8
    $region5: #{tpu_custom_call.1} parent=1 // loop_body
      %s22 = ssub.s32 %s17, 1
      %s23 = ssub.s32 %s17, 2
      %s24 = sadd.s32 %s17, 1
      %s25 = ssub.s32 %s17, %s24
      %p26 = scmp.eq.s32.totalorder %s25, 0
      %s28 = sadd.s32 %s27, 1
      %s29 = scalar_select %p26, %s27, %s28
      %p32 = pneg %p26
      %p33 = scmp.eq.s32.totalorder %s17, 1
      %p34 = por %p32, %p33
      %p35 = scmp.ne.s32.totalorder %s27, %s30
      %p36 = scmp.eq.s32.totalorder %s17, 0
      %p37 = por %p35, %p36
      %p38 = scmp.ne.s32.totalorder %s27, %s30
      %p39 = scmp.eq.s32.totalorder %s22, 1
      %p40 = por %p38, %p39
      %p41 = scmp.ne.s32.totalorder %s30, %s31
      %p42 = scmp.eq.s32.totalorder %s22, 0
      %p43 = por %p41, %p42
      %p44 = scmp.ne.s32.totalorder %s30, %s31
      %p45 = scmp.eq.s32.totalorder %s23, 1
      %p46 = por %p44, %p45
      %p48 = scmp.ne.s32.totalorder %s31, %s47
      %p49 = scmp.eq.s32.totalorder %s23, 0
      %p50 = por %p48, %p49
      %s51 = ssub.s32 %s17, %s24
      %p52 = scmp.eq.s32.totalorder %s51, 0
      %s54 = sadd.s32 %s53, 1
      %s55 = scalar_select %p52, %s53, %s54
      %p58 = pneg %p52
      %p59 = scmp.eq.s32.totalorder %s17, 1
      %p60 = por %p58, %p59
      %p61 = scmp.ne.s32.totalorder %s53, %s56
      %p62 = scmp.eq.s32.totalorder %s17, 0
      %p63 = por %p61, %p62
      %p64 = scmp.ne.s32.totalorder %s53, %s56
      %p65 = scmp.eq.s32.totalorder %s22, 1
      %p66 = por %p64, %p65
      %p67 = scmp.ne.s32.totalorder %s56, %s57
      %p68 = scmp.eq.s32.totalorder %s22, 0
      %p69 = por %p67, %p68
      %p70 = scmp.ne.s32.totalorder %s56, %s57
      %p71 = scmp.eq.s32.totalorder %s23, 1
      %p72 = por %p70, %p71
      %p74 = scmp.ne.s32.totalorder %s57, %s73
      %p75 = scmp.eq.s32.totalorder %s23, 0
      %p76 = por %p74, %p75
      %s78 = sadd.s32 %s77, 1
      %p81 = scmp.eq.s32.totalorder %s17, 1
      %p82 = scmp.ne.s32.totalorder %s77, %s79
      %p83 = scmp.eq.s32.totalorder %s17, 0
      %p84 = por %p82, %p83
      %p85 = scmp.ne.s32.totalorder %s77, %s79
      %p86 = scmp.eq.s32.totalorder %s22, 1
      %p87 = por %p85, %p86
      %p88 = scmp.ne.s32.totalorder %s79, %s80
      %p89 = scmp.eq.s32.totalorder %s22, 0
      %p90 = por %p88, %p89
      %p91 = scmp.ne.s32.totalorder %s79, %s80
      %p92 = scmp.eq.s32.totalorder %s23, 1
      %p93 = por %p91, %p92
      %p95 = scmp.ne.s32.totalorder %s80, %s94
      %p96 = scmp.eq.s32.totalorder %s23, 0
      %p97 = por %p95, %p96
      %s99 = sadd.s32 %s98, 1
      %p102 = scmp.eq.s32.totalorder %s17, 1
      %p103 = scmp.ne.s32.totalorder %s98, %s100
      %p104 = scmp.eq.s32.totalorder %s17, 0
      %p105 = por %p103, %p104
      %p106 = scmp.ne.s32.totalorder %s98, %s100
      %p107 = scmp.eq.s32.totalorder %s22, 1
      %p108 = por %p106, %p107
      %p109 = scmp.ne.s32.totalorder %s100, %s101
      %p110 = scmp.eq.s32.totalorder %s22, 0
      %p111 = por %p109, %p110
      %p112 = scmp.ne.s32.totalorder %s100, %s101
      %p113 = scmp.eq.s32.totalorder %s23, 1
      %p114 = por %p112, %p113
      %p116 = scmp.ne.s32.totalorder %s101, %s115
      %p117 = scmp.eq.s32.totalorder %s23, 0
      %p118 = por %p116, %p117
      %s120 = sadd.s32 %s119, 1
      %p123 = scmp.eq.s32.totalorder %s17, 1
      %p124 = scmp.ne.s32.totalorder %s119, %s121
      %p125 = scmp.eq.s32.totalorder %s17, 0
      %p126 = por %p124, %p125
      %p127 = scmp.ne.s32.totalorder %s119, %s121
      %p128 = scmp.eq.s32.totalorder %s22, 1
      %p129 = por %p127, %p128
      %p130 = scmp.ne.s32.totalorder %s121, %s122
      %p131 = scmp.eq.s32.totalorder %s22, 0
      %p132 = por %p130, %p131
      %p133 = scmp.ne.s32.totalorder %s121, %s122
      %p134 = scmp.eq.s32.totalorder %s23, 1
      %p135 = por %p133, %p134
      %p137 = scmp.ne.s32.totalorder %s122, %s136
      %p138 = scmp.eq.s32.totalorder %s23, 0
      %p139 = por %p137, %p138
      %s141 = sadd.s32 %s140, 1
      %p144 = scmp.eq.s32.totalorder %s17, 1
      %p145 = scmp.ne.s32.totalorder %s140, %s142
      %p146 = scmp.eq.s32.totalorder %s17, 0
      %p147 = por %p145, %p146
      %p148 = scmp.ne.s32.totalorder %s140, %s142
      %p149 = scmp.eq.s32.totalorder %s22, 1
      %p150 = por %p148, %p149
      %p151 = scmp.ne.s32.totalorder %s142, %s143
      %p152 = scmp.eq.s32.totalorder %s22, 0
      %p153 = por %p151, %p152
      %p154 = scmp.ne.s32.totalorder %s142, %s143
      %p155 = scmp.eq.s32.totalorder %s23, 1
      %p156 = por %p154, %p155
      %p158 = scmp.ne.s32.totalorder %s143, %s157
      %p159 = scmp.eq.s32.totalorder %s23, 0
      %p160 = por %p158, %p159
      %s162 = sadd.s32 %s161, 1
      %p165 = scmp.eq.s32.totalorder %s17, 1
      %p166 = scmp.ne.s32.totalorder %s161, %s163
      %p167 = scmp.eq.s32.totalorder %s17, 0
      %p168 = por %p166, %p167
      %p169 = scmp.ne.s32.totalorder %s161, %s163
      %p170 = scmp.eq.s32.totalorder %s22, 1
      %p171 = por %p169, %p170
      %p172 = scmp.ne.s32.totalorder %s163, %s164
      %p173 = scmp.eq.s32.totalorder %s22, 0
      %p174 = por %p172, %p173
      %p175 = scmp.ne.s32.totalorder %s163, %s164
      %p176 = scmp.eq.s32.totalorder %s23, 1
      %p177 = por %p175, %p176
      %p179 = scmp.ne.s32.totalorder %s164, %s178
      %p180 = scmp.eq.s32.totalorder %s23, 0
      %p181 = por %p179, %p180
      %s183 = sadd.s32 %s182, 1
      %p186 = scmp.eq.s32.totalorder %s17, 1
      %p187 = scmp.ne.s32.totalorder %s182, %s184
      %p188 = scmp.eq.s32.totalorder %s17, 0
      %p189 = por %p187, %p188
      %p190 = scmp.ne.s32.totalorder %s182, %s184
      %p191 = scmp.eq.s32.totalorder %s22, 1
      %p192 = por %p190, %p191
      %p193 = scmp.ne.s32.totalorder %s184, %s185
      %p194 = scmp.eq.s32.totalorder %s22, 0
      %p195 = por %p193, %p194
      %p196 = scmp.ne.s32.totalorder %s184, %s185
      %p197 = scmp.eq.s32.totalorder %s23, 1
      %p198 = por %p196, %p197
      %p200 = scmp.ne.s32.totalorder %s185, %s199
      %p201 = scmp.eq.s32.totalorder %s23, 0
      %p202 = por %p200, %p201
      %s203 = ssub.s32 %s17, %s24
      %p204 = scmp.eq.s32.totalorder %s203, 0
      %s206 = sadd.s32 %s205, 1
      %s207 = scalar_select %p204, %s205, %s206
      %p210 = pneg %p204
      %p211 = scmp.eq.s32.totalorder %s17, 1
      %p212 = por %p210, %p211
      %p213 = scmp.ne.s32.totalorder %s205, %s208
      %p214 = scmp.eq.s32.totalorder %s17, 0
      %p215 = por %p213, %p214
      %p216 = scmp.ne.s32.totalorder %s205, %s208
      %p217 = scmp.eq.s32.totalorder %s22, 1
      %p218 = por %p216, %p217
      %p219 = scmp.ne.s32.totalorder %s208, %s209
      %p220 = scmp.eq.s32.totalorder %s22, 0
      %p221 = por %p219, %p220
      %p222 = scmp.ne.s32.totalorder %s208, %s209
      %p223 = scmp.eq.s32.totalorder %s23, 1
      %p224 = por %p222, %p223
      %p226 = scmp.ne.s32.totalorder %s209, %s225
      %p227 = scmp.eq.s32.totalorder %s23, 0
      %p228 = por %p226, %p227
      %p229 = scmp.le.s32.totalorder 1, %s17
      %p230 = scmp.lt.s32.totalorder %s17, 3
      %p231 = pnand %p229, %p230
      %p232 = pneg %p231
      // Predicated region
      $region9: #{tpu_custom_call.1} parent=5 // pred_check
        _
      $region10: #{tpu_custom_call.1} parent=5 // pred_check_branch
        %234 = sbr.rel (%p231) target = $region12
      $region11: #{tpu_custom_call.1} parent=5 // pred_region
        %s235 = ssub.s32 %s17, 1
        // Predicated region
        $region13: #{tpu_custom_call.1} parent=11 // pred_check
          %p236 = pneg %p90
        $region14: #{tpu_custom_call.1} parent=11 // pred_check_branch
          %238 = sbr.rel (%p236) target = $region16
        $region15: #{tpu_custom_call.1} parent=11 // pred_region
          _
        $region16: #{tpu_custom_call.1} parent=11 // pred_fallthru
          _
        // Predicated region
        $region17: #{tpu_custom_call.1} parent=11 // pred_check
          %p239 = pneg %p111
        $region18: #{tpu_custom_call.1} parent=11 // pred_check_branch
          %241 = sbr.rel (%p239) target = $region20
        $region19: #{tpu_custom_call.1} parent=11 // pred_region
          _
        $region20: #{tpu_custom_call.1} parent=11 // pred_fallthru
          _
        // Predicated region
        $region21: #{tpu_custom_call.1} parent=11 // pred_check
          %p242 = pneg %p132
        $region22: #{tpu_custom_call.1} parent=11 // pred_check_branch
          %244 = sbr.rel (%p242) target = $region24
        $region23: #{tpu_custom_call.1} parent=11 // pred_region
          _
        $region24: #{tpu_custom_call.1} parent=11 // pred_fallthru
          _
        // Predicated region
        $region25: #{tpu_custom_call.1} parent=11 // pred_check
          %p245 = pneg %p153
        $region26: #{tpu_custom_call.1} parent=11 // pred_check_branch
          %247 = sbr.rel (%p245) target = $region28
        $region27: #{tpu_custom_call.1} parent=11 // pred_region
          _
        $region28: #{tpu_custom_call.1} parent=11 // pred_fallthru
          _
        // Predicated region
        $region29: #{tpu_custom_call.1} parent=11 // pred_check
          %p248 = pneg %p174
        $region30: #{tpu_custom_call.1} parent=11 // pred_check_branch
          %250 = sbr.rel (%p248) target = $region32
        $region31: #{tpu_custom_call.1} parent=11 // pred_region
          _
        $region32: #{tpu_custom_call.1} parent=11 // pred_fallthru
          _
        // Predicated region
        $region33: #{tpu_custom_call.1} parent=11 // pred_check
          %p251 = pneg %p195
        $region34: #{tpu_custom_call.1} parent=11 // pred_check_branch
          %253 = sbr.rel (%p251) target = $region36
        $region35: #{tpu_custom_call.1} parent=11 // pred_region
          _
        $region36: #{tpu_custom_call.1} parent=11 // pred_fallthru
          _
      $region12: #{tpu_custom_call.1} parent=5 // pred_fallthru
        _
      %p254 = scmp.lt.s32.totalorder %s17, 2
      // Predicated region
      $region37: #{tpu_custom_call.1} parent=5 // pred_check
        %p255 = pneg %p254
      $region38: #{tpu_custom_call.1} parent=5 // pred_check_branch
        %257 = sbr.rel (%p255) target = $region40
      $region39: #{tpu_custom_call.1} parent=5 // pred_region
        // Predicated region
        $region41: #{tpu_custom_call.1} parent=39 // pred_check
          %p258 = pneg %p37
        $region42: #{tpu_custom_call.1} parent=39 // pred_check_branch
          %260 = sbr.rel (%p258) target = $region44
        $region43: #{tpu_custom_call.1} parent=39 // pred_region
          %p261 = scmp.lt.s32.totalorder %s17, 1
          %s262 = scalar_select %p261, %s17, 1
          %s263 = smul.addr %s262, 2
          %s264 = smul.addr %s263, 4
          %s265 = scalar_lea.vmem %s0, %s264
        $region44: #{tpu_custom_call.1} parent=39 // pred_fallthru
          _
        // Predicated region
        $region45: #{tpu_custom_call.1} parent=39 // pred_check
          %p266 = pneg %p63
        $region46: #{tpu_custom_call.1} parent=39 // pred_check_branch
          %268 = sbr.rel (%p266) target = $region48
        $region47: #{tpu_custom_call.1} parent=39 // pred_region
          %p269 = scmp.lt.s32.totalorder %s17, 1
          %s270 = scalar_select %p269, %s17, 1
          %s271 = smul.addr %s270, 4
          %s272 = smul.addr %s271, 8
          %s273 = scalar_lea.vmem %s1, %s272
        $region48: #{tpu_custom_call.1} parent=39 // pred_fallthru
          _
      $region40: #{tpu_custom_call.1} parent=5 // pred_fallthru
        _
      %p274 = scmp.le.s32.totalorder 1, %s17
      %p275 = scmp.lt.s32.totalorder %s17, 3
      %p276 = pnand %p274, %p275
      %p277 = pneg %p276
      // Predicated region
      $region49: #{tpu_custom_call.1} parent=5 // pred_check
        _
      $region50: #{tpu_custom_call.1} parent=5 // pred_check_branch
        %279 = sbr.rel (%p276) target = $region52
      $region51: #{tpu_custom_call.1} parent=5 // pred_region
        %s280 = ssub.s32 %s17, 1
        %p281 = scmp.lt.s32.totalorder %s22, 1
        %s282 = scalar_select %p281, %s22, 1
        %s283 = smul.addr %s282, 2
        %s284 = smul.addr %s283, 4
        %s285 = scalar_lea.vmem %s0, %s284
        %p286 = pneg %p43
        %p287 = pneg %p40
        %p288 = scmp.lt.s32.totalorder %s22, 1
        %s289 = scalar_select %p288, %s22, 1
        %s290 = smul.addr %s289, 4
        %s291 = smul.addr %s290, 8
        %s292 = scalar_lea.vmem %s1, %s291
        %p293 = pneg %p69
        %p294 = pneg %p66
        %p295 = pneg %p90
        %p296 = pneg %p87
        %p297 = pneg %p111
        %p298 = pneg %p108
        %p299 = pneg %p132
        %p300 = pneg %p129
        %p301 = pneg %p153
        %p302 = pneg %p150
        %p303 = pneg %p174
        %p304 = pneg %p171
        %p305 = pneg %p195
        %p306 = pneg %p192
        %p307 = pneg %p221
        %p308 = pneg %p218
        %s309 = sand.u32 %s208, 1
        %s310 = scalar_lea.sflag [#allocation3], %s309
        %s311 = sand.u32 %s208, 1
        %s312 = smul.addr %s311, 32
        %s313 = scalar_lea.vmem [#allocation2], %s312
        %p314 = scmp.lt.s32.totalorder %s22, 1
        %s315 = scalar_select %p314, %s22, 1
        %s316 = smul.addr %s315, 2
        %s317 = smul.addr %s316, 4
        %s318 = scalar_lea.vmem %s0, %s317
        %p319 = scmp.lt.s32.totalorder %s22, 1
        %s320 = scalar_select %p319, %s22, 1
        %s321 = smul.addr %s320, 4
        %s322 = smul.addr %s321, 8
        %s323 = scalar_lea.vmem %s1, %s322
        %v324 = vld [vmem:[%s318] sm:$0xff]
        %v325 = vld [vmem:[%s5] sm:$0xff]
        %v326 = vld [vmem:[%s5 + $0x8] sm:$0xff]
        %v327 = vld [vmem:[%s4] sm:$0xff]
        %v328 = vld [vmem:[%s4 + $0x8] sm:$0xff]
        %v329 = vld [vmem:[%s323] sm:$0xff]
        %v330 = vld [vmem:[%s323 + $0x8] sm:$0xff]
        %v331 = vld [vmem:[%s323 + $0x10] sm:$0xff]
        %v332 = vld [vmem:[%s323 + $0x18] sm:$0xff]
        %v333 = vmin.f32 %v329, 20.0
        %v334 = vmin.f32 %v330, 20.0
        %v335 = vmin.f32 %v331, 20.0
        %v336 = vmin.f32 %v332, 20.0
        %v337 = vmul.f32 %v333, 1.442695
        %v338 = vpow.pop %v337
        %v339 = vmul.f32 %v334, 1.442695
        %v340 = vpow.pop %v339
        %v341 = vmul.f32 %v335, 1.442695
        %v342 = vpow.pop %v341
        %v343 = vmul.f32 %v336, 1.442695
        %v344 = vpow.pop %v343
        %v345 = vadd.f32 %v338, 2.0
        %v346 = vadd.f32 %v340, 2.0
        %v347 = vadd.f32 %v342, 2.0
        %v348 = vadd.f32 %v344, 2.0
        %v349 = vmul.f32 %v338, %v345
        %v350 = vmul.f32 %v340, %v346
        %v351 = vmul.f32 %v342, %v347
        %v352 = vmul.f32 %v344, %v348
        %vm353 = vcmp.gt.f32.partialorder %v329, 20.0
        %vm354 = vcmp.gt.f32.partialorder %v330, 20.0
        %vm355 = vcmp.gt.f32.partialorder %v331, 20.0
        %vm356 = vcmp.gt.f32.partialorder %v332, 20.0
        %v357 = vadd.f32 %v349, 2.0
        %v358 = vadd.f32 %v350, 2.0
        %v359 = vadd.f32 %v351, 2.0
        %v360 = vadd.f32 %v352, 2.0
        %v361 = vrcp.pop %v357
        %v362 = vmul.f32 %v349, %v361
        %v363 = vrcp.pop %v358
        %v364 = vmul.f32 %v350, %v363
        %v365 = vrcp.pop %v359
        %v366 = vmul.f32 %v351, %v365
        %v367 = vrcp.pop %v360
        %v368 = vmul.f32 %v352, %v367
        %v369 = vmul.f32 %v329, %v362
        %v370 = vmul.f32 %v330, %v364
        %v371 = vmul.f32 %v331, %v366
        %v372 = vmul.f32 %v332, %v368
        %v373 = vsel %vm353, %v329, %v369
        %v374 = vsel %vm354, %v330, %v370
        %v375 = vsel %vm355, %v331, %v371
        %v376 = vsel %vm356, %v332, %v372
        %379 = vrot.lane.b32.xlu0 %v325, 122
        %v380 = vpop.permute.xlu0 %379
        %381 = vrot.lane.b32.xlu0 %v326, 122
        %v382 = vpop.permute.xlu0 %381
        %vm385 = vcmask 261120
        %v387 = vsel %vm385, %v327, 0
        %v390 = vsel %vm385, %v328, 0
        %392 = vmatprep.subr.mxu0 0.0
        %393 = vmatpush1.msra.mxu0 %v373
        %394 = vmatprep.subr.mxu0 0.0
        %395 = vmatpush1.msra.mxu0 %v374
        %396 = vmatprep.subr.mxu0 0.0
        %397 = vmatpush1.msra.mxu0 %v375
        %398 = vmatprep.subr.mxu0 0.0
        %399 = vmatpush1.msra.mxu0 %v376
        %400 = vmatprep.subr.mxu0 0.0
        %401 = vmatpush1.msra.mxu0 0.0
        %402 = vmatprep.subr.mxu0 0.0
        %403 = vmatpush1.msra.mxu0 0.0
        %404 = vmatprep.subr.mxu0 0.0
        %405 = vmatpush1.msra.mxu0 0.0
        %406 = vmatprep.subr.mxu0 0.0
        %407 = vmatpush1.msra.mxu0 0.0
        %408 = vmatprep.subr.mxu0 0.0
        %409 = vmatpush1.msra.mxu0 0.0
        %410 = vmatprep.subr.mxu0 0.0
        %411 = vmatpush1.msra.mxu0 0.0
        %412 = vmatprep.subr.mxu0 0.0
        %413 = vmatpush1.msra.mxu0 0.0
        %414 = vmatprep.subr.mxu0 0.0
        %415 = vmatpush1.msra.mxu0 0.0
        %416 = vmatprep.subr.mxu0 0.0
        %417 = vmatpush1.msra.mxu0 0.0
        %418 = vmatprep.subr.mxu0 0.0
        %419 = vmatpush1.msra.mxu0 0.0
        %420 = vmatprep.subr.mxu0 0.0
        %421 = vmatpush1.msra.mxu0 0.0
        %422 = vmatprep.subr.mxu0 0.0
        %423 = vmatpush1.msra.mxu0 0.0
        %424 = vmatprep.subr.mxu0 0.0
        %425 = vmatpush1.msra.mxu0 0.0
        %426 = vmatprep.subr.mxu0 0.0
        %427 = vmatpush1.msra.mxu0 0.0
        %428 = vmatprep.subr.mxu0 0.0
        %429 = vmatpush1.msra.mxu0 0.0
        %430 = vmatprep.subr.mxu0 0.0
        %431 = vmatpush1.msra.mxu0 0.0
        %432 = vmatprep.subr.mxu0 0.0
        %433 = vmatpush1.msra.mxu0 0.0
        %434 = vmatprep.subr.mxu0 0.0
        %435 = vmatpush1.msra.mxu0 0.0
        %436 = vmatprep.subr.mxu0 0.0
        %437 = vmatpush1.msra.mxu0 0.0
        %438 = vmatprep.subr.mxu0 0.0
        %439 = vmatpush1.msra.mxu0 0.0
        %440 = vmatprep.subr.mxu0 0.0
        %441 = vmatpush1.msra.mxu0 0.0
        %442 = vmatprep.subr.mxu0 0.0
        %443 = vmatpush1.msra.mxu0 0.0
        %444 = vmatprep.subr.mxu0 0.0
        %445 = vmatpush1.msra.mxu0 0.0
        %446 = vmatprep.subr.mxu0 0.0
        %447 = vmatpush1.msra.mxu0 0.0
        %448 = vmatprep.subr.mxu0 0.0
        %449 = vmatpush1.msra.mxu0 0.0
        %450 = vmatprep.subr.mxu0 0.0
        %451 = vmatpush1.msra.mxu0 0.0
        %452 = vmatprep.subr.mxu0 0.0
        %453 = vmatpush1.msra.mxu0 0.0
        %454 = vmatprep.subr.mxu0 0.0
        %455 = vmatpush1.msra.mxu0 0.0
        %456 = vmatprep.mubr.f32.mxu0 0.0
        %457 = vmatmul.mubr.f32.gmra.mrb[0].mxu0 %v387
        %v458 = vpop.f32.mrb[0].mxu0
        %v459 = vadd.f32 %v380, %v458
        %v460 = vpop.f32.mrb[0].mxu0
        %461 = vmatprep.mubr.f32.mxu0 0.0
        %462 = vmatmul.mubr.f32.gmra.mrb[0].mxu0 %v390
        %v463 = vpop.f32.mrb[0].mxu0
        %v464 = vadd.f32 %v382, %v463
        %v465 = vpop.f32.mrb[0].mxu0
        %466 = vdwg.mxu0
        %v468 = vcombine.high %v324, %v324
        %469 = vrot.lane.b32.xlu0 %v468, 17
        %v470 = vpop.permute.xlu0 %469
        %472 = vrot.lane.b32.xlu0 %v324, 17
        %v473 = vpop.permute.xlu0 %472
        %vm474 = vcmask 138240
        %v475 = vsel %vm474, %v473, %v470
        %v477 = vsel %vm474, %v470, %v473
        %v478 = vld [vmem:[%s2] sm:$0xff]
        %v479 = vld [vmem:[%s2 + $0x8] sm:$0xff]
        %vm480 = vcmask 31744
        %v482 = vsel %vm480, %v478, 0
        %v485 = vsel %vm480, %v479, 0
        %vm487 = vcmask 1043456
        %v489 = vsel %vm487, %v477, 0
        %v491 = vsel %vm487, %v475, 0
        %493 = vmatprep.subr.mxu0 %v491
        %494 = vmatpush1.msra.mxu0 %v489
        %495 = vmatprep.subr.mxu0 0.0
        %496 = vmatpush1.msra.mxu0 0.0
        %497 = vmatprep.subr.mxu0 0.0
        %498 = vmatpush1.msra.mxu0 0.0
        %499 = vmatprep.subr.mxu0 0.0
        %500 = vmatpush1.msra.mxu0 0.0
        %501 = vmatprep.subr.mxu0 0.0
        %502 = vmatpush1.msra.mxu0 0.0
        %503 = vmatprep.subr.mxu0 0.0
        %504 = vmatpush1.msra.mxu0 0.0
        %505 = vmatprep.subr.mxu0 0.0
        %506 = vmatpush1.msra.mxu0 0.0
        %507 = vmatprep.subr.mxu0 0.0
        %508 = vmatpush1.msra.mxu0 0.0
        %509 = vmatprep.subr.mxu0 0.0
        %510 = vmatpush1.msra.mxu0 0.0
        %511 = vmatprep.subr.mxu0 0.0
        %512 = vmatpush1.msra.mxu0 0.0
        %513 = vmatprep.subr.mxu0 0.0
        %514 = vmatpush1.msra.mxu0 0.0
        %515 = vmatprep.subr.mxu0 0.0
        %516 = vmatpush1.msra.mxu0 0.0
        %517 = vmatprep.subr.mxu0 0.0
        %518 = vmatpush1.msra.mxu0 0.0
        %519 = vmatprep.subr.mxu0 0.0
        %520 = vmatpush1.msra.mxu0 0.0
        %521 = vmatprep.subr.mxu0 0.0
        %522 = vmatpush1.msra.mxu0 0.0
        %523 = vmatprep.subr.mxu0 0.0
        %524 = vmatpush1.msra.mxu0 0.0
        %525 = vmatprep.subr.mxu0 0.0
        %526 = vmatpush1.msra.mxu0 0.0
        %527 = vmatprep.subr.mxu0 0.0
        %528 = vmatpush1.msra.mxu0 0.0
        %529 = vmatprep.subr.mxu0 0.0
        %530 = vmatpush1.msra.mxu0 0.0
        %531 = vmatprep.subr.mxu0 0.0
        %532 = vmatpush1.msra.mxu0 0.0
        %533 = vmatprep.subr.mxu0 0.0
        %534 = vmatpush1.msra.mxu0 0.0
        %535 = vmatprep.subr.mxu0 0.0
        %536 = vmatpush1.msra.mxu0 0.0
        %537 = vmatprep.subr.mxu0 0.0
        %538 = vmatpush1.msra.mxu0 0.0
        %539 = vmatprep.subr.mxu0 0.0
        %540 = vmatpush1.msra.mxu0 0.0
        %541 = vmatprep.subr.mxu0 0.0
        %542 = vmatpush1.msra.mxu0 0.0
        %543 = vmatprep.subr.mxu0 0.0
        %544 = vmatpush1.msra.mxu0 0.0
        %545 = vmatprep.subr.mxu0 0.0
        %546 = vmatpush1.msra.mxu0 0.0
        %547 = vmatprep.subr.mxu0 0.0
        %548 = vmatpush1.msra.mxu0 0.0
        %549 = vmatprep.subr.mxu0 0.0
        %550 = vmatpush1.msra.mxu0 0.0
        %551 = vmatprep.subr.mxu0 0.0
        %552 = vmatpush1.msra.mxu0 0.0
        %553 = vmatprep.subr.mxu0 0.0
        %554 = vmatpush1.msra.mxu0 0.0
        %555 = vmatprep.subr.mxu0 0.0
        %556 = vmatpush1.msra.mxu0 0.0
        %557 = vmatprep.mubr.f32.mxu0 0.0
        %558 = vmatmul.mubr.f32.gmra.mrb[0].mxu0 %v482
        %v559 = vpop.f32.mrb[0].mxu0
        %v560 = vadd.f32 0.0, %v559
        %v561 = vpop.f32.mrb[0].mxu0
        %v562 = vadd.f32 0.0, %v561
        %563 = vmatprep.mubr.f32.mxu0 0.0
        %564 = vmatmul.mubr.f32.gmra.mrb[0].mxu0 %v485
        %v565 = vpop.f32.mrb[0].mxu0
        %v566 = vadd.f32 0.0, %v565
        %v567 = vpop.f32.mrb[0].mxu0
        %v568 = vadd.f32 0.0, %v567
        %569 = vdwg.mxu0
        %v570 = vld [vmem:[%s6] sm:$0x3]
        %v572 = vlaneseq
        %v573 = vshrl.u32 %v572, 7
        %v574 = vsub.s32 0, %v573
        %v575 = vrot.slane %v570, %v574
        %v576 = vlaneseq
        %v577 = vshrl.u32 %v576, 7
        %v578 = vsub.s32 1, %v577
        %v579 = vrot.slane %v570, %v578
        %v582 = vmul.f32 %v560, %v575
        %v583 = vmul.f32 %v562, %v579
        %v584 = vmul.f32 %v566, %v575
        %v585 = vmul.f32 %v568, %v579
        %586 = vrot.lane.b32.xlu0 %v468, 16
        %v587 = vpop.permute.xlu0 %586
        %589 = vrot.lane.b32.xlu0 %v324, 16
        %v590 = vpop.permute.xlu0 %589
        %vm591 = vcmask 130048
        %v592 = vsel %vm591, %v590, %v587
        %v594 = vsel %vm591, %v587, %v590
        %s595 = scalar_lea.vmem %s2, 16
        %v596 = vld [vmem:[%s595] sm:$0xff]
        %v597 = vld [vmem:[%s595 + $0x8] sm:$0xff]
        %v599 = vsel %vm480, %v596, 0
        %v602 = vsel %vm480, %v597, 0
        %v605 = vsel %vm487, %v594, 0
        %v607 = vsel %vm487, %v592, 0
        %609 = vmatprep.subr.mxu0 %v607
        %610 = vmatpush1.msra.mxu0 %v605
        %611 = vmatprep.subr.mxu0 0.0
        %612 = vmatpush1.msra.mxu0 0.0
        %613 = vmatprep.subr.mxu0 0.0
        %614 = vmatpush1.msra.mxu0 0.0
        %615 = vmatprep.subr.mxu0 0.0
        %616 = vmatpush1.msra.mxu0 0.0
        %617 = vmatprep.subr.mxu0 0.0
        %618 = vmatpush1.msra.mxu0 0.0
        %619 = vmatprep.subr.mxu0 0.0
        %620 = vmatpush1.msra.mxu0 0.0
        %621 = vmatprep.subr.mxu0 0.0
        %622 = vmatpush1.msra.mxu0 0.0
        %623 = vmatprep.subr.mxu0 0.0
        %624 = vmatpush1.msra.mxu0 0.0
        %625 = vmatprep.subr.mxu0 0.0
        %626 = vmatpush1.msra.mxu0 0.0
        %627 = vmatprep.subr.mxu0 0.0
        %628 = vmatpush1.msra.mxu0 0.0
        %629 = vmatprep.subr.mxu0 0.0
        %630 = vmatpush1.msra.mxu0 0.0
        %631 = vmatprep.subr.mxu0 0.0
        %632 = vmatpush1.msra.mxu0 0.0
        %633 = vmatprep.subr.mxu0 0.0
        %634 = vmatpush1.msra.mxu0 0.0
        %635 = vmatprep.subr.mxu0 0.0
        %636 = vmatpush1.msra.mxu0 0.0
        %637 = vmatprep.subr.mxu0 0.0
        %638 = vmatpush1.msra.mxu0 0.0
        %639 = vmatprep.subr.mxu0 0.0
        %640 = vmatpush1.msra.mxu0 0.0
        %641 = vmatprep.subr.mxu0 0.0
        %642 = vmatpush1.msra.mxu0 0.0
        %643 = vmatprep.subr.mxu0 0.0
        %644 = vmatpush1.msra.mxu0 0.0
        %645 = vmatprep.subr.mxu0 0.0
        %646 = vmatpush1.msra.mxu0 0.0
        %647 = vmatprep.subr.mxu0 0.0
        %648 = vmatpush1.msra.mxu0 0.0
        %649 = vmatprep.subr.mxu0 0.0
        %650 = vmatpush1.msra.mxu0 0.0
        %651 = vmatprep.subr.mxu0 0.0
        %652 = vmatpush1.msra.mxu0 0.0
        %653 = vmatprep.subr.mxu0 0.0
        %654 = vmatpush1.msra.mxu0 0.0
        %655 = vmatprep.subr.mxu0 0.0
        %656 = vmatpush1.msra.mxu0 0.0
        %657 = vmatprep.subr.mxu0 0.0
        %658 = vmatpush1.msra.mxu0 0.0
        %659 = vmatprep.subr.mxu0 0.0
        %660 = vmatpush1.msra.mxu0 0.0
        %661 = vmatprep.subr.mxu0 0.0
        %662 = vmatpush1.msra.mxu0 0.0
        %663 = vmatprep.subr.mxu0 0.0
        %664 = vmatpush1.msra.mxu0 0.0
        %665 = vmatprep.subr.mxu0 0.0
        %666 = vmatpush1.msra.mxu0 0.0
        %667 = vmatprep.subr.mxu0 0.0
        %668 = vmatpush1.msra.mxu0 0.0
        %669 = vmatprep.subr.mxu0 0.0
        %670 = vmatpush1.msra.mxu0 0.0
        %671 = vmatprep.subr.mxu0 0.0
        %672 = vmatpush1.msra.mxu0 0.0
        %673 = vmatprep.mubr.f32.mxu0 0.0
        %674 = vmatmul.mubr.f32.gmra.mrb[0].mxu0 %v599
        %v675 = vpop.f32.mrb[0].mxu0
        %v676 = vadd.f32 0.0, %v675
        %v677 = vpop.f32.mrb[0].mxu0
        %v678 = vadd.f32 0.0, %v677
        %679 = vmatprep.mubr.f32.mxu0 0.0
        %680 = vmatmul.mubr.f32.gmra.mrb[0].mxu0 %v602
        %v681 = vpop.f32.mrb[0].mxu0
        %v682 = vadd.f32 0.0, %v681
        %v683 = vpop.f32.mrb[0].mxu0
        %v684 = vadd.f32 0.0, %v683
        %685 = vdwg.mxu0
        %s686 = scalar_lea.vmem %s6, 2
        %v687 = vld [vmem:[%s686] sm:$0x3]
        %v689 = vlaneseq
        %v690 = vshrl.u32 %v689, 7
        %v691 = vsub.s32 0, %v690
        %v692 = vrot.slane %v687, %v691
        %v693 = vlaneseq
        %v694 = vshrl.u32 %v693, 7
        %v695 = vsub.s32 1, %v694
        %v696 = vrot.slane %v687, %v695
        %v699 = vmul.f32 %v676, %v692
        %v700 = vmul.f32 %v678, %v696
        %v701 = vmul.f32 %v682, %v692
        %v702 = vmul.f32 %v684, %v696
        %v703 = vadd.f32 %v582, %v699
        %v704 = vadd.f32 %v583, %v700
        %v705 = vadd.f32 %v584, %v701
        %v706 = vadd.f32 %v585, %v702
        %707 = vrot.lane.b32.xlu0 %v468, 15
        %v708 = vpop.permute.xlu0 %707
        %710 = vrot.lane.b32.xlu0 %v324, 15
        %v711 = vpop.permute.xlu0 %710
        %vm712 = vcmask 121856
        %v713 = vsel %vm712, %v711, %v708
        %v715 = vsel %vm712, %v708, %v711
        %s716 = scalar_lea.vmem %s2, 32
        %v717 = vld [vmem:[%s716] sm:$0xff]
        %v718 = vld [vmem:[%s716 + $0x8] sm:$0xff]
        %v720 = vsel %vm480, %v717, 0
        %v723 = vsel %vm480, %v718, 0
        %v726 = vsel %vm487, %v715, 0
        %v728 = vsel %vm487, %v713, 0
        %730 = vmatprep.subr.mxu0 %v728
        %731 = vmatpush1.msra.mxu0 %v726
        %732 = vmatprep.subr.mxu0 0.0
        %733 = vmatpush1.msra.mxu0 0.0
        %734 = vmatprep.subr.mxu0 0.0
        %735 = vmatpush1.msra.mxu0 0.0
        %736 = vmatprep.subr.mxu0 0.0
        %737 = vmatpush1.msra.mxu0 0.0
        %738 = vmatprep.subr.mxu0 0.0
        %739 = vmatpush1.msra.mxu0 0.0
        %740 = vmatprep.subr.mxu0 0.0
        %741 = vmatpush1.msra.mxu0 0.0
        %742 = vmatprep.subr.mxu0 0.0
        %743 = vmatpush1.msra.mxu0 0.0
        %744 = vmatprep.subr.mxu0 0.0
        %745 = vmatpush1.msra.mxu0 0.0
        %746 = vmatprep.subr.mxu0 0.0
        %747 = vmatpush1.msra.mxu0 0.0
        %748 = vmatprep.subr.mxu0 0.0
        %749 = vmatpush1.msra.mxu0 0.0
        %750 = vmatprep.subr.mxu0 0.0
        %751 = vmatpush1.msra.mxu0 0.0
        %752 = vmatprep.subr.mxu0 0.0
        %753 = vmatpush1.msra.mxu0 0.0
        %754 = vmatprep.subr.mxu0 0.0
        %755 = vmatpush1.msra.mxu0 0.0
        %756 = vmatprep.subr.mxu0 0.0
        %757 = vmatpush1.msra.mxu0 0.0
        %758 = vmatprep.subr.mxu0 0.0
        %759 = vmatpush1.msra.mxu0 0.0
        %760 = vmatprep.subr.mxu0 0.0
        %761 = vmatpush1.msra.mxu0 0.0
        %762 = vmatprep.subr.mxu0 0.0
        %763 = vmatpush1.msra.mxu0 0.0
        %764 = vmatprep.subr.mxu0 0.0
        %765 = vmatpush1.msra.mxu0 0.0
        %766 = vmatprep.subr.mxu0 0.0
        %767 = vmatpush1.msra.mxu0 0.0
        %768 = vmatprep.subr.mxu0 0.0
        %769 = vmatpush1.msra.mxu0 0.0
        %770 = vmatprep.subr.mxu0 0.0
        %771 = vmatpush1.msra.mxu0 0.0
        %772 = vmatprep.subr.mxu0 0.0
        %773 = vmatpush1.msra.mxu0 0.0
        %774 = vmatprep.subr.mxu0 0.0
        %775 = vmatpush1.msra.mxu0 0.0
        %776 = vmatprep.subr.mxu0 0.0
        %777 = vmatpush1.msra.mxu0 0.0
        %778 = vmatprep.subr.mxu0 0.0
        %779 = vmatpush1.msra.mxu0 0.0
        %780 = vmatprep.subr.mxu0 0.0
        %781 = vmatpush1.msra.mxu0 0.0
        %782 = vmatprep.subr.mxu0 0.0
        %783 = vmatpush1.msra.mxu0 0.0
        %784 = vmatprep.subr.mxu0 0.0
        %785 = vmatpush1.msra.mxu0 0.0
        %786 = vmatprep.subr.mxu0 0.0
        %787 = vmatpush1.msra.mxu0 0.0
        %788 = vmatprep.subr.mxu0 0.0
        %789 = vmatpush1.msra.mxu0 0.0
        %790 = vmatprep.subr.mxu0 0.0
        %791 = vmatpush1.msra.mxu0 0.0
        %792 = vmatprep.subr.mxu0 0.0
        %793 = vmatpush1.msra.mxu0 0.0
        %794 = vmatprep.mubr.f32.mxu0 0.0
        %795 = vmatmul.mubr.f32.gmra.mrb[0].mxu0 %v720
        %v796 = vpop.f32.mrb[0].mxu0
        %v797 = vadd.f32 0.0, %v796
        %v798 = vpop.f32.mrb[0].mxu0
        %v799 = vadd.f32 0.0, %v798
        %800 = vmatprep.mubr.f32.mxu0 0.0
        %801 = vmatmul.mubr.f32.gmra.mrb[0].mxu0 %v723
        %v802 = vpop.f32.mrb[0].mxu0
        %v803 = vadd.f32 0.0, %v802
        %v804 = vpop.f32.mrb[0].mxu0
        %v805 = vadd.f32 0.0, %v804
        %806 = vdwg.mxu0
        %s807 = scalar_lea.vmem %s6, 4
        %v808 = vld [vmem:[%s807] sm:$0x3]
        %v810 = vlaneseq
        %v811 = vshrl.u32 %v810, 7
        %v812 = vsub.s32 0, %v811
        %v813 = vrot.slane %v808, %v812
        %v814 = vlaneseq
        %v815 = vshrl.u32 %v814, 7
        %v816 = vsub.s32 1, %v815
        %v817 = vrot.slane %v808, %v816
        %v820 = vmul.f32 %v797, %v813
        %v821 = vmul.f32 %v799, %v817
        %v822 = vmul.f32 %v803, %v813
        %v823 = vmul.f32 %v805, %v817
        %v824 = vadd.f32 %v703, %v820
        %v825 = vadd.f32 %v704, %v821
        %v826 = vadd.f32 %v705, %v822
        %v827 = vadd.f32 %v706, %v823
        %828 = vrot.lane.b32.xlu0 %v468, 1
        %v829 = vpop.permute.xlu0 %828
        %831 = vrot.lane.b32.xlu0 %v324, 1
        %v832 = vpop.permute.xlu0 %831
        %vm833 = vcmask 7168
        %v834 = vsel %vm833, %v832, %v829
        %v836 = vsel %vm833, %v829, %v832
        %s837 = scalar_lea.vmem %s2, 48
        %v838 = vld [vmem:[%s837] sm:$0xff]
        %v839 = vld [vmem:[%s837 + $0x8] sm:$0xff]
        %v841 = vsel %vm480, %v838, 0
        %v844 = vsel %vm480, %v839, 0
        %v847 = vsel %vm487, %v836, 0
        %v849 = vsel %vm487, %v834, 0
        %851 = vmatprep.subr.mxu0 %v849
        %852 = vmatpush1.msra.mxu0 %v847
        %853 = vmatprep.subr.mxu0 0.0
        %854 = vmatpush1.msra.mxu0 0.0
        %855 = vmatprep.subr.mxu0 0.0
        %856 = vmatpush1.msra.mxu0 0.0
        %857 = vmatprep.subr.mxu0 0.0
        %858 = vmatpush1.msra.mxu0 0.0
        %859 = vmatprep.subr.mxu0 0.0
        %860 = vmatpush1.msra.mxu0 0.0
        %861 = vmatprep.subr.mxu0 0.0
        %862 = vmatpush1.msra.mxu0 0.0
        %863 = vmatprep.subr.mxu0 0.0
        %864 = vmatpush1.msra.mxu0 0.0
        %865 = vmatprep.subr.mxu0 0.0
        %866 = vmatpush1.msra.mxu0 0.0
        %867 = vmatprep.subr.mxu0 0.0
        %868 = vmatpush1.msra.mxu0 0.0
        %869 = vmatprep.subr.mxu0 0.0
        %870 = vmatpush1.msra.mxu0 0.0
        %871 = vmatprep.subr.mxu0 0.0
        %872 = vmatpush1.msra.mxu0 0.0
        %873 = vmatprep.subr.mxu0 0.0
        %874 = vmatpush1.msra.mxu0 0.0
        %875 = vmatprep.subr.mxu0 0.0
        %876 = vmatpush1.msra.mxu0 0.0
        %877 = vmatprep.subr.mxu0 0.0
        %878 = vmatpush1.msra.mxu0 0.0
        %879 = vmatprep.subr.mxu0 0.0
        %880 = vmatpush1.msra.mxu0 0.0
        %881 = vmatprep.subr.mxu0 0.0
        %882 = vmatpush1.msra.mxu0 0.0
        %883 = vmatprep.subr.mxu0 0.0
        %884 = vmatpush1.msra.mxu0 0.0
        %885 = vmatprep.subr.mxu0 0.0
        %886 = vmatpush1.msra.mxu0 0.0
        %887 = vmatprep.subr.mxu0 0.0
        %888 = vmatpush1.msra.mxu0 0.0
        %889 = vmatprep.subr.mxu0 0.0
        %890 = vmatpush1.msra.mxu0 0.0
        %891 = vmatprep.subr.mxu0 0.0
        %892 = vmatpush1.msra.mxu0 0.0
        %893 = vmatprep.subr.mxu0 0.0
        %894 = vmatpush1.msra.mxu0 0.0
        %895 = vmatprep.subr.mxu0 0.0
        %896 = vmatpush1.msra.mxu0 0.0
        %897 = vmatprep.subr.mxu0 0.0
        %898 = vmatpush1.msra.mxu0 0.0
        %899 = vmatprep.subr.mxu0 0.0
        %900 = vmatpush1.msra.mxu0 0.0
        %901 = vmatprep.subr.mxu0 0.0
        %902 = vmatpush1.msra.mxu0 0.0
        %903 = vmatprep.subr.mxu0 0.0
        %904 = vmatpush1.msra.mxu0 0.0
        %905 = vmatprep.subr.mxu0 0.0
        %906 = vmatpush1.msra.mxu0 0.0
        %907 = vmatprep.subr.mxu0 0.0
        %908 = vmatpush1.msra.mxu0 0.0
        %909 = vmatprep.subr.mxu0 0.0
        %910 = vmatpush1.msra.mxu0 0.0
        %911 = vmatprep.subr.mxu0 0.0
        %912 = vmatpush1.msra.mxu0 0.0
        %913 = vmatprep.subr.mxu0 0.0
        %914 = vmatpush1.msra.mxu0 0.0
        %915 = vmatprep.mubr.f32.mxu0 0.0
        %916 = vmatmul.mubr.f32.gmra.mrb[0].mxu0 %v841
        %v917 = vpop.f32.mrb[0].mxu0
        %v918 = vadd.f32 0.0, %v917
        %v919 = vpop.f32.mrb[0].mxu0
        %v920 = vadd.f32 0.0, %v919
        %921 = vmatprep.mubr.f32.mxu0 0.0
        %922 = vmatmul.mubr.f32.gmra.mrb[0].mxu0 %v844
        %v923 = vpop.f32.mrb[0].mxu0
        %v924 = vadd.f32 0.0, %v923
        %v925 = vpop.f32.mrb[0].mxu0
        %v926 = vadd.f32 0.0, %v925
        %927 = vdwg.mxu0
        %s928 = scalar_lea.vmem %s6, 6
        %v929 = vld [vmem:[%s928] sm:$0x3]
        %v931 = vlaneseq
        %v932 = vshrl.u32 %v931, 7
        %v933 = vsub.s32 0, %v932
        %v934 = vrot.slane %v929, %v933
        %v935 = vlaneseq
        %v936 = vshrl.u32 %v935, 7
        %v937 = vsub.s32 1, %v936
        %v938 = vrot.slane %v929, %v937
        %v941 = vmul.f32 %v918, %v934
        %v942 = vmul.f32 %v920, %v938
        %v943 = vmul.f32 %v924, %v934
        %v944 = vmul.f32 %v926, %v938
        %v945 = vadd.f32 %v824, %v941
        %v946 = vadd.f32 %v825, %v942
        %v947 = vadd.f32 %v826, %v943
        %v948 = vadd.f32 %v827, %v944
        %s949 = scalar_lea.vmem %s2, 64
        %v950 = vld [vmem:[%s949] sm:$0xff]
        %v951 = vld [vmem:[%s949 + $0x8] sm:$0xff]
        %v953 = vsel %vm480, %v950, 0
        %v956 = vsel %vm480, %v951, 0
        %v958 = vsel %vm487, %v324, 0
        %v960 = vsel %vm487, %v468, 0
        %962 = vmatprep.subr.mxu0 %v960
        %963 = vmatpush1.msra.mxu0 %v958
        %964 = vmatprep.subr.mxu0 0.0
        %965 = vmatpush1.msra.mxu0 0.0
        %966 = vmatprep.subr.mxu0 0.0
        %967 = vmatpush1.msra.mxu0 0.0
        %968 = vmatprep.subr.mxu0 0.0
        %969 = vmatpush1.msra.mxu0 0.0
        %970 = vmatprep.subr.mxu0 0.0
        %971 = vmatpush1.msra.mxu0 0.0
        %972 = vmatprep.subr.mxu0 0.0
        %973 = vmatpush1.msra.mxu0 0.0
        %974 = vmatprep.subr.mxu0 0.0
        %975 = vmatpush1.msra.mxu0 0.0
        %976 = vmatprep.subr.mxu0 0.0
        %977 = vmatpush1.msra.mxu0 0.0
        %978 = vmatprep.subr.mxu0 0.0
        %979 = vmatpush1.msra.mxu0 0.0
        %980 = vmatprep.subr.mxu0 0.0
        %981 = vmatpush1.msra.mxu0 0.0
        %982 = vmatprep.subr.mxu0 0.0
        %983 = vmatpush1.msra.mxu0 0.0
        %984 = vmatprep.subr.mxu0 0.0
        %985 = vmatpush1.msra.mxu0 0.0
        %986 = vmatprep.subr.mxu0 0.0
        %987 = vmatpush1.msra.mxu0 0.0
        %988 = vmatprep.subr.mxu0 0.0
        %989 = vmatpush1.msra.mxu0 0.0
        %990 = vmatprep.subr.mxu0 0.0
        %991 = vmatpush1.msra.mxu0 0.0
        %992 = vmatprep.subr.mxu0 0.0
        %993 = vmatpush1.msra.mxu0 0.0
        %994 = vmatprep.subr.mxu0 0.0
        %995 = vmatpush1.msra.mxu0 0.0
        %996 = vmatprep.subr.mxu0 0.0
        %997 = vmatpush1.msra.mxu0 0.0
        %998 = vmatprep.subr.mxu0 0.0
        %999 = vmatpush1.msra.mxu0 0.0
        %1000 = vmatprep.subr.mxu0 0.0
        %1001 = vmatpush1.msra.mxu0 0.0
        %1002 = vmatprep.subr.mxu0 0.0
        %1003 = vmatpush1.msra.mxu0 0.0
        %1004 = vmatprep.subr.mxu0 0.0
        %1005 = vmatpush1.msra.mxu0 0.0
        %1006 = vmatprep.subr.mxu0 0.0
        %1007 = vmatpush1.msra.mxu0 0.0
        %1008 = vmatprep.subr.mxu0 0.0
        %1009 = vmatpush1.msra.mxu0 0.0
        %1010 = vmatprep.subr.mxu0 0.0
        %1011 = vmatpush1.msra.mxu0 0.0
        %1012 = vmatprep.subr.mxu0 0.0
        %1013 = vmatpush1.msra.mxu0 0.0
        %1014 = vmatprep.subr.mxu0 0.0
        %1015 = vmatpush1.msra.mxu0 0.0
        %1016 = vmatprep.subr.mxu0 0.0
        %1017 = vmatpush1.msra.mxu0 0.0
        %1018 = vmatprep.subr.mxu0 0.0
        %1019 = vmatpush1.msra.mxu0 0.0
        %1020 = vmatprep.subr.mxu0 0.0
        %1021 = vmatpush1.msra.mxu0 0.0
        %1022 = vmatprep.subr.mxu0 0.0
        %1023 = vmatpush1.msra.mxu0 0.0
        %1024 = vmatprep.subr.mxu0 0.0
        %1025 = vmatpush1.msra.mxu0 0.0
        %1026 = vmatprep.mubr.f32.mxu0 0.0
        %1027 = vmatmul.mubr.f32.gmra.mrb[0].mxu0 %v953
        %v1028 = vpop.f32.mrb[0].mxu0
        %v1029 = vadd.f32 0.0, %v1028
        %v1030 = vpop.f32.mrb[0].mxu0
        %v1031 = vadd.f32 0.0, %v1030
        %1032 = vmatprep.mubr.f32.mxu0 0.0
        %1033 = vmatmul.mubr.f32.gmra.mrb[0].mxu0 %v956
        %v1034 = vpop.f32.mrb[0].mxu0
        %v1035 = vadd.f32 0.0, %v1034
        %v1036 = vpop.f32.mrb[0].mxu0
        %v1037 = vadd.f32 0.0, %v1036
        %1038 = vdwg.mxu0
        %v1039 = vadd.f32 %v945, %v1029
        %v1040 = vadd.f32 %v946, %v1031
        %v1041 = vadd.f32 %v947, %v1035
        %v1042 = vadd.f32 %v948, %v1037
        %1043 = vrot.lane.b32.xlu0 %v324, 127
        %v1044 = vpop.permute.xlu0 %1043
        %1045 = vrot.lane.b32.xlu0 %v468, 127
        %v1046 = vpop.permute.xlu0 %1045
        %vm1047 = vcmask 1039360
        %v1048 = vsel %vm1047, %v1044, %v1046
        %v1051 = vsel %vm1047, %v1046, %v1044
        %s1052 = scalar_lea.vmem %s2, 80
        %v1053 = vld [vmem:[%s1052] sm:$0xff]
        %v1054 = vld [vmem:[%s1052 + $0x8] sm:$0xff]
        %v1056 = vsel %vm480, %v1053, 0
        %v1059 = vsel %vm480, %v1054, 0
        %v1061 = vsel %vm487, %v1048, 0
        %v1064 = vsel %vm487, %v1051, 0
        %1066 = vmatprep.subr.mxu0 %v1064
        %1067 = vmatpush1.msra.mxu0 %v1061
        %1068 = vmatprep.subr.mxu0 0.0
        %1069 = vmatpush1.msra.mxu0 0.0
        %1070 = vmatprep.subr.mxu0 0.0
        %1071 = vmatpush1.msra.mxu0 0.0
        %1072 = vmatprep.subr.mxu0 0.0
        %1073 = vmatpush1.msra.mxu0 0.0
        %1074 = vmatprep.subr.mxu0 0.0
        %1075 = vmatpush1.msra.mxu0 0.0
        %1076 = vmatprep.subr.mxu0 0.0
        %1077 = vmatpush1.msra.mxu0 0.0
        %1078 = vmatprep.subr.mxu0 0.0
        %1079 = vmatpush1.msra.mxu0 0.0
        %1080 = vmatprep.subr.mxu0 0.0
        %1081 = vmatpush1.msra.mxu0 0.0
        %1082 = vmatprep.subr.mxu0 0.0
        %1083 = vmatpush1.msra.mxu0 0.0
        %1084 = vmatprep.subr.mxu0 0.0
        %1085 = vmatpush1.msra.mxu0 0.0
        %1086 = vmatprep.subr.mxu0 0.0
        %1087 = vmatpush1.msra.mxu0 0.0
        %1088 = vmatprep.subr.mxu0 0.0
        %1089 = vmatpush1.msra.mxu0 0.0
        %1090 = vmatprep.subr.mxu0 0.0
        %1091 = vmatpush1.msra.mxu0 0.0
        %1092 = vmatprep.subr.mxu0 0.0
        %1093 = vmatpush1.msra.mxu0 0.0
        %1094 = vmatprep.subr.mxu0 0.0
        %1095 = vmatpush1.msra.mxu0 0.0
        %1096 = vmatprep.subr.mxu0 0.0
        %1097 = vmatpush1.msra.mxu0 0.0
        %1098 = vmatprep.subr.mxu0 0.0
        %1099 = vmatpush1.msra.mxu0 0.0
        %1100 = vmatprep.subr.mxu0 0.0
        %1101 = vmatpush1.msra.mxu0 0.0
        %1102 = vmatprep.subr.mxu0 0.0
        %1103 = vmatpush1.msra.mxu0 0.0
        %1104 = vmatprep.subr.mxu0 0.0
        %1105 = vmatpush1.msra.mxu0 0.0
        %1106 = vmatprep.subr.mxu0 0.0
        %1107 = vmatpush1.msra.mxu0 0.0
        %1108 = vmatprep.subr.mxu0 0.0
        %1109 = vmatpush1.msra.mxu0 0.0
        %1110 = vmatprep.subr.mxu0 0.0
        %1111 = vmatpush1.msra.mxu0 0.0
        %1112 = vmatprep.subr.mxu0 0.0
        %1113 = vmatpush1.msra.mxu0 0.0
        %1114 = vmatprep.subr.mxu0 0.0
        %1115 = vmatpush1.msra.mxu0 0.0
        %1116 = vmatprep.subr.mxu0 0.0
        %1117 = vmatpush1.msra.mxu0 0.0
        %1118 = vmatprep.subr.mxu0 0.0
        %1119 = vmatpush1.msra.mxu0 0.0
        %1120 = vmatprep.subr.mxu0 0.0
        %1121 = vmatpush1.msra.mxu0 0.0
        %1122 = vmatprep.subr.mxu0 0.0
        %1123 = vmatpush1.msra.mxu0 0.0
        %1124 = vmatprep.subr.mxu0 0.0
        %1125 = vmatpush1.msra.mxu0 0.0
        %1126 = vmatprep.subr.mxu0 0.0
        %1127 = vmatpush1.msra.mxu0 0.0
        %1128 = vmatprep.subr.mxu0 0.0
        %1129 = vmatpush1.msra.mxu0 0.0
        %1130 = vmatprep.mubr.f32.mxu0 0.0
        %1131 = vmatmul.mubr.f32.gmra.mrb[0].mxu0 %v1056
        %v1132 = vpop.f32.mrb[0].mxu0
        %v1133 = vadd.f32 0.0, %v1132
        %v1134 = vpop.f32.mrb[0].mxu0
        %v1135 = vadd.f32 0.0, %v1134
        %1136 = vmatprep.mubr.f32.mxu0 0.0
        %1137 = vmatmul.mubr.f32.gmra.mrb[0].mxu0 %v1059
        %v1138 = vpop.f32.mrb[0].mxu0
        %v1139 = vadd.f32 0.0, %v1138
        %v1140 = vpop.f32.mrb[0].mxu0
        %v1141 = vadd.f32 0.0, %v1140
        %1142 = vdwg.mxu0
        %s1143 = scalar_lea.vmem %s6, 10
        %v1144 = vld [vmem:[%s1143] sm:$0x3]
        %v1146 = vlaneseq
        %v1147 = vshrl.u32 %v1146, 7
        %v1148 = vsub.s32 0, %v1147
        %v1149 = vrot.slane %v1144, %v1148
        %v1150 = vlaneseq
        %v1151 = vshrl.u32 %v1150, 7
        %v1152 = vsub.s32 1, %v1151
        %v1153 = vrot.slane %v1144, %v1152
        %v1156 = vmul.f32 %v1133, %v1149
        %v1157 = vmul.f32 %v1135, %v1153
        %v1158 = vmul.f32 %v1139, %v1149
        %v1159 = vmul.f32 %v1141, %v1153
        %v1160 = vadd.f32 %v1039, %v1156
        %v1161 = vadd.f32 %v1040, %v1157
        %v1162 = vadd.f32 %v1041, %v1158
        %v1163 = vadd.f32 %v1042, %v1159
        %1164 = vrot.lane.b32.xlu0 %v324, 113
        %v1165 = vpop.permute.xlu0 %1164
        %1166 = vrot.lane.b32.xlu0 %v468, 113
        %v1167 = vpop.permute.xlu0 %1166
        %vm1168 = vcmask 924672
        %v1169 = vsel %vm1168, %v1165, %v1167
        %v1172 = vsel %vm1168, %v1167, %v1165
        %s1173 = scalar_lea.vmem %s2, 96
        %v1174 = vld [vmem:[%s1173] sm:$0xff]
        %v1175 = vld [vmem:[%s1173 + $0x8] sm:$0xff]
        %v1177 = vsel %vm480, %v1174, 0
        %v1180 = vsel %vm480, %v1175, 0
        %v1182 = vsel %vm487, %v1169, 0
        %v1185 = vsel %vm487, %v1172, 0
        %1187 = vmatprep.subr.mxu0 %v1185
        %1188 = vmatpush1.msra.mxu0 %v1182
        %1189 = vmatprep.subr.mxu0 0.0
        %1190 = vmatpush1.msra.mxu0 0.0
        %1191 = vmatprep.subr.mxu0 0.0
        %1192 = vmatpush1.msra.mxu0 0.0
        %1193 = vmatprep.subr.mxu0 0.0
        %1194 = vmatpush1.msra.mxu0 0.0
        %1195 = vmatprep.subr.mxu0 0.0
        %1196 = vmatpush1.msra.mxu0 0.0
        %1197 = vmatprep.subr.mxu0 0.0
        %1198 = vmatpush1.msra.mxu0 0.0
        %1199 = vmatprep.subr.mxu0 0.0
        %1200 = vmatpush1.msra.mxu0 0.0
        %1201 = vmatprep.subr.mxu0 0.0
        %1202 = vmatpush1.msra.mxu0 0.0
        %1203 = vmatprep.subr.mxu0 0.0
        %1204 = vmatpush1.msra.mxu0 0.0
        %1205 = vmatprep.subr.mxu0 0.0
        %1206 = vmatpush1.msra.mxu0 0.0
        %1207 = vmatprep.subr.mxu0 0.0
        %1208 = vmatpush1.msra.mxu0 0.0
        %1209 = vmatprep.subr.mxu0 0.0
        %1210 = vmatpush1.msra.mxu0 0.0
        %1211 = vmatprep.subr.mxu0 0.0
        %1212 = vmatpush1.msra.mxu0 0.0
        %1213 = vmatprep.subr.mxu0 0.0
        %1214 = vmatpush1.msra.mxu0 0.0
        %1215 = vmatprep.subr.mxu0 0.0
        %1216 = vmatpush1.msra.mxu0 0.0
        %1217 = vmatprep.subr.mxu0 0.0
        %1218 = vmatpush1.msra.mxu0 0.0
        %1219 = vmatprep.subr.mxu0 0.0
        %1220 = vmatpush1.msra.mxu0 0.0
        %1221 = vmatprep.subr.mxu0 0.0
        %1222 = vmatpush1.msra.mxu0 0.0
        %1223 = vmatprep.subr.mxu0 0.0
        %1224 = vmatpush1.msra.mxu0 0.0
        %1225 = vmatprep.subr.mxu0 0.0
        %1226 = vmatpush1.msra.mxu0 0.0
        %1227 = vmatprep.subr.mxu0 0.0
        %1228 = vmatpush1.msra.mxu0 0.0
        %1229 = vmatprep.subr.mxu0 0.0
        %1230 = vmatpush1.msra.mxu0 0.0
        %1231 = vmatprep.subr.mxu0 0.0
        %1232 = vmatpush1.msra.mxu0 0.0
        %1233 = vmatprep.subr.mxu0 0.0
        %1234 = vmatpush1.msra.mxu0 0.0
        %1235 = vmatprep.subr.mxu0 0.0
        %1236 = vmatpush1.msra.mxu0 0.0
        %1237 = vmatprep.subr.mxu0 0.0
        %1238 = vmatpush1.msra.mxu0 0.0
        %1239 = vmatprep.subr.mxu0 0.0
        %1240 = vmatpush1.msra.mxu0 0.0
        %1241 = vmatprep.subr.mxu0 0.0
        %1242 = vmatpush1.msra.mxu0 0.0
        %1243 = vmatprep.subr.mxu0 0.0
        %1244 = vmatpush1.msra.mxu0 0.0
        %1245 = vmatprep.subr.mxu0 0.0
        %1246 = vmatpush1.msra.mxu0 0.0
        %1247 = vmatprep.subr.mxu0 0.0
        %1248 = vmatpush1.msra.mxu0 0.0
        %1249 = vmatprep.subr.mxu0 0.0
        %1250 = vmatpush1.msra.mxu0 0.0
        %1251 = vmatprep.mubr.f32.mxu0 0.0
        %1252 = vmatmul.mubr.f32.gmra.mrb[0].mxu0 %v1177
        %v1253 = vpop.f32.mrb[0].mxu0
        %v1254 = vadd.f32 0.0, %v1253
        %v1255 = vpop.f32.mrb[0].mxu0
        %v1256 = vadd.f32 0.0, %v1255
        %1257 = vmatprep.mubr.f32.mxu0 0.0
        %1258 = vmatmul.mubr.f32.gmra.mrb[0].mxu0 %v1180
        %v1259 = vpop.f32.mrb[0].mxu0
        %v1260 = vadd.f32 0.0, %v1259
        %v1261 = vpop.f32.mrb[0].mxu0
        %v1262 = vadd.f32 0.0, %v1261
        %1263 = vdwg.mxu0
        %s1264 = scalar_lea.vmem %s6, 12
        %v1265 = vld [vmem:[%s1264] sm:$0x3]
        %v1267 = vlaneseq
        %v1268 = vshrl.u32 %v1267, 7
        %v1269 = vsub.s32 0, %v1268
        %v1270 = vrot.slane %v1265, %v1269
        %v1271 = vlaneseq
        %v1272 = vshrl.u32 %v1271, 7
        %v1273 = vsub.s32 1, %v1272
        %v1274 = vrot.slane %v1265, %v1273
        %v1277 = vmul.f32 %v1254, %v1270
        %v1278 = vmul.f32 %v1256, %v1274
        %v1279 = vmul.f32 %v1260, %v1270
        %v1280 = vmul.f32 %v1262, %v1274
        %v1281 = vadd.f32 %v1160, %v1277
        %v1282 = vadd.f32 %v1161, %v1278
        %v1283 = vadd.f32 %v1162, %v1279
        %v1284 = vadd.f32 %v1163, %v1280
        %1285 = vrot.lane.b32.xlu0 %v324, 112
        %v1286 = vpop.permute.xlu0 %1285
        %1287 = vrot.lane.b32.xlu0 %v468, 112
        %v1288 = vpop.permute.xlu0 %1287
        %vm1289 = vcmask 916480
        %v1290 = vsel %vm1289, %v1286, %v1288
        %v1293 = vsel %vm1289, %v1288, %v1286
        %s1294 = scalar_lea.vmem %s2, 112
        %v1295 = vld [vmem:[%s1294] sm:$0xff]
        %v1296 = vld [vmem:[%s1294 + $0x8] sm:$0xff]
        %v1298 = vsel %vm480, %v1295, 0
        %v1301 = vsel %vm480, %v1296, 0
        %v1303 = vsel %vm487, %v1290, 0
        %v1306 = vsel %vm487, %v1293, 0
        %1308 = vmatprep.subr.mxu0 %v1306
        %1309 = vmatpush1.msra.mxu0 %v1303
        %1310 = vmatprep.subr.mxu0 0.0
        %1311 = vmatpush1.msra.mxu0 0.0
        %1312 = vmatprep.subr.mxu0 0.0
        %1313 = vmatpush1.msra.mxu0 0.0
        %1314 = vmatprep.subr.mxu0 0.0
        %1315 = vmatpush1.msra.mxu0 0.0
        %1316 = vmatprep.subr.mxu0 0.0
        %1317 = vmatpush1.msra.mxu0 0.0
        %1318 = vmatprep.subr.mxu0 0.0
        %1319 = vmatpush1.msra.mxu0 0.0
        %1320 = vmatprep.subr.mxu0 0.0
        %1321 = vmatpush1.msra.mxu0 0.0
        %1322 = vmatprep.subr.mxu0 0.0
        %1323 = vmatpush1.msra.mxu0 0.0
        %1324 = vmatprep.subr.mxu0 0.0
        %1325 = vmatpush1.msra.mxu0 0.0
        %1326 = vmatprep.subr.mxu0 0.0
        %1327 = vmatpush1.msra.mxu0 0.0
        %1328 = vmatprep.subr.mxu0 0.0
        %1329 = vmatpush1.msra.mxu0 0.0
        %1330 = vmatprep.subr.mxu0 0.0
        %1331 = vmatpush1.msra.mxu0 0.0
        %1332 = vmatprep.subr.mxu0 0.0
        %1333 = vmatpush1.msra.mxu0 0.0
        %1334 = vmatprep.subr.mxu0 0.0
        %1335 = vmatpush1.msra.mxu0 0.0
        %1336 = vmatprep.subr.mxu0 0.0
        %1337 = vmatpush1.msra.mxu0 0.0
        %1338 = vmatprep.subr.mxu0 0.0
        %1339 = vmatpush1.msra.mxu0 0.0
        %1340 = vmatprep.subr.mxu0 0.0
        %1341 = vmatpush1.msra.mxu0 0.0
        %1342 = vmatprep.subr.mxu0 0.0
        %1343 = vmatpush1.msra.mxu0 0.0
        %1344 = vmatprep.subr.mxu0 0.0
        %1345 = vmatpush1.msra.mxu0 0.0
        %1346 = vmatprep.subr.mxu0 0.0
        %1347 = vmatpush1.msra.mxu0 0.0
        %1348 = vmatprep.subr.mxu0 0.0
        %1349 = vmatpush1.msra.mxu0 0.0
        %1350 = vmatprep.subr.mxu0 0.0
        %1351 = vmatpush1.msra.mxu0 0.0
        %1352 = vmatprep.subr.mxu0 0.0
        %1353 = vmatpush1.msra.mxu0 0.0
        %1354 = vmatprep.subr.mxu0 0.0
        %1355 = vmatpush1.msra.mxu0 0.0
        %1356 = vmatprep.subr.mxu0 0.0
        %1357 = vmatpush1.msra.mxu0 0.0
        %1358 = vmatprep.subr.mxu0 0.0
        %1359 = vmatpush1.msra.mxu0 0.0
        %1360 = vmatprep.subr.mxu0 0.0
        %1361 = vmatpush1.msra.mxu0 0.0
        %1362 = vmatprep.subr.mxu0 0.0
        %1363 = vmatpush1.msra.mxu0 0.0
        %1364 = vmatprep.subr.mxu0 0.0
        %1365 = vmatpush1.msra.mxu0 0.0
        %1366 = vmatprep.subr.mxu0 0.0
        %1367 = vmatpush1.msra.mxu0 0.0
        %1368 = vmatprep.subr.mxu0 0.0
        %1369 = vmatpush1.msra.mxu0 0.0
        %1370 = vmatprep.subr.mxu0 0.0
        %1371 = vmatpush1.msra.mxu0 0.0
        %1372 = vmatprep.mubr.f32.mxu0 0.0
        %1373 = vmatmul.mubr.f32.gmra.mrb[0].mxu0 %v1298
        %v1374 = vpop.f32.mrb[0].mxu0
        %v1375 = vadd.f32 0.0, %v1374
        %v1376 = vpop.f32.mrb[0].mxu0
        %v1377 = vadd.f32 0.0, %v1376
        %1378 = vmatprep.mubr.f32.mxu0 0.0
        %1379 = vmatmul.mubr.f32.gmra.mrb[0].mxu0 %v1301
        %v1380 = vpop.f32.mrb[0].mxu0
        %v1381 = vadd.f32 0.0, %v1380
        %v1382 = vpop.f32.mrb[0].mxu0
        %v1383 = vadd.f32 0.0, %v1382
        %1384 = vdwg.mxu0
        %s1385 = scalar_lea.vmem %s6, 14
        %v1386 = vld [vmem:[%s1385] sm:$0x3]
        %v1388 = vlaneseq
        %v1389 = vshrl.u32 %v1388, 7
        %v1390 = vsub.s32 0, %v1389
        %v1391 = vrot.slane %v1386, %v1390
        %v1392 = vlaneseq
        %v1393 = vshrl.u32 %v1392, 7
        %v1394 = vsub.s32 1, %v1393
        %v1395 = vrot.slane %v1386, %v1394
        %v1398 = vmul.f32 %v1375, %v1391
        %v1399 = vmul.f32 %v1377, %v1395
        %v1400 = vmul.f32 %v1381, %v1391
        %v1401 = vmul.f32 %v1383, %v1395
        %v1402 = vadd.f32 %v1281, %v1398
        %v1403 = vadd.f32 %v1282, %v1399
        %v1404 = vadd.f32 %v1283, %v1400
        %v1405 = vadd.f32 %v1284, %v1401
        %1406 = vrot.lane.b32.xlu0 %v324, 111
        %v1407 = vpop.permute.xlu0 %1406
        %1408 = vrot.lane.b32.xlu0 %v468, 111
        %v1409 = vpop.permute.xlu0 %1408
        %vm1410 = vcmask 908288
        %v1411 = vsel %vm1410, %v1407, %v1409
        %v1414 = vsel %vm1410, %v1409, %v1407
        %s1415 = scalar_lea.vmem %s2, 128
        %v1416 = vld [vmem:[%s1415] sm:$0xff]
        %v1417 = vld [vmem:[%s1415 + $0x8] sm:$0xff]
        %v1419 = vsel %vm480, %v1416, 0
        %v1422 = vsel %vm480, %v1417, 0
        %v1424 = vsel %vm487, %v1411, 0
        %v1427 = vsel %vm487, %v1414, 0
        %1429 = vmatprep.subr.mxu0 %v1427
        %1430 = vmatpush1.msra.mxu0 %v1424
        %1431 = vmatprep.subr.mxu0 0.0
        %1432 = vmatpush1.msra.mxu0 0.0
        %1433 = vmatprep.subr.mxu0 0.0
        %1434 = vmatpush1.msra.mxu0 0.0
        %1435 = vmatprep.subr.mxu0 0.0
        %1436 = vmatpush1.msra.mxu0 0.0
        %1437 = vmatprep.subr.mxu0 0.0
        %1438 = vmatpush1.msra.mxu0 0.0
        %1439 = vmatprep.subr.mxu0 0.0
        %1440 = vmatpush1.msra.mxu0 0.0
        %1441 = vmatprep.subr.mxu0 0.0
        %1442 = vmatpush1.msra.mxu0 0.0
        %1443 = vmatprep.subr.mxu0 0.0
        %1444 = vmatpush1.msra.mxu0 0.0
        %1445 = vmatprep.subr.mxu0 0.0
        %1446 = vmatpush1.msra.mxu0 0.0
        %1447 = vmatprep.subr.mxu0 0.0
        %1448 = vmatpush1.msra.mxu0 0.0
        %1449 = vmatprep.subr.mxu0 0.0
        %1450 = vmatpush1.msra.mxu0 0.0
        %1451 = vmatprep.subr.mxu0 0.0
        %1452 = vmatpush1.msra.mxu0 0.0
        %1453 = vmatprep.subr.mxu0 0.0
        %1454 = vmatpush1.msra.mxu0 0.0
        %1455 = vmatprep.subr.mxu0 0.0
        %1456 = vmatpush1.msra.mxu0 0.0
        %1457 = vmatprep.subr.mxu0 0.0
        %1458 = vmatpush1.msra.mxu0 0.0
        %1459 = vmatprep.subr.mxu0 0.0
        %1460 = vmatpush1.msra.mxu0 0.0
        %1461 = vmatprep.subr.mxu0 0.0
        %1462 = vmatpush1.msra.mxu0 0.0
        %1463 = vmatprep.subr.mxu0 0.0
        %1464 = vmatpush1.msra.mxu0 0.0
        %1465 = vmatprep.subr.mxu0 0.0
        %1466 = vmatpush1.msra.mxu0 0.0
        %1467 = vmatprep.subr.mxu0 0.0
        %1468 = vmatpush1.msra.mxu0 0.0
        %1469 = vmatprep.subr.mxu0 0.0
        %1470 = vmatpush1.msra.mxu0 0.0
        %1471 = vmatprep.subr.mxu0 0.0
        %1472 = vmatpush1.msra.mxu0 0.0
        %1473 = vmatprep.subr.mxu0 0.0
        %1474 = vmatpush1.msra.mxu0 0.0
        %1475 = vmatprep.subr.mxu0 0.0
        %1476 = vmatpush1.msra.mxu0 0.0
        %1477 = vmatprep.subr.mxu0 0.0
        %1478 = vmatpush1.msra.mxu0 0.0
        %1479 = vmatprep.subr.mxu0 0.0
        %1480 = vmatpush1.msra.mxu0 0.0
        %1481 = vmatprep.subr.mxu0 0.0
        %1482 = vmatpush1.msra.mxu0 0.0
        %1483 = vmatprep.subr.mxu0 0.0
        %1484 = vmatpush1.msra.mxu0 0.0
        %1485 = vmatprep.subr.mxu0 0.0
        %1486 = vmatpush1.msra.mxu0 0.0
        %1487 = vmatprep.subr.mxu0 0.0
        %1488 = vmatpush1.msra.mxu0 0.0
        %1489 = vmatprep.subr.mxu0 0.0
        %1490 = vmatpush1.msra.mxu0 0.0
        %1491 = vmatprep.subr.mxu0 0.0
        %1492 = vmatpush1.msra.mxu0 0.0
        %1493 = vmatprep.mubr.f32.mxu0 0.0
        %1494 = vmatmul.mubr.f32.gmra.mrb[0].mxu0 %v1419
        %v1495 = vpop.f32.mrb[0].mxu0
        %v1496 = vadd.f32 0.0, %v1495
        %v1497 = vpop.f32.mrb[0].mxu0
        %v1498 = vadd.f32 0.0, %v1497
        %1499 = vmatprep.mubr.f32.mxu0 0.0
        %1500 = vmatmul.mubr.f32.gmra.mrb[0].mxu0 %v1422
        %v1501 = vpop.f32.mrb[0].mxu0
        %v1502 = vadd.f32 0.0, %v1501
        %v1503 = vpop.f32.mrb[0].mxu0
        %v1504 = vadd.f32 0.0, %v1503
        %1505 = vdwg.mxu0
        %s1506 = scalar_lea.vmem %s6, 16
        %v1507 = vld [vmem:[%s1506] sm:$0x3]
        %v1509 = vlaneseq
        %v1510 = vshrl.u32 %v1509, 7
        %v1511 = vsub.s32 0, %v1510
        %v1512 = vrot.slane %v1507, %v1511
        %v1513 = vlaneseq
        %v1514 = vshrl.u32 %v1513, 7
        %v1515 = vsub.s32 1, %v1514
        %v1516 = vrot.slane %v1507, %v1515
        %v1519 = vmul.f32 %v1496, %v1512
        %v1520 = vmul.f32 %v1498, %v1516
        %v1521 = vmul.f32 %v1502, %v1512
        %v1522 = vmul.f32 %v1504, %v1516
        %v1523 = vadd.f32 %v1402, %v1519
        %v1524 = vadd.f32 %v1403, %v1520
        %v1525 = vadd.f32 %v1404, %v1521
        %v1526 = vadd.f32 %v1405, %v1522
        %1527 = vset.pattern.permute.xlu0 0
        %1528 = vperm.xlu0 %1527, %v325
        %v1529 = vpop.permute.xlu0 %1528
        %1531 = vset.pattern.permute.xlu0 0
        %1532 = vperm.xlu0 %1531, %v326
        %v1533 = vpop.permute.xlu0 %1532
        %v1535 = vadd.f32 %v1523, %v1529
        %v1536 = vadd.f32 %v1524, %v1529
        %v1537 = vadd.f32 %v1525, %v1533
        %v1538 = vadd.f32 %v1526, %v1533
        %v1539 = vadd.f32 %v1535, %v1536
        %1540 = vadd.xlane.f32.xlu0 %v1539
        %v1541 = vpop.xlane.xlu0 %1540
        %v1542 = vadd.f32 %v1537, %v1538
        %1543 = vadd.xlane.f32.xlu0 %v1542
        %v1544 = vpop.xlane.xlu0 %1543
        %vm1545 = vcmask 1041408
        %v1546 = vsel %vm1545, %v1541, 0.0
        %v1547 = vrot.slane %v1546, 4
        %v1548 = vadd.f32 %v1546, %v1547
        %v1549 = vrot.slane %v1548, 2
        %v1550 = vadd.f32 %v1548, %v1549
        %v1551 = vrot.slane %v1550, 1
        %v1552 = vadd.f32 %v1550, %v1551
        %v1554 = vrot.slane %v1541, 2
        %v1556 = vsel %vm1545, %v1554, 0.0
        %v1557 = vrot.slane %v1556, 4
        %v1558 = vadd.f32 %v1556, %v1557
        %v1559 = vrot.slane %v1558, 2
        %v1560 = vadd.f32 %v1558, %v1559
        %v1561 = vrot.slane %v1560, 1
        %v1562 = vadd.f32 %v1560, %v1561
        %v1563 = vrot.slane %v1541, 4
        %v1565 = vsel %vm1545, %v1563, 0.0
        %v1566 = vrot.slane %v1565, 4
        %v1567 = vadd.f32 %v1565, %v1566
        %v1568 = vrot.slane %v1567, 2
        %v1569 = vadd.f32 %v1567, %v1568
        %v1570 = vrot.slane %v1569, 1
        %v1571 = vadd.f32 %v1569, %v1570
        %v1572 = vrot.slane %v1541, 6
        %v1574 = vsel %vm1545, %v1572, 0.0
        %v1575 = vrot.slane %v1574, 4
        %v1576 = vadd.f32 %v1574, %v1575
        %v1577 = vrot.slane %v1576, 2
        %v1578 = vadd.f32 %v1576, %v1577
        %v1579 = vrot.slane %v1578, 1
        %v1580 = vadd.f32 %v1578, %v1579
        %v1581 = vsel %vm1545, %v1544, 0.0
        %v1582 = vrot.slane %v1581, 4
        %v1583 = vadd.f32 %v1581, %v1582
        %v1584 = vrot.slane %v1583, 2
        %v1585 = vadd.f32 %v1583, %v1584
        %v1586 = vrot.slane %v1585, 1
        %v1587 = vadd.f32 %v1585, %v1586
        %v1589 = vrot.slane %v1544, 2
        %v1591 = vsel %vm1545, %v1589, 0.0
        %v1592 = vrot.slane %v1591, 4
        %v1593 = vadd.f32 %v1591, %v1592
        %v1594 = vrot.slane %v1593, 2
        %v1595 = vadd.f32 %v1593, %v1594
        %v1596 = vrot.slane %v1595, 1
        %v1597 = vadd.f32 %v1595, %v1596
        %v1598 = vrot.slane %v1544, 4
        %v1600 = vsel %vm1545, %v1598, 0.0
        %v1601 = vrot.slane %v1600, 4
        %v1602 = vadd.f32 %v1600, %v1601
        %v1603 = vrot.slane %v1602, 2
        %v1604 = vadd.f32 %v1602, %v1603
        %v1605 = vrot.slane %v1604, 1
        %v1606 = vadd.f32 %v1604, %v1605
        %v1607 = vrot.slane %v1544, 6
        %v1609 = vsel %vm1545, %v1607, 0.0
        %v1610 = vrot.slane %v1609, 4
        %v1611 = vadd.f32 %v1609, %v1610
        %v1612 = vrot.slane %v1611, 2
        %v1613 = vadd.f32 %v1611, %v1612
        %v1614 = vrot.slane %v1613, 1
        %v1615 = vadd.f32 %v1613, %v1614
        %v1616 = vsel %vm1545, %v1552, %v1562
        %v1617 = vsel %vm487, %v1616, %v1571
        %vm1618 = vcmask 1045504
        %v1619 = vsel %vm1618, %v1617, %v1580
        %v1620 = vsel %vm1545, %v1587, %v1597
        %v1621 = vsel %vm487, %v1620, %v1606
        %v1622 = vsel %vm1618, %v1621, %v1615
        %v1623 = vmul.f32 %v1619, 0.001953125
        %v1624 = vmul.f32 %v1622, 0.001953125
        %1626 = vset.pattern.permute.xlu0 0
        %1627 = vperm.xlu0 %1626, %v1623
        %v1628 = vpop.permute.xlu0 %1627
        %1631 = vset.pattern.permute.xlu0 0
        %1632 = vperm.xlu0 %1631, %v1624
        %v1633 = vpop.permute.xlu0 %1632
        %v1635 = vsub.f32 %v1535, %v1628
        %v1636 = vsub.f32 %v1536, %v1628
        %v1637 = vsub.f32 %v1537, %v1633
        %v1638 = vsub.f32 %v1538, %v1633
        %v1639 = vmul.f32 %v1635, %v1635
        %v1640 = vmul.f32 %v1636, %v1636
        %v1641 = vmul.f32 %v1637, %v1637
        %v1642 = vmul.f32 %v1638, %v1638
        %v1643 = vadd.f32 %v1639, %v1640
        %1644 = vadd.xlane.f32.xlu0 %v1643
        %v1645 = vpop.xlane.xlu0 %1644
        %v1646 = vadd.f32 %v1641, %v1642
        %1647 = vadd.xlane.f32.xlu0 %v1646
        %v1648 = vpop.xlane.xlu0 %1647
        %v1649 = vsel %vm1545, %v1645, 0.0
        %v1650 = vrot.slane %v1649, 4
        %v1651 = vadd.f32 %v1649, %v1650
        %v1652 = vrot.slane %v1651, 2
        %v1653 = vadd.f32 %v1651, %v1652
        %v1654 = vrot.slane %v1653, 1
        %v1655 = vadd.f32 %v1653, %v1654
        %v1657 = vrot.slane %v1645, 2
        %v1659 = vsel %vm1545, %v1657, 0.0
        %v1660 = vrot.slane %v1659, 4
        %v1661 = vadd.f32 %v1659, %v1660
        %v1662 = vrot.slane %v1661, 2
        %v1663 = vadd.f32 %v1661, %v1662
        %v1664 = vrot.slane %v1663, 1
        %v1665 = vadd.f32 %v1663, %v1664
        %v1666 = vrot.slane %v1645, 4
        %v1668 = vsel %vm1545, %v1666, 0.0
        %v1669 = vrot.slane %v1668, 4
        %v1670 = vadd.f32 %v1668, %v1669
        %v1671 = vrot.slane %v1670, 2
        %v1672 = vadd.f32 %v1670, %v1671
        %v1673 = vrot.slane %v1672, 1
        %v1674 = vadd.f32 %v1672, %v1673
        %v1675 = vrot.slane %v1645, 6
        %v1677 = vsel %vm1545, %v1675, 0.0
        %v1678 = vrot.slane %v1677, 4
        %v1679 = vadd.f32 %v1677, %v1678
        %v1680 = vrot.slane %v1679, 2
        %v1681 = vadd.f32 %v1679, %v1680
        %v1682 = vrot.slane %v1681, 1
        %v1683 = vadd.f32 %v1681, %v1682
        %v1684 = vsel %vm1545, %v1648, 0.0
        %v1685 = vrot.slane %v1684, 4
        %v1686 = vadd.f32 %v1684, %v1685
        %v1687 = vrot.slane %v1686, 2
        %v1688 = vadd.f32 %v1686, %v1687
        %v1689 = vrot.slane %v1688, 1
        %v1690 = vadd.f32 %v1688, %v1689
        %v1692 = vrot.slane %v1648, 2
        %v1694 = vsel %vm1545, %v1692, 0.0
        %v1695 = vrot.slane %v1694, 4
        %v1696 = vadd.f32 %v1694, %v1695
        %v1697 = vrot.slane %v1696, 2
        %v1698 = vadd.f32 %v1696, %v1697
        %v1699 = vrot.slane %v1698, 1
        %v1700 = vadd.f32 %v1698, %v1699
        %v1701 = vrot.slane %v1648, 4
        %v1703 = vsel %vm1545, %v1701, 0.0
        %v1704 = vrot.slane %v1703, 4
        %v1705 = vadd.f32 %v1703, %v1704
        %v1706 = vrot.slane %v1705, 2
        %v1707 = vadd.f32 %v1705, %v1706
        %v1708 = vrot.slane %v1707, 1
        %v1709 = vadd.f32 %v1707, %v1708
        %v1710 = vrot.slane %v1648, 6
        %v1712 = vsel %vm1545, %v1710, 0.0
        %v1713 = vrot.slane %v1712, 4
        %v1714 = vadd.f32 %v1712, %v1713
        %v1715 = vrot.slane %v1714, 2
        %v1716 = vadd.f32 %v1714, %v1715
        %v1717 = vrot.slane %v1716, 1
        %v1718 = vadd.f32 %v1716, %v1717
        %v1719 = vsel %vm1545, %v1655, %v1665
        %v1720 = vsel %vm487, %v1719, %v1674
        %v1721 = vsel %vm1618, %v1720, %v1683
        %v1722 = vsel %vm1545, %v1690, %v1700
        %v1723 = vsel %vm487, %v1722, %v1709
        %v1724 = vsel %vm1618, %v1723, %v1718
        %v1725 = vmul.f32 %v1721, 0.001953125
        %v1726 = vmul.f32 %v1724, 0.001953125
        %v1727 = vadd.f32 %v1725, 1e-05
        %v1728 = vadd.f32 %v1726, 1e-05
        %v1729 = vrsqrt.pop %v1727
        %v1730 = vrsqrt.pop %v1728
        %1732 = vset.pattern.permute.xlu0 0
        %1733 = vperm.xlu0 %1732, %v1729
        %v1734 = vpop.permute.xlu0 %1733
        %1737 = vset.pattern.permute.xlu0 0
        %1738 = vperm.xlu0 %1737, %v1730
        %v1739 = vpop.permute.xlu0 %1738
        %v1741 = vmul.f32 %v1635, %v1734
        %v1742 = vmul.f32 %v1636, %v1734
        %v1743 = vmul.f32 %v1637, %v1739
        %v1744 = vmul.f32 %v1638, %v1739
        %1745 = vset.pattern.permute.xlu0 1
        %1746 = vperm.xlu0 %1745, %v325
        %v1747 = vpop.permute.xlu0 %1746
        %1749 = vset.pattern.permute.xlu0 1
        %1750 = vperm.xlu0 %1749, %v326
        %v1751 = vpop.permute.xlu0 %1750
        %v1753 = vmul.f32 %v1741, %v1747
        %v1754 = vmul.f32 %v1742, %v1747
        %v1755 = vmul.f32 %v1743, %v1751
        %v1756 = vmul.f32 %v1744, %v1751
        %1757 = vset.pattern.permute.xlu0 2
        %1758 = vperm.xlu0 %1757, %v325
        %v1759 = vpop.permute.xlu0 %1758
        %1761 = vset.pattern.permute.xlu0 2
        %1762 = vperm.xlu0 %1761, %v326
        %v1763 = vpop.permute.xlu0 %1762
        %v1765 = vadd.f32 %v1753, %v1759
        %v1766 = vadd.f32 %v1754, %v1759
        %v1767 = vadd.f32 %v1755, %v1763
        %v1768 = vadd.f32 %v1756, %v1763
        %v1769 = vmin.f32 %v1765, 20.0
        %v1770 = vmin.f32 %v1766, 20.0
        %v1771 = vmin.f32 %v1767, 20.0
        %v1772 = vmin.f32 %v1768, 20.0
        %v1773 = vmul.f32 %v1769, 1.442695
        %v1774 = vpow.pop %v1773
        %v1775 = vmul.f32 %v1770, 1.442695
        %v1776 = vpow.pop %v1775
        %v1777 = vmul.f32 %v1771, 1.442695
        %v1778 = vpow.pop %v1777
        %v1779 = vmul.f32 %v1772, 1.442695
        %v1780 = vpow.pop %v1779
        %v1781 = vadd.f32 %v1774, 2.0
        %v1782 = vadd.f32 %v1776, 2.0
        %v1783 = vadd.f32 %v1778, 2.0
        %v1784 = vadd.f32 %v1780, 2.0
        %v1785 = vmul.f32 %v1774, %v1781
        %v1786 = vmul.f32 %v1776, %v1782
        %v1787 = vmul.f32 %v1778, %v1783
        %v1788 = vmul.f32 %v1780, %v1784
        %vm1789 = vcmp.gt.f32.partialorder %v1765, 20.0
        %vm1790 = vcmp.gt.f32.partialorder %v1766, 20.0
        %vm1791 = vcmp.gt.f32.partialorder %v1767, 20.0
        %vm1792 = vcmp.gt.f32.partialorder %v1768, 20.0
        %v1793 = vadd.f32 %v1785, 2.0
        %v1794 = vadd.f32 %v1786, 2.0
        %v1795 = vadd.f32 %v1787, 2.0
        %v1796 = vadd.f32 %v1788, 2.0
        %v1797 = vrcp.pop %v1793
        %v1798 = vmul.f32 %v1785, %v1797
        %v1799 = vrcp.pop %v1794
        %v1800 = vmul.f32 %v1786, %v1799
        %v1801 = vrcp.pop %v1795
        %v1802 = vmul.f32 %v1787, %v1801
        %v1803 = vrcp.pop %v1796
        %v1804 = vmul.f32 %v1788, %v1803
        %v1805 = vmul.f32 %v1765, %v1798
        %v1806 = vmul.f32 %v1766, %v1800
        %v1807 = vmul.f32 %v1767, %v1802
        %v1808 = vmul.f32 %v1768, %v1804
        %v1809 = vsel %vm1789, %v1765, %v1805
        %v1810 = vsel %vm1790, %v1766, %v1806
        %v1811 = vsel %vm1791, %v1767, %v1807
        %v1812 = vsel %vm1792, %v1768, %v1808
        %1814 = vset.pattern.permute.xlu0 0
        %1815 = vperm.xlu0 %1814, %v459
        %v1816 = vpop.permute.xlu0 %1815
        %1819 = vset.pattern.permute.xlu0 0
        %1820 = vperm.xlu0 %1819, %v464
        %v1821 = vpop.permute.xlu0 %1820
        %v1823 = vadd.f32 %v1809, %v1816
        %v1824 = vadd.f32 %v1810, %v1816
        %v1825 = vadd.f32 %v1811, %v1821
        %v1826 = vadd.f32 %v1812, %v1821
        %1829 = vrot.lane.b32.xlu0 %v1824, 17
        %v1830 = vpop.permute.xlu0 %1829
        %1831 = vrot.lane.b32.xlu0 %v1826, 17
        %v1832 = vpop.permute.xlu0 %1831
        %1837 = vrot.lane.b32.xlu0 %v1823, 17
        %v1838 = vpop.permute.xlu0 %1837
        %1839 = vrot.lane.b32.xlu0 %v1825, 17
        %v1840 = vpop.permute.xlu0 %1839
        %v1841 = vsel %vm474, %v1838, %v1830
        %v1842 = vsel %vm474, %v1840, %v1832
        %v1847 = vsel %vm474, %v1830, %v1838
        %v1848 = vsel %vm474, %v1832, %v1840
        %v1849 = vld [vmem:[%s3] sm:$0xff]
        %v1850 = vld [vmem:[%s3 + $0x8] sm:$0xff]
        %v1852 = vsel %vm591, %v1849, 0
        %v1855 = vsel %vm591, %v1850, 0
        %1857 = vmatprep.subr.mxu0 %v1841
        %1858 = vmatpush1.msra.mxu0 %v1847
        %1859 = vmatprep.subr.mxu0 %v1842
        %1860 = vmatpush1.msra.mxu0 %v1848
        %1861 = vmatprep.subr.mxu0 0.0
        %1862 = vmatpush1.msra.mxu0 0.0
        %1863 = vmatprep.subr.mxu0 0.0
        %1864 = vmatpush1.msra.mxu0 0.0
        %1865 = vmatprep.subr.mxu0 0.0
        %1866 = vmatpush1.msra.mxu0 0.0
        %1867 = vmatprep.subr.mxu0 0.0
        %1868 = vmatpush1.msra.mxu0 0.0
        %1869 = vmatprep.subr.mxu0 0.0
        %1870 = vmatpush1.msra.mxu0 0.0
        %1871 = vmatprep.subr.mxu0 0.0
        %1872 = vmatpush1.msra.mxu0 0.0
        %1873 = vmatprep.subr.mxu0 0.0
        %1874 = vmatpush1.msra.mxu0 0.0
        %1875 = vmatprep.subr.mxu0 0.0
        %1876 = vmatpush1.msra.mxu0 0.0
        %1877 = vmatprep.subr.mxu0 0.0
        %1878 = vmatpush1.msra.mxu0 0.0
        %1879 = vmatprep.subr.mxu0 0.0
        %1880 = vmatpush1.msra.mxu0 0.0
        %1881 = vmatprep.subr.mxu0 0.0
        %1882 = vmatpush1.msra.mxu0 0.0
        %1883 = vmatprep.subr.mxu0 0.0
        %1884 = vmatpush1.msra.mxu0 0.0
        %1885 = vmatprep.subr.mxu0 0.0
        %1886 = vmatpush1.msra.mxu0 0.0
        %1887 = vmatprep.subr.mxu0 0.0
        %1888 = vmatpush1.msra.mxu0 0.0
        %1889 = vmatprep.subr.mxu0 0.0
        %1890 = vmatpush1.msra.mxu0 0.0
        %1891 = vmatprep.subr.mxu0 0.0
        %1892 = vmatpush1.msra.mxu0 0.0
        %1893 = vmatprep.subr.mxu0 0.0
        %1894 = vmatpush1.msra.mxu0 0.0
        %1895 = vmatprep.subr.mxu0 0.0
        %1896 = vmatpush1.msra.mxu0 0.0
        %1897 = vmatprep.subr.mxu0 0.0
        %1898 = vmatpush1.msra.mxu0 0.0
        %1899 = vmatprep.subr.mxu0 0.0
        %1900 = vmatpush1.msra.mxu0 0.0
        %1901 = vmatprep.subr.mxu0 0.0
        %1902 = vmatpush1.msra.mxu0 0.0
        %1903 = vmatprep.subr.mxu0 0.0
        %1904 = vmatpush1.msra.mxu0 0.0
        %1905 = vmatprep.subr.mxu0 0.0
        %1906 = vmatpush1.msra.mxu0 0.0
        %1907 = vmatprep.subr.mxu0 0.0
        %1908 = vmatpush1.msra.mxu0 0.0
        %1909 = vmatprep.subr.mxu0 0.0
        %1910 = vmatpush1.msra.mxu0 0.0
        %1911 = vmatprep.subr.mxu0 0.0
        %1912 = vmatpush1.msra.mxu0 0.0
        %1913 = vmatprep.subr.mxu0 0.0
        %1914 = vmatpush1.msra.mxu0 0.0
        %1915 = vmatprep.subr.mxu0 0.0
        %1916 = vmatpush1.msra.mxu0 0.0
        %1917 = vmatprep.subr.mxu0 0.0
        %1918 = vmatpush1.msra.mxu0 0.0
        %1919 = vmatprep.subr.mxu0 0.0
        %1920 = vmatpush1.msra.mxu0 0.0
        %1921 = vmatprep.mubr.f32.mxu0 0.0
        %1922 = vmatmul.mubr.f32.gmra.mrb[0].mxu0 %v1852
        %v1923 = vpop.f32.mrb[0].mxu0
        %v1924 = vadd.f32 0.0, %v1923
        %v1925 = vpop.f32.mrb[0].mxu0
        %v1926 = vadd.f32 0.0, %v1925
        %1927 = vmatprep.mubr.f32.mxu0 0.0
        %1928 = vmatmul.mubr.f32.gmra.mrb[0].mxu0 %v1855
        %v1929 = vpop.f32.mrb[0].mxu0
        %v1930 = vadd.f32 0.0, %v1929
        %v1931 = vpop.f32.mrb[0].mxu0
        %v1932 = vadd.f32 0.0, %v1931
        %1933 = vdwg.mxu0
        %v1934 = vmul.f32 %v1924, %v575
        %v1935 = vmul.f32 %v1926, %v579
        %v1936 = vmul.f32 %v1930, %v575
        %v1937 = vmul.f32 %v1932, %v579
        %1938 = vrot.lane.b32.xlu0 %v1824, 16
        %v1939 = vpop.permute.xlu0 %1938
        %1940 = vrot.lane.b32.xlu0 %v1826, 16
        %v1941 = vpop.permute.xlu0 %1940
        %1944 = vrot.lane.b32.xlu0 %v1823, 16
        %v1945 = vpop.permute.xlu0 %1944
        %1946 = vrot.lane.b32.xlu0 %v1825, 16
        %v1947 = vpop.permute.xlu0 %1946
        %v1948 = vsel %vm591, %v1945, %v1939
        %v1949 = vsel %vm591, %v1947, %v1941
        %v1954 = vsel %vm591, %v1939, %v1945
        %v1955 = vsel %vm591, %v1941, %v1947
        %s1956 = scalar_lea.vmem %s3, 16
        %v1957 = vld [vmem:[%s1956] sm:$0xff]
        %v1958 = vld [vmem:[%s1956 + $0x8] sm:$0xff]
        %v1960 = vsel %vm591, %v1957, 0
        %v1963 = vsel %vm591, %v1958, 0
        %1965 = vmatprep.subr.mxu0 %v1948
        %1966 = vmatpush1.msra.mxu0 %v1954
        %1967 = vmatprep.subr.mxu0 %v1949
        %1968 = vmatpush1.msra.mxu0 %v1955
        %1969 = vmatprep.subr.mxu0 0.0
        %1970 = vmatpush1.msra.mxu0 0.0
        %1971 = vmatprep.subr.mxu0 0.0
        %1972 = vmatpush1.msra.mxu0 0.0
        %1973 = vmatprep.subr.mxu0 0.0
        %1974 = vmatpush1.msra.mxu0 0.0
        %1975 = vmatprep.subr.mxu0 0.0
        %1976 = vmatpush1.msra.mxu0 0.0
        %1977 = vmatprep.subr.mxu0 0.0
        %1978 = vmatpush1.msra.mxu0 0.0
        %1979 = vmatprep.subr.mxu0 0.0
        %1980 = vmatpush1.msra.mxu0 0.0
        %1981 = vmatprep.subr.mxu0 0.0
        %1982 = vmatpush1.msra.mxu0 0.0
        %1983 = vmatprep.subr.mxu0 0.0
        %1984 = vmatpush1.msra.mxu0 0.0
        %1985 = vmatprep.subr.mxu0 0.0
        %1986 = vmatpush1.msra.mxu0 0.0
        %1987 = vmatprep.subr.mxu0 0.0
        %1988 = vmatpush1.msra.mxu0 0.0
        %1989 = vmatprep.subr.mxu0 0.0
        %1990 = vmatpush1.msra.mxu0 0.0
        %1991 = vmatprep.subr.mxu0 0.0
        %1992 = vmatpush1.msra.mxu0 0.0
        %1993 = vmatprep.subr.mxu0 0.0
        %1994 = vmatpush1.msra.mxu0 0.0
        %1995 = vmatprep.subr.mxu0 0.0
        %1996 = vmatpush1.msra.mxu0 0.0
        %1997 = vmatprep.subr.mxu0 0.0
        %1998 = vmatpush1.msra.mxu0 0.0
        %1999 = vmatprep.subr.mxu0 0.0
        %2000 = vmatpush1.msra.mxu0 0.0
        %2001 = vmatprep.subr.mxu0 0.0
        %2002 = vmatpush1.msra.mxu0 0.0
        %2003 = vmatprep.subr.mxu0 0.0
        %2004 = vmatpush1.msra.mxu0 0.0
        %2005 = vmatprep.subr.mxu0 0.0
        %2006 = vmatpush1.msra.mxu0 0.0
        %2007 = vmatprep.subr.mxu0 0.0
        %2008 = vmatpush1.msra.mxu0 0.0
        %2009 = vmatprep.subr.mxu0 0.0
        %2010 = vmatpush1.msra.mxu0 0.0
        %2011 = vmatprep.subr.mxu0 0.0
        %2012 = vmatpush1.msra.mxu0 0.0
        %2013 = vmatprep.subr.mxu0 0.0
        %2014 = vmatpush1.msra.mxu0 0.0
        %2015 = vmatprep.subr.mxu0 0.0
        %2016 = vmatpush1.msra.mxu0 0.0
        %2017 = vmatprep.subr.mxu0 0.0
        %2018 = vmatpush1.msra.mxu0 0.0
        %2019 = vmatprep.subr.mxu0 0.0
        %2020 = vmatpush1.msra.mxu0 0.0
        %2021 = vmatprep.subr.mxu0 0.0
        %2022 = vmatpush1.msra.mxu0 0.0
        %2023 = vmatprep.subr.mxu0 0.0
        %2024 = vmatpush1.msra.mxu0 0.0
        %2025 = vmatprep.subr.mxu0 0.0
        %2026 = vmatpush1.msra.mxu0 0.0
        %2027 = vmatprep.subr.mxu0 0.0
        %2028 = vmatpush1.msra.mxu0 0.0
        %2029 = vmatprep.mubr.f32.mxu0 0.0
        %2030 = vmatmul.mubr.f32.gmra.mrb[0].mxu0 %v1960
        %v2031 = vpop.f32.mrb[0].mxu0
        %v2032 = vadd.f32 0.0, %v2031
        %v2033 = vpop.f32.mrb[0].mxu0
        %v2034 = vadd.f32 0.0, %v2033
        %2035 = vmatprep.mubr.f32.mxu0 0.0
        %2036 = vmatmul.mubr.f32.gmra.mrb[0].mxu0 %v1963
        %v2037 = vpop.f32.mrb[0].mxu0
        %v2038 = vadd.f32 0.0, %v2037
        %v2039 = vpop.f32.mrb[0].mxu0
        %v2040 = vadd.f32 0.0, %v2039
        %2041 = vdwg.mxu0
        %v2042 = vmul.f32 %v2032, %v692
        %v2043 = vmul.f32 %v2034, %v696
        %v2044 = vmul.f32 %v2038, %v692
        %v2045 = vmul.f32 %v2040, %v696
        %v2046 = vadd.f32 %v1934, %v2042
        %v2047 = vadd.f32 %v1935, %v2043
        %v2048 = vadd.f32 %v1936, %v2044
        %v2049 = vadd.f32 %v1937, %v2045
        %2050 = vrot.lane.b32.xlu0 %v1824, 15
        %v2051 = vpop.permute.xlu0 %2050
        %2052 = vrot.lane.b32.xlu0 %v1826, 15
        %v2053 = vpop.permute.xlu0 %2052
        %2056 = vrot.lane.b32.xlu0 %v1823, 15
        %v2057 = vpop.permute.xlu0 %2056
        %2058 = vrot.lane.b32.xlu0 %v1825, 15
        %v2059 = vpop.permute.xlu0 %2058
        %v2060 = vsel %vm712, %v2057, %v2051
        %v2061 = vsel %vm712, %v2059, %v2053
        %v2066 = vsel %vm712, %v2051, %v2057
        %v2067 = vsel %vm712, %v2053, %v2059
        %s2068 = scalar_lea.vmem %s3, 32
        %v2069 = vld [vmem:[%s2068] sm:$0xff]
        %v2070 = vld [vmem:[%s2068 + $0x8] sm:$0xff]
        %v2072 = vsel %vm591, %v2069, 0
        %v2075 = vsel %vm591, %v2070, 0
        %2077 = vmatprep.subr.mxu0 %v2060
        %2078 = vmatpush1.msra.mxu0 %v2066
        %2079 = vmatprep.subr.mxu0 %v2061
        %2080 = vmatpush1.msra.mxu0 %v2067
        %2081 = vmatprep.subr.mxu0 0.0
        %2082 = vmatpush1.msra.mxu0 0.0
        %2083 = vmatprep.subr.mxu0 0.0
        %2084 = vmatpush1.msra.mxu0 0.0
        %2085 = vmatprep.subr.mxu0 0.0
        %2086 = vmatpush1.msra.mxu0 0.0
        %2087 = vmatprep.subr.mxu0 0.0
        %2088 = vmatpush1.msra.mxu0 0.0
        %2089 = vmatprep.subr.mxu0 0.0
        %2090 = vmatpush1.msra.mxu0 0.0
        %2091 = vmatprep.subr.mxu0 0.0
        %2092 = vmatpush1.msra.mxu0 0.0
        %2093 = vmatprep.subr.mxu0 0.0
        %2094 = vmatpush1.msra.mxu0 0.0
        %2095 = vmatprep.subr.mxu0 0.0
        %2096 = vmatpush1.msra.mxu0 0.0
        %2097 = vmatprep.subr.mxu0 0.0
        %2098 = vmatpush1.msra.mxu0 0.0
        %2099 = vmatprep.subr.mxu0 0.0
        %2100 = vmatpush1.msra.mxu0 0.0
        %2101 = vmatprep.subr.mxu0 0.0
        %2102 = vmatpush1.msra.mxu0 0.0
        %2103 = vmatprep.subr.mxu0 0.0
        %2104 = vmatpush1.msra.mxu0 0.0
        %2105 = vmatprep.subr.mxu0 0.0
        %2106 = vmatpush1.msra.mxu0 0.0
        %2107 = vmatprep.subr.mxu0 0.0
        %2108 = vmatpush1.msra.mxu0 0.0
        %2109 = vmatprep.subr.mxu0 0.0
        %2110 = vmatpush1.msra.mxu0 0.0
        %2111 = vmatprep.subr.mxu0 0.0
        %2112 = vmatpush1.msra.mxu0 0.0
        %2113 = vmatprep.subr.mxu0 0.0
        %2114 = vmatpush1.msra.mxu0 0.0
        %2115 = vmatprep.subr.mxu0 0.0
        %2116 = vmatpush1.msra.mxu0 0.0
        %2117 = vmatprep.subr.mxu0 0.0
        %2118 = vmatpush1.msra.mxu0 0.0
        %2119 = vmatprep.subr.mxu0 0.0
        %2120 = vmatpush1.msra.mxu0 0.0
        %2121 = vmatprep.subr.mxu0 0.0
        %2122 = vmatpush1.msra.mxu0 0.0
        %2123 = vmatprep.subr.mxu0 0.0
        %2124 = vmatpush1.msra.mxu0 0.0
        %2125 = vmatprep.subr.mxu0 0.0
        %2126 = vmatpush1.msra.mxu0 0.0
        %2127 = vmatprep.subr.mxu0 0.0
        %2128 = vmatpush1.msra.mxu0 0.0
        %2129 = vmatprep.subr.mxu0 0.0
        %2130 = vmatpush1.msra.mxu0 0.0
        %2131 = vmatprep.subr.mxu0 0.0
        %2132 = vmatpush1.msra.mxu0 0.0
        %2133 = vmatprep.subr.mxu0 0.0
        %2134 = vmatpush1.msra.mxu0 0.0
        %2135 = vmatprep.subr.mxu0 0.0
        %2136 = vmatpush1.msra.mxu0 0.0
        %2137 = vmatprep.subr.mxu0 0.0
        %2138 = vmatpush1.msra.mxu0 0.0
        %2139 = vmatprep.subr.mxu0 0.0
        %2140 = vmatpush1.msra.mxu0 0.0
        %2141 = vmatprep.mubr.f32.mxu0 0.0
        %2142 = vmatmul.mubr.f32.gmra.mrb[0].mxu0 %v2072
        %v2143 = vpop.f32.mrb[0].mxu0
        %v2144 = vadd.f32 0.0, %v2143
        %v2145 = vpop.f32.mrb[0].mxu0
        %v2146 = vadd.f32 0.0, %v2145
        %2147 = vmatprep.mubr.f32.mxu0 0.0
        %2148 = vmatmul.mubr.f32.gmra.mrb[0].mxu0 %v2075
        %v2149 = vpop.f32.mrb[0].mxu0
        %v2150 = vadd.f32 0.0, %v2149
        %v2151 = vpop.f32.mrb[0].mxu0
        %v2152 = vadd.f32 0.0, %v2151
        %2153 = vdwg.mxu0
        %v2154 = vmul.f32 %v2144, %v813
        %v2155 = vmul.f32 %v2146, %v817
        %v2156 = vmul.f32 %v2150, %v813
        %v2157 = vmul.f32 %v2152, %v817
        %v2158 = vadd.f32 %v2046, %v2154
        %v2159 = vadd.f32 %v2047, %v2155
        %v2160 = vadd.f32 %v2048, %v2156
        %v2161 = vadd.f32 %v2049, %v2157
        %2162 = vrot.lane.b32.xlu0 %v1824, 1
        %v2163 = vpop.permute.xlu0 %2162
        %2164 = vrot.lane.b32.xlu0 %v1826, 1
        %v2165 = vpop.permute.xlu0 %2164
        %2168 = vrot.lane.b32.xlu0 %v1823, 1
        %v2169 = vpop.permute.xlu0 %2168
        %2170 = vrot.lane.b32.xlu0 %v1825, 1
        %v2171 = vpop.permute.xlu0 %2170
        %v2172 = vsel %vm833, %v2169, %v2163
        %v2173 = vsel %vm833, %v2171, %v2165
        %v2178 = vsel %vm833, %v2163, %v2169
        %v2179 = vsel %vm833, %v2165, %v2171
        %s2180 = scalar_lea.vmem %s3, 48
        %v2181 = vld [vmem:[%s2180] sm:$0xff]
        %v2182 = vld [vmem:[%s2180 + $0x8] sm:$0xff]
        %v2184 = vsel %vm591, %v2181, 0
        %v2187 = vsel %vm591, %v2182, 0
        %2189 = vmatprep.subr.mxu0 %v2172
        %2190 = vmatpush1.msra.mxu0 %v2178
        %2191 = vmatprep.subr.mxu0 %v2173
        %2192 = vmatpush1.msra.mxu0 %v2179
        %2193 = vmatprep.subr.mxu0 0.0
        %2194 = vmatpush1.msra.mxu0 0.0
        %2195 = vmatprep.subr.mxu0 0.0
        %2196 = vmatpush1.msra.mxu0 0.0
        %2197 = vmatprep.subr.mxu0 0.0
        %2198 = vmatpush1.msra.mxu0 0.0
        %2199 = vmatprep.subr.mxu0 0.0
        %2200 = vmatpush1.msra.mxu0 0.0
        %2201 = vmatprep.subr.mxu0 0.0
        %2202 = vmatpush1.msra.mxu0 0.0
        %2203 = vmatprep.subr.mxu0 0.0
        %2204 = vmatpush1.msra.mxu0 0.0
        %2205 = vmatprep.subr.mxu0 0.0
        %2206 = vmatpush1.msra.mxu0 0.0
        %2207 = vmatprep.subr.mxu0 0.0
        %2208 = vmatpush1.msra.mxu0 0.0
        %2209 = vmatprep.subr.mxu0 0.0
        %2210 = vmatpush1.msra.mxu0 0.0
        %2211 = vmatprep.subr.mxu0 0.0
        %2212 = vmatpush1.msra.mxu0 0.0
        %2213 = vmatprep.subr.mxu0 0.0
        %2214 = vmatpush1.msra.mxu0 0.0
        %2215 = vmatprep.subr.mxu0 0.0
        %2216 = vmatpush1.msra.mxu0 0.0
        %2217 = vmatprep.subr.mxu0 0.0
        %2218 = vmatpush1.msra.mxu0 0.0
        %2219 = vmatprep.subr.mxu0 0.0
        %2220 = vmatpush1.msra.mxu0 0.0
        %2221 = vmatprep.subr.mxu0 0.0
        %2222 = vmatpush1.msra.mxu0 0.0
        %2223 = vmatprep.subr.mxu0 0.0
        %2224 = vmatpush1.msra.mxu0 0.0
        %2225 = vmatprep.subr.mxu0 0.0
        %2226 = vmatpush1.msra.mxu0 0.0
        %2227 = vmatprep.subr.mxu0 0.0
        %2228 = vmatpush1.msra.mxu0 0.0
        %2229 = vmatprep.subr.mxu0 0.0
        %2230 = vmatpush1.msra.mxu0 0.0
        %2231 = vmatprep.subr.mxu0 0.0
        %2232 = vmatpush1.msra.mxu0 0.0
        %2233 = vmatprep.subr.mxu0 0.0
        %2234 = vmatpush1.msra.mxu0 0.0
        %2235 = vmatprep.subr.mxu0 0.0
        %2236 = vmatpush1.msra.mxu0 0.0
        %2237 = vmatprep.subr.mxu0 0.0
        %2238 = vmatpush1.msra.mxu0 0.0
        %2239 = vmatprep.subr.mxu0 0.0
        %2240 = vmatpush1.msra.mxu0 0.0
        %2241 = vmatprep.subr.mxu0 0.0
        %2242 = vmatpush1.msra.mxu0 0.0
        %2243 = vmatprep.subr.mxu0 0.0
        %2244 = vmatpush1.msra.mxu0 0.0
        %2245 = vmatprep.subr.mxu0 0.0
        %2246 = vmatpush1.msra.mxu0 0.0
        %2247 = vmatprep.subr.mxu0 0.0
        %2248 = vmatpush1.msra.mxu0 0.0
        %2249 = vmatprep.subr.mxu0 0.0
        %2250 = vmatpush1.msra.mxu0 0.0
        %2251 = vmatprep.subr.mxu0 0.0
        %2252 = vmatpush1.msra.mxu0 0.0
        %2253 = vmatprep.mubr.f32.mxu0 0.0
        %2254 = vmatmul.mubr.f32.gmra.mrb[0].mxu0 %v2184
        %v2255 = vpop.f32.mrb[0].mxu0
        %v2256 = vadd.f32 0.0, %v2255
        %v2257 = vpop.f32.mrb[0].mxu0
        %v2258 = vadd.f32 0.0, %v2257
        %2259 = vmatprep.mubr.f32.mxu0 0.0
        %2260 = vmatmul.mubr.f32.gmra.mrb[0].mxu0 %v2187
        %v2261 = vpop.f32.mrb[0].mxu0
        %v2262 = vadd.f32 0.0, %v2261
        %v2263 = vpop.f32.mrb[0].mxu0
        %v2264 = vadd.f32 0.0, %v2263
        %2265 = vdwg.mxu0
        %v2266 = vmul.f32 %v2256, %v934
        %v2267 = vmul.f32 %v2258, %v938
        %v2268 = vmul.f32 %v2262, %v934
        %v2269 = vmul.f32 %v2264, %v938
        %v2270 = vadd.f32 %v2158, %v2266
        %v2271 = vadd.f32 %v2159, %v2267
        %v2272 = vadd.f32 %v2160, %v2268
        %v2273 = vadd.f32 %v2161, %v2269
        %s2274 = scalar_lea.vmem %s3, 64
        %v2275 = vld [vmem:[%s2274] sm:$0xff]
        %v2276 = vld [vmem:[%s2274 + $0x8] sm:$0xff]
        %v2278 = vsel %vm591, %v2275, 0
        %v2281 = vsel %vm591, %v2276, 0
        %2283 = vmatprep.subr.mxu0 %v1824
        %2284 = vmatpush1.msra.mxu0 %v1823
        %2285 = vmatprep.subr.mxu0 %v1826
        %2286 = vmatpush1.msra.mxu0 %v1825
        %2287 = vmatprep.subr.mxu0 0.0
        %2288 = vmatpush1.msra.mxu0 0.0
        %2289 = vmatprep.subr.mxu0 0.0
        %2290 = vmatpush1.msra.mxu0 0.0
        %2291 = vmatprep.subr.mxu0 0.0
        %2292 = vmatpush1.msra.mxu0 0.0
        %2293 = vmatprep.subr.mxu0 0.0
        %2294 = vmatpush1.msra.mxu0 0.0
        %2295 = vmatprep.subr.mxu0 0.0
        %2296 = vmatpush1.msra.mxu0 0.0
        %2297 = vmatprep.subr.mxu0 0.0
        %2298 = vmatpush1.msra.mxu0 0.0
        %2299 = vmatprep.subr.mxu0 0.0
        %2300 = vmatpush1.msra.mxu0 0.0
        %2301 = vmatprep.subr.mxu0 0.0
        %2302 = vmatpush1.msra.mxu0 0.0
        %2303 = vmatprep.subr.mxu0 0.0
        %2304 = vmatpush1.msra.mxu0 0.0
        %2305 = vmatprep.subr.mxu0 0.0
        %2306 = vmatpush1.msra.mxu0 0.0
        %2307 = vmatprep.subr.mxu0 0.0
        %2308 = vmatpush1.msra.mxu0 0.0
        %2309 = vmatprep.subr.mxu0 0.0
        %2310 = vmatpush1.msra.mxu0 0.0
        %2311 = vmatprep.subr.mxu0 0.0
        %2312 = vmatpush1.msra.mxu0 0.0
        %2313 = vmatprep.subr.mxu0 0.0
        %2314 = vmatpush1.msra.mxu0 0.0
        %2315 = vmatprep.subr.mxu0 0.0
        %2316 = vmatpush1.msra.mxu0 0.0
        %2317 = vmatprep.subr.mxu0 0.0
        %2318 = vmatpush1.msra.mxu0 0.0
        %2319 = vmatprep.subr.mxu0 0.0
        %2320 = vmatpush1.msra.mxu0 0.0
        %2321 = vmatprep.subr.mxu0 0.0
        %2322 = vmatpush1.msra.mxu0 0.0
        %2323 = vmatprep.subr.mxu0 0.0
        %2324 = vmatpush1.msra.mxu0 0.0
        %2325 = vmatprep.subr.mxu0 0.0
        %2326 = vmatpush1.msra.mxu0 0.0
        %2327 = vmatprep.subr.mxu0 0.0
        %2328 = vmatpush1.msra.mxu0 0.0
        %2329 = vmatprep.subr.mxu0 0.0
        %2330 = vmatpush1.msra.mxu0 0.0
        %2331 = vmatprep.subr.mxu0 0.0
        %2332 = vmatpush1.msra.mxu0 0.0
        %2333 = vmatprep.subr.mxu0 0.0
        %2334 = vmatpush1.msra.mxu0 0.0
        %2335 = vmatprep.subr.mxu0 0.0
        %2336 = vmatpush1.msra.mxu0 0.0
        %2337 = vmatprep.subr.mxu0 0.0
        %2338 = vmatpush1.msra.mxu0 0.0
        %2339 = vmatprep.subr.mxu0 0.0
        %2340 = vmatpush1.msra.mxu0 0.0
        %2341 = vmatprep.subr.mxu0 0.0
        %2342 = vmatpush1.msra.mxu0 0.0
        %2343 = vmatprep.subr.mxu0 0.0
        %2344 = vmatpush1.msra.mxu0 0.0
        %2345 = vmatprep.subr.mxu0 0.0
        %2346 = vmatpush1.msra.mxu0 0.0
        %2347 = vmatprep.mubr.f32.mxu0 0.0
        %2348 = vmatmul.mubr.f32.gmra.mrb[0].mxu0 %v2278
        %v2349 = vpop.f32.mrb[0].mxu0
        %v2350 = vadd.f32 0.0, %v2349
        %v2351 = vpop.f32.mrb[0].mxu0
        %v2352 = vadd.f32 0.0, %v2351
        %2353 = vmatprep.mubr.f32.mxu0 0.0
        %2354 = vmatmul.mubr.f32.gmra.mrb[0].mxu0 %v2281
        %v2355 = vpop.f32.mrb[0].mxu0
        %v2356 = vadd.f32 0.0, %v2355
        %v2357 = vpop.f32.mrb[0].mxu0
        %v2358 = vadd.f32 0.0, %v2357
        %2359 = vdwg.mxu0
        %v2360 = vadd.f32 %v2270, %v2350
        %v2361 = vadd.f32 %v2271, %v2352
        %v2362 = vadd.f32 %v2272, %v2356
        %v2363 = vadd.f32 %v2273, %v2358
        %2364 = vrot.lane.b32.xlu0 %v1823, 127
        %v2365 = vpop.permute.xlu0 %2364
        %2366 = vrot.lane.b32.xlu0 %v1824, 127
        %v2367 = vpop.permute.xlu0 %2366
        %2368 = vrot.lane.b32.xlu0 %v1825, 127
        %v2369 = vpop.permute.xlu0 %2368
        %2370 = vrot.lane.b32.xlu0 %v1826, 127
        %v2371 = vpop.permute.xlu0 %2370
        %v2372 = vsel %vm1047, %v2365, %v2367
        %v2373 = vsel %vm1047, %v2369, %v2371
        %v2380 = vsel %vm1047, %v2367, %v2365
        %v2381 = vsel %vm1047, %v2371, %v2369
        %s2382 = scalar_lea.vmem %s3, 80
        %v2383 = vld [vmem:[%s2382] sm:$0xff]
        %v2384 = vld [vmem:[%s2382 + $0x8] sm:$0xff]
        %v2386 = vsel %vm591, %v2383, 0
        %v2389 = vsel %vm591, %v2384, 0
        %2391 = vmatprep.subr.mxu0 %v2380
        %2392 = vmatpush1.msra.mxu0 %v2372
        %2393 = vmatprep.subr.mxu0 %v2381
        %2394 = vmatpush1.msra.mxu0 %v2373
        %2395 = vmatprep.subr.mxu0 0.0
        %2396 = vmatpush1.msra.mxu0 0.0
        %2397 = vmatprep.subr.mxu0 0.0
        %2398 = vmatpush1.msra.mxu0 0.0
        %2399 = vmatprep.subr.mxu0 0.0
        %2400 = vmatpush1.msra.mxu0 0.0
        %2401 = vmatprep.subr.mxu0 0.0
        %2402 = vmatpush1.msra.mxu0 0.0
        %2403 = vmatprep.subr.mxu0 0.0
        %2404 = vmatpush1.msra.mxu0 0.0
        %2405 = vmatprep.subr.mxu0 0.0
        %2406 = vmatpush1.msra.mxu0 0.0
        %2407 = vmatprep.subr.mxu0 0.0
        %2408 = vmatpush1.msra.mxu0 0.0
        %2409 = vmatprep.subr.mxu0 0.0
        %2410 = vmatpush1.msra.mxu0 0.0
        %2411 = vmatprep.subr.mxu0 0.0
        %2412 = vmatpush1.msra.mxu0 0.0
        %2413 = vmatprep.subr.mxu0 0.0
        %2414 = vmatpush1.msra.mxu0 0.0
        %2415 = vmatprep.subr.mxu0 0.0
        %2416 = vmatpush1.msra.mxu0 0.0
        %2417 = vmatprep.subr.mxu0 0.0
        %2418 = vmatpush1.msra.mxu0 0.0
        %2419 = vmatprep.subr.mxu0 0.0
        %2420 = vmatpush1.msra.mxu0 0.0
        %2421 = vmatprep.subr.mxu0 0.0
        %2422 = vmatpush1.msra.mxu0 0.0
        %2423 = vmatprep.subr.mxu0 0.0
        %2424 = vmatpush1.msra.mxu0 0.0
        %2425 = vmatprep.subr.mxu0 0.0
        %2426 = vmatpush1.msra.mxu0 0.0
        %2427 = vmatprep.subr.mxu0 0.0
        %2428 = vmatpush1.msra.mxu0 0.0
        %2429 = vmatprep.subr.mxu0 0.0
        %2430 = vmatpush1.msra.mxu0 0.0
        %2431 = vmatprep.subr.mxu0 0.0
        %2432 = vmatpush1.msra.mxu0 0.0
        %2433 = vmatprep.subr.mxu0 0.0
        %2434 = vmatpush1.msra.mxu0 0.0
        %2435 = vmatprep.subr.mxu0 0.0
        %2436 = vmatpush1.msra.mxu0 0.0
        %2437 = vmatprep.subr.mxu0 0.0
        %2438 = vmatpush1.msra.mxu0 0.0
        %2439 = vmatprep.subr.mxu0 0.0
        %2440 = vmatpush1.msra.mxu0 0.0
        %2441 = vmatprep.subr.mxu0 0.0
        %2442 = vmatpush1.msra.mxu0 0.0
        %2443 = vmatprep.subr.mxu0 0.0
        %2444 = vmatpush1.msra.mxu0 0.0
        %2445 = vmatprep.subr.mxu0 0.0
        %2446 = vmatpush1.msra.mxu0 0.0
        %2447 = vmatprep.subr.mxu0 0.0
        %2448 = vmatpush1.msra.mxu0 0.0
        %2449 = vmatprep.subr.mxu0 0.0
        %2450 = vmatpush1.msra.mxu0 0.0
        %2451 = vmatprep.subr.mxu0 0.0
        %2452 = vmatpush1.msra.mxu0 0.0
        %2453 = vmatprep.subr.mxu0 0.0
        %2454 = vmatpush1.msra.mxu0 0.0
        %2455 = vmatprep.mubr.f32.mxu0 0.0
        %2456 = vmatmul.mubr.f32.gmra.mrb[0].mxu0 %v2386
        %v2457 = vpop.f32.mrb[0].mxu0
        %v2458 = vadd.f32 0.0, %v2457
        %v2459 = vpop.f32.mrb[0].mxu0
        %v2460 = vadd.f32 0.0, %v2459
        %2461 = vmatprep.mubr.f32.mxu0 0.0
        %2462 = vmatmul.mubr.f32.gmra.mrb[0].mxu0 %v2389
        %v2463 = vpop.f32.mrb[0].mxu0
        %v2464 = vadd.f32 0.0, %v2463
        %v2465 = vpop.f32.mrb[0].mxu0
        %v2466 = vadd.f32 0.0, %v2465
        %2467 = vdwg.mxu0
        %v2468 = vmul.f32 %v2458, %v1149
        %v2469 = vmul.f32 %v2460, %v1153
        %v2470 = vmul.f32 %v2464, %v1149
        %v2471 = vmul.f32 %v2466, %v1153
        %v2472 = vadd.f32 %v2360, %v2468
        %v2473 = vadd.f32 %v2361, %v2469
        %v2474 = vadd.f32 %v2362, %v2470
        %v2475 = vadd.f32 %v2363, %v2471
        %2476 = vrot.lane.b32.xlu0 %v1823, 113
        %v2477 = vpop.permute.xlu0 %2476
        %2478 = vrot.lane.b32.xlu0 %v1824, 113
        %v2479 = vpop.permute.xlu0 %2478
        %2480 = vrot.lane.b32.xlu0 %v1825, 113
        %v2481 = vpop.permute.xlu0 %2480
        %2482 = vrot.lane.b32.xlu0 %v1826, 113
        %v2483 = vpop.permute.xlu0 %2482
        %v2484 = vsel %vm1168, %v2477, %v2479
        %v2485 = vsel %vm1168, %v2481, %v2483
        %v2492 = vsel %vm1168, %v2479, %v2477
        %v2493 = vsel %vm1168, %v2483, %v2481
        %s2494 = scalar_lea.vmem %s3, 96
        %v2495 = vld [vmem:[%s2494] sm:$0xff]
        %v2496 = vld [vmem:[%s2494 + $0x8] sm:$0xff]
        %v2498 = vsel %vm591, %v2495, 0
        %v2501 = vsel %vm591, %v2496, 0
        %2503 = vmatprep.subr.mxu0 %v2492
        %2504 = vmatpush1.msra.mxu0 %v2484
        %2505 = vmatprep.subr.mxu0 %v2493
        %2506 = vmatpush1.msra.mxu0 %v2485
        %2507 = vmatprep.subr.mxu0 0.0
        %2508 = vmatpush1.msra.mxu0 0.0
        %2509 = vmatprep.subr.mxu0 0.0
        %2510 = vmatpush1.msra.mxu0 0.0
        %2511 = vmatprep.subr.mxu0 0.0
        %2512 = vmatpush1.msra.mxu0 0.0
        %2513 = vmatprep.subr.mxu0 0.0
        %2514 = vmatpush1.msra.mxu0 0.0
        %2515 = vmatprep.subr.mxu0 0.0
        %2516 = vmatpush1.msra.mxu0 0.0
        %2517 = vmatprep.subr.mxu0 0.0
        %2518 = vmatpush1.msra.mxu0 0.0
        %2519 = vmatprep.subr.mxu0 0.0
        %2520 = vmatpush1.msra.mxu0 0.0
        %2521 = vmatprep.subr.mxu0 0.0
        %2522 = vmatpush1.msra.mxu0 0.0
        %2523 = vmatprep.subr.mxu0 0.0
        %2524 = vmatpush1.msra.mxu0 0.0
        %2525 = vmatprep.subr.mxu0 0.0
        %2526 = vmatpush1.msra.mxu0 0.0
        %2527 = vmatprep.subr.mxu0 0.0
        %2528 = vmatpush1.msra.mxu0 0.0
        %2529 = vmatprep.subr.mxu0 0.0
        %2530 = vmatpush1.msra.mxu0 0.0
        %2531 = vmatprep.subr.mxu0 0.0
        %2532 = vmatpush1.msra.mxu0 0.0
        %2533 = vmatprep.subr.mxu0 0.0
        %2534 = vmatpush1.msra.mxu0 0.0
        %2535 = vmatprep.subr.mxu0 0.0
        %2536 = vmatpush1.msra.mxu0 0.0
        %2537 = vmatprep.subr.mxu0 0.0
        %2538 = vmatpush1.msra.mxu0 0.0
        %2539 = vmatprep.subr.mxu0 0.0
        %2540 = vmatpush1.msra.mxu0 0.0
        %2541 = vmatprep.subr.mxu0 0.0
        %2542 = vmatpush1.msra.mxu0 0.0
        %2543 = vmatprep.subr.mxu0 0.0
        %2544 = vmatpush1.msra.mxu0 0.0
        %2545 = vmatprep.subr.mxu0 0.0
        %2546 = vmatpush1.msra.mxu0 0.0
        %2547 = vmatprep.subr.mxu0 0.0
        %2548 = vmatpush1.msra.mxu0 0.0
        %2549 = vmatprep.subr.mxu0 0.0
        %2550 = vmatpush1.msra.mxu0 0.0
        %2551 = vmatprep.subr.mxu0 0.0
        %2552 = vmatpush1.msra.mxu0 0.0
        %2553 = vmatprep.subr.mxu0 0.0
        %2554 = vmatpush1.msra.mxu0 0.0
        %2555 = vmatprep.subr.mxu0 0.0
        %2556 = vmatpush1.msra.mxu0 0.0
        %2557 = vmatprep.subr.mxu0 0.0
        %2558 = vmatpush1.msra.mxu0 0.0
        %2559 = vmatprep.subr.mxu0 0.0
        %2560 = vmatpush1.msra.mxu0 0.0
        %2561 = vmatprep.subr.mxu0 0.0
        %2562 = vmatpush1.msra.mxu0 0.0
        %2563 = vmatprep.subr.mxu0 0.0
        %2564 = vmatpush1.msra.mxu0 0.0
        %2565 = vmatprep.subr.mxu0 0.0
        %2566 = vmatpush1.msra.mxu0 0.0
        %2567 = vmatprep.mubr.f32.mxu0 0.0
        %2568 = vmatmul.mubr.f32.gmra.mrb[0].mxu0 %v2498
        %v2569 = vpop.f32.mrb[0].mxu0
        %v2570 = vadd.f32 0.0, %v2569
        %v2571 = vpop.f32.mrb[0].mxu0
        %v2572 = vadd.f32 0.0, %v2571
        %2573 = vmatprep.mubr.f32.mxu0 0.0
        %2574 = vmatmul.mubr.f32.gmra.mrb[0].mxu0 %v2501
        %v2575 = vpop.f32.mrb[0].mxu0
        %v2576 = vadd.f32 0.0, %v2575
        %v2577 = vpop.f32.mrb[0].mxu0
        %v2578 = vadd.f32 0.0, %v2577
        %2579 = vdwg.mxu0
        %v2580 = vmul.f32 %v2570, %v1270
        %v2581 = vmul.f32 %v2572, %v1274
        %v2582 = vmul.f32 %v2576, %v1270
        %v2583 = vmul.f32 %v2578, %v1274
        %v2584 = vadd.f32 %v2472, %v2580
        %v2585 = vadd.f32 %v2473, %v2581
        %v2586 = vadd.f32 %v2474, %v2582
        %v2587 = vadd.f32 %v2475, %v2583
        %2588 = vrot.lane.b32.xlu0 %v1823, 112
        %v2589 = vpop.permute.xlu0 %2588
        %2590 = vrot.lane.b32.xlu0 %v1824, 112
        %v2591 = vpop.permute.xlu0 %2590
        %2592 = vrot.lane.b32.xlu0 %v1825, 112
        %v2593 = vpop.permute.xlu0 %2592
        %2594 = vrot.lane.b32.xlu0 %v1826, 112
        %v2595 = vpop.permute.xlu0 %2594
        %v2596 = vsel %vm1289, %v2589, %v2591
        %v2597 = vsel %vm1289, %v2593, %v2595
        %v2604 = vsel %vm1289, %v2591, %v2589
        %v2605 = vsel %vm1289, %v2595, %v2593
        %s2606 = scalar_lea.vmem %s3, 112
        %v2607 = vld [vmem:[%s2606] sm:$0xff]
        %v2608 = vld [vmem:[%s2606 + $0x8] sm:$0xff]
        %v2610 = vsel %vm591, %v2607, 0
        %v2613 = vsel %vm591, %v2608, 0
        %2615 = vmatprep.subr.mxu0 %v2604
        %2616 = vmatpush1.msra.mxu0 %v2596
        %2617 = vmatprep.subr.mxu0 %v2605
        %2618 = vmatpush1.msra.mxu0 %v2597
        %2619 = vmatprep.subr.mxu0 0.0
        %2620 = vmatpush1.msra.mxu0 0.0
        %2621 = vmatprep.subr.mxu0 0.0
        %2622 = vmatpush1.msra.mxu0 0.0
        %2623 = vmatprep.subr.mxu0 0.0
        %2624 = vmatpush1.msra.mxu0 0.0
        %2625 = vmatprep.subr.mxu0 0.0
        %2626 = vmatpush1.msra.mxu0 0.0
        %2627 = vmatprep.subr.mxu0 0.0
        %2628 = vmatpush1.msra.mxu0 0.0
        %2629 = vmatprep.subr.mxu0 0.0
        %2630 = vmatpush1.msra.mxu0 0.0
        %2631 = vmatprep.subr.mxu0 0.0
        %2632 = vmatpush1.msra.mxu0 0.0
        %2633 = vmatprep.subr.mxu0 0.0
        %2634 = vmatpush1.msra.mxu0 0.0
        %2635 = vmatprep.subr.mxu0 0.0
        %2636 = vmatpush1.msra.mxu0 0.0
        %2637 = vmatprep.subr.mxu0 0.0
        %2638 = vmatpush1.msra.mxu0 0.0
        %2639 = vmatprep.subr.mxu0 0.0
        %2640 = vmatpush1.msra.mxu0 0.0
        %2641 = vmatprep.subr.mxu0 0.0
        %2642 = vmatpush1.msra.mxu0 0.0
        %2643 = vmatprep.subr.mxu0 0.0
        %2644 = vmatpush1.msra.mxu0 0.0
        %2645 = vmatprep.subr.mxu0 0.0
        %2646 = vmatpush1.msra.mxu0 0.0
        %2647 = vmatprep.subr.mxu0 0.0
        %2648 = vmatpush1.msra.mxu0 0.0
        %2649 = vmatprep.subr.mxu0 0.0
        %2650 = vmatpush1.msra.mxu0 0.0
        %2651 = vmatprep.subr.mxu0 0.0
        %2652 = vmatpush1.msra.mxu0 0.0
        %2653 = vmatprep.subr.mxu0 0.0
        %2654 = vmatpush1.msra.mxu0 0.0
        %2655 = vmatprep.subr.mxu0 0.0
        %2656 = vmatpush1.msra.mxu0 0.0
        %2657 = vmatprep.subr.mxu0 0.0
        %2658 = vmatpush1.msra.mxu0 0.0
        %2659 = vmatprep.subr.mxu0 0.0
        %2660 = vmatpush1.msra.mxu0 0.0
        %2661 = vmatprep.subr.mxu0 0.0
        %2662 = vmatpush1.msra.mxu0 0.0
        %2663 = vmatprep.subr.mxu0 0.0
        %2664 = vmatpush1.msra.mxu0 0.0
        %2665 = vmatprep.subr.mxu0 0.0
        %2666 = vmatpush1.msra.mxu0 0.0
        %2667 = vmatprep.subr.mxu0 0.0
        %2668 = vmatpush1.msra.mxu0 0.0
        %2669 = vmatprep.subr.mxu0 0.0
        %2670 = vmatpush1.msra.mxu0 0.0
        %2671 = vmatprep.subr.mxu0 0.0
        %2672 = vmatpush1.msra.mxu0 0.0
        %2673 = vmatprep.subr.mxu0 0.0
        %2674 = vmatpush1.msra.mxu0 0.0
        %2675 = vmatprep.subr.mxu0 0.0
        %2676 = vmatpush1.msra.mxu0 0.0
        %2677 = vmatprep.subr.mxu0 0.0
        %2678 = vmatpush1.msra.mxu0 0.0
        %2679 = vmatprep.mubr.f32.mxu0 0.0
        %2680 = vmatmul.mubr.f32.gmra.mrb[0].mxu0 %v2610
        %v2681 = vpop.f32.mrb[0].mxu0
        %v2682 = vadd.f32 0.0, %v2681
        %v2683 = vpop.f32.mrb[0].mxu0
        %v2684 = vadd.f32 0.0, %v2683
        %2685 = vmatprep.mubr.f32.mxu0 0.0
        %2686 = vmatmul.mubr.f32.gmra.mrb[0].mxu0 %v2613
        %v2687 = vpop.f32.mrb[0].mxu0
        %v2688 = vadd.f32 0.0, %v2687
        %v2689 = vpop.f32.mrb[0].mxu0
        %v2690 = vadd.f32 0.0, %v2689
        %2691 = vdwg.mxu0
        %v2692 = vmul.f32 %v2682, %v1391
        %v2693 = vmul.f32 %v2684, %v1395
        %v2694 = vmul.f32 %v2688, %v1391
        %v2695 = vmul.f32 %v2690, %v1395
        %v2696 = vadd.f32 %v2584, %v2692
        %v2697 = vadd.f32 %v2585, %v2693
        %v2698 = vadd.f32 %v2586, %v2694
        %v2699 = vadd.f32 %v2587, %v2695
        %2700 = vrot.lane.b32.xlu0 %v1823, 111
        %v2701 = vpop.permute.xlu0 %2700
        %2702 = vrot.lane.b32.xlu0 %v1824, 111
        %v2703 = vpop.permute.xlu0 %2702
        %2704 = vrot.lane.b32.xlu0 %v1825, 111
        %v2705 = vpop.permute.xlu0 %2704
        %2706 = vrot.lane.b32.xlu0 %v1826, 111
        %v2707 = vpop.permute.xlu0 %2706
        %v2708 = vsel %vm1410, %v2701, %v2703
        %v2709 = vsel %vm1410, %v2705, %v2707
        %v2716 = vsel %vm1410, %v2703, %v2701
        %v2717 = vsel %vm1410, %v2707, %v2705
        %s2718 = scalar_lea.vmem %s3, 128
        %v2719 = vld [vmem:[%s2718] sm:$0xff]
        %v2720 = vld [vmem:[%s2718 + $0x8] sm:$0xff]
        %v2722 = vsel %vm591, %v2719, 0
        %v2725 = vsel %vm591, %v2720, 0
        %2727 = vmatprep.subr.mxu0 %v2716
        %2728 = vmatpush1.msra.mxu0 %v2708
        %2729 = vmatprep.subr.mxu0 %v2717
        %2730 = vmatpush1.msra.mxu0 %v2709
        %2731 = vmatprep.subr.mxu0 0.0
        %2732 = vmatpush1.msra.mxu0 0.0
        %2733 = vmatprep.subr.mxu0 0.0
        %2734 = vmatpush1.msra.mxu0 0.0
        %2735 = vmatprep.subr.mxu0 0.0
        %2736 = vmatpush1.msra.mxu0 0.0
        %2737 = vmatprep.subr.mxu0 0.0
        %2738 = vmatpush1.msra.mxu0 0.0
        %2739 = vmatprep.subr.mxu0 0.0
        %2740 = vmatpush1.msra.mxu0 0.0
        %2741 = vmatprep.subr.mxu0 0.0
        %2742 = vmatpush1.msra.mxu0 0.0
        %2743 = vmatprep.subr.mxu0 0.0
        %2744 = vmatpush1.msra.mxu0 0.0
        %2745 = vmatprep.subr.mxu0 0.0
        %2746 = vmatpush1.msra.mxu0 0.0
        %2747 = vmatprep.subr.mxu0 0.0
        %2748 = vmatpush1.msra.mxu0 0.0
        %2749 = vmatprep.subr.mxu0 0.0
        %2750 = vmatpush1.msra.mxu0 0.0
        %2751 = vmatprep.subr.mxu0 0.0
        %2752 = vmatpush1.msra.mxu0 0.0
        %2753 = vmatprep.subr.mxu0 0.0
        %2754 = vmatpush1.msra.mxu0 0.0
        %2755 = vmatprep.subr.mxu0 0.0
        %2756 = vmatpush1.msra.mxu0 0.0
        %2757 = vmatprep.subr.mxu0 0.0
        %2758 = vmatpush1.msra.mxu0 0.0
        %2759 = vmatprep.subr.mxu0 0.0
        %2760 = vmatpush1.msra.mxu0 0.0
        %2761 = vmatprep.subr.mxu0 0.0
        %2762 = vmatpush1.msra.mxu0 0.0
        %2763 = vmatprep.subr.mxu0 0.0
        %2764 = vmatpush1.msra.mxu0 0.0
        %2765 = vmatprep.subr.mxu0 0.0
        %2766 = vmatpush1.msra.mxu0 0.0
        %2767 = vmatprep.subr.mxu0 0.0
        %2768 = vmatpush1.msra.mxu0 0.0
        %2769 = vmatprep.subr.mxu0 0.0
        %2770 = vmatpush1.msra.mxu0 0.0
        %2771 = vmatprep.subr.mxu0 0.0
        %2772 = vmatpush1.msra.mxu0 0.0
        %2773 = vmatprep.subr.mxu0 0.0
        %2774 = vmatpush1.msra.mxu0 0.0
        %2775 = vmatprep.subr.mxu0 0.0
        %2776 = vmatpush1.msra.mxu0 0.0
        %2777 = vmatprep.subr.mxu0 0.0
        %2778 = vmatpush1.msra.mxu0 0.0
        %2779 = vmatprep.subr.mxu0 0.0
        %2780 = vmatpush1.msra.mxu0 0.0
        %2781 = vmatprep.subr.mxu0 0.0
        %2782 = vmatpush1.msra.mxu0 0.0
        %2783 = vmatprep.subr.mxu0 0.0
        %2784 = vmatpush1.msra.mxu0 0.0
        %2785 = vmatprep.subr.mxu0 0.0
        %2786 = vmatpush1.msra.mxu0 0.0
        %2787 = vmatprep.subr.mxu0 0.0
        %2788 = vmatpush1.msra.mxu0 0.0
        %2789 = vmatprep.subr.mxu0 0.0
        %2790 = vmatpush1.msra.mxu0 0.0
        %2791 = vmatprep.mubr.f32.mxu0 0.0
        %2792 = vmatmul.mubr.f32.gmra.mrb[0].mxu0 %v2722
        %v2793 = vpop.f32.mrb[0].mxu0
        %v2794 = vadd.f32 0.0, %v2793
        %v2795 = vpop.f32.mrb[0].mxu0
        %v2796 = vadd.f32 0.0, %v2795
        %2797 = vmatprep.mubr.f32.mxu0 0.0
        %2798 = vmatmul.mubr.f32.gmra.mrb[0].mxu0 %v2725
        %v2799 = vpop.f32.mrb[0].mxu0
        %v2800 = vadd.f32 0.0, %v2799
        %v2801 = vpop.f32.mrb[0].mxu0
        %v2802 = vadd.f32 0.0, %v2801
        %2803 = vdwg.mxu0
        %v2804 = vmul.f32 %v2794, %v1512
        %v2805 = vmul.f32 %v2796, %v1516
        %v2806 = vmul.f32 %v2800, %v1512
        %v2807 = vmul.f32 %v2802, %v1516
        %v2808 = vadd.f32 %v2696, %v2804
        %v2809 = vadd.f32 %v2697, %v2805
        %v2810 = vadd.f32 %v2698, %v2806
        %v2811 = vadd.f32 %v2699, %v2807
        %2812 = vset.pattern.permute.xlu0 3
        %2813 = vperm.xlu0 %2812, %v325
        %v2814 = vpop.permute.xlu0 %2813
        %2816 = vset.pattern.permute.xlu0 3
        %2817 = vperm.xlu0 %2816, %v326
        %v2818 = vpop.permute.xlu0 %2817
        %v2820 = vadd.f32 %v2808, %v2814
        %v2821 = vadd.f32 %v2809, %v2814
        %v2822 = vadd.f32 %v2810, %v2818
        %v2823 = vadd.f32 %v2811, %v2818
        %v2824 = vadd.f32 %v2820, %v2821
        %2825 = vadd.xlane.f32.xlu0 %v2824
        %v2826 = vpop.xlane.xlu0 %2825
        %v2827 = vadd.f32 %v2822, %v2823
        %2828 = vadd.xlane.f32.xlu0 %v2827
        %v2829 = vpop.xlane.xlu0 %2828
        %v2830 = vsel %vm1545, %v2826, 0.0
        %v2831 = vrot.slane %v2830, 4
        %v2832 = vadd.f32 %v2830, %v2831
        %v2833 = vrot.slane %v2832, 2
        %v2834 = vadd.f32 %v2832, %v2833
        %v2835 = vrot.slane %v2834, 1
        %v2836 = vadd.f32 %v2834, %v2835
        %v2838 = vrot.slane %v2826, 2
        %v2840 = vsel %vm1545, %v2838, 0.0
        %v2841 = vrot.slane %v2840, 4
        %v2842 = vadd.f32 %v2840, %v2841
        %v2843 = vrot.slane %v2842, 2
        %v2844 = vadd.f32 %v2842, %v2843
        %v2845 = vrot.slane %v2844, 1
        %v2846 = vadd.f32 %v2844, %v2845
        %v2847 = vrot.slane %v2826, 4
        %v2849 = vsel %vm1545, %v2847, 0.0
        %v2850 = vrot.slane %v2849, 4
        %v2851 = vadd.f32 %v2849, %v2850
        %v2852 = vrot.slane %v2851, 2
        %v2853 = vadd.f32 %v2851, %v2852
        %v2854 = vrot.slane %v2853, 1
        %v2855 = vadd.f32 %v2853, %v2854
        %v2856 = vrot.slane %v2826, 6
        %v2858 = vsel %vm1545, %v2856, 0.0
        %v2859 = vrot.slane %v2858, 4
        %v2860 = vadd.f32 %v2858, %v2859
        %v2861 = vrot.slane %v2860, 2
        %v2862 = vadd.f32 %v2860, %v2861
        %v2863 = vrot.slane %v2862, 1
        %v2864 = vadd.f32 %v2862, %v2863
        %v2865 = vsel %vm1545, %v2829, 0.0
        %v2866 = vrot.slane %v2865, 4
        %v2867 = vadd.f32 %v2865, %v2866
        %v2868 = vrot.slane %v2867, 2
        %v2869 = vadd.f32 %v2867, %v2868
        %v2870 = vrot.slane %v2869, 1
        %v2871 = vadd.f32 %v2869, %v2870
        %v2873 = vrot.slane %v2829, 2
        %v2875 = vsel %vm1545, %v2873, 0.0
        %v2876 = vrot.slane %v2875, 4
        %v2877 = vadd.f32 %v2875, %v2876
        %v2878 = vrot.slane %v2877, 2
        %v2879 = vadd.f32 %v2877, %v2878
        %v2880 = vrot.slane %v2879, 1
        %v2881 = vadd.f32 %v2879, %v2880
        %v2882 = vrot.slane %v2829, 4
        %v2884 = vsel %vm1545, %v2882, 0.0
        %v2885 = vrot.slane %v2884, 4
        %v2886 = vadd.f32 %v2884, %v2885
        %v2887 = vrot.slane %v2886, 2
        %v2888 = vadd.f32 %v2886, %v2887
        %v2889 = vrot.slane %v2888, 1
        %v2890 = vadd.f32 %v2888, %v2889
        %v2891 = vrot.slane %v2829, 6
        %v2893 = vsel %vm1545, %v2891, 0.0
        %v2894 = vrot.slane %v2893, 4
        %v2895 = vadd.f32 %v2893, %v2894
        %v2896 = vrot.slane %v2895, 2
        %v2897 = vadd.f32 %v2895, %v2896
        %v2898 = vrot.slane %v2897, 1
        %v2899 = vadd.f32 %v2897, %v2898
        %v2900 = vsel %vm1545, %v2836, %v2846
        %v2901 = vsel %vm487, %v2900, %v2855
        %v2902 = vsel %vm1618, %v2901, %v2864
        %v2903 = vsel %vm1545, %v2871, %v2881
        %v2904 = vsel %vm487, %v2903, %v2890
        %v2905 = vsel %vm1618, %v2904, %v2899
        %v2906 = vmul.f32 %v2902, 0.001953125
        %v2907 = vmul.f32 %v2905, 0.001953125
        %2909 = vset.pattern.permute.xlu0 0
        %2910 = vperm.xlu0 %2909, %v2906
        %v2911 = vpop.permute.xlu0 %2910
        %2914 = vset.pattern.permute.xlu0 0
        %2915 = vperm.xlu0 %2914, %v2907
        %v2916 = vpop.permute.xlu0 %2915
        %v2918 = vsub.f32 %v2820, %v2911
        %v2919 = vsub.f32 %v2821, %v2911
        %v2920 = vsub.f32 %v2822, %v2916
        %v2921 = vsub.f32 %v2823, %v2916
        %v2922 = vmul.f32 %v2918, %v2918
        %v2923 = vmul.f32 %v2919, %v2919
        %v2924 = vmul.f32 %v2920, %v2920
        %v2925 = vmul.f32 %v2921, %v2921
        %v2926 = vadd.f32 %v2922, %v2923
        %2927 = vadd.xlane.f32.xlu0 %v2926
        %v2928 = vpop.xlane.xlu0 %2927
        %v2929 = vadd.f32 %v2924, %v2925
        %2930 = vadd.xlane.f32.xlu0 %v2929
        %v2931 = vpop.xlane.xlu0 %2930
        %v2932 = vsel %vm1545, %v2928, 0.0
        %v2933 = vrot.slane %v2932, 4
        %v2934 = vadd.f32 %v2932, %v2933
        %v2935 = vrot.slane %v2934, 2
        %v2936 = vadd.f32 %v2934, %v2935
        %v2937 = vrot.slane %v2936, 1
        %v2938 = vadd.f32 %v2936, %v2937
        %v2940 = vrot.slane %v2928, 2
        %v2942 = vsel %vm1545, %v2940, 0.0
        %v2943 = vrot.slane %v2942, 4
        %v2944 = vadd.f32 %v2942, %v2943
        %v2945 = vrot.slane %v2944, 2
        %v2946 = vadd.f32 %v2944, %v2945
        %v2947 = vrot.slane %v2946, 1
        %v2948 = vadd.f32 %v2946, %v2947
        %v2949 = vrot.slane %v2928, 4
        %v2951 = vsel %vm1545, %v2949, 0.0
        %v2952 = vrot.slane %v2951, 4
        %v2953 = vadd.f32 %v2951, %v2952
        %v2954 = vrot.slane %v2953, 2
        %v2955 = vadd.f32 %v2953, %v2954
        %v2956 = vrot.slane %v2955, 1
        %v2957 = vadd.f32 %v2955, %v2956
        %v2958 = vrot.slane %v2928, 6
        %v2960 = vsel %vm1545, %v2958, 0.0
        %v2961 = vrot.slane %v2960, 4
        %v2962 = vadd.f32 %v2960, %v2961
        %v2963 = vrot.slane %v2962, 2
        %v2964 = vadd.f32 %v2962, %v2963
        %v2965 = vrot.slane %v2964, 1
        %v2966 = vadd.f32 %v2964, %v2965
        %v2967 = vsel %vm1545, %v2931, 0.0
        %v2968 = vrot.slane %v2967, 4
        %v2969 = vadd.f32 %v2967, %v2968
        %v2970 = vrot.slane %v2969, 2
        %v2971 = vadd.f32 %v2969, %v2970
        %v2972 = vrot.slane %v2971, 1
        %v2973 = vadd.f32 %v2971, %v2972
        %v2975 = vrot.slane %v2931, 2
        %v2977 = vsel %vm1545, %v2975, 0.0
        %v2978 = vrot.slane %v2977, 4
        %v2979 = vadd.f32 %v2977, %v2978
        %v2980 = vrot.slane %v2979, 2
        %v2981 = vadd.f32 %v2979, %v2980
        %v2982 = vrot.slane %v2981, 1
        %v2983 = vadd.f32 %v2981, %v2982
        %v2984 = vrot.slane %v2931, 4
        %v2986 = vsel %vm1545, %v2984, 0.0
        %v2987 = vrot.slane %v2986, 4
        %v2988 = vadd.f32 %v2986, %v2987
        %v2989 = vrot.slane %v2988, 2
        %v2990 = vadd.f32 %v2988, %v2989
        %v2991 = vrot.slane %v2990, 1
        %v2992 = vadd.f32 %v2990, %v2991
        %v2993 = vrot.slane %v2931, 6
        %v2995 = vsel %vm1545, %v2993, 0.0
        %v2996 = vrot.slane %v2995, 4
        %v2997 = vadd.f32 %v2995, %v2996
        %v2998 = vrot.slane %v2997, 2
        %v2999 = vadd.f32 %v2997, %v2998
        %v3000 = vrot.slane %v2999, 1
        %v3001 = vadd.f32 %v2999, %v3000
        %v3002 = vsel %vm1545, %v2938, %v2948
        %v3003 = vsel %vm487, %v3002, %v2957
        %v3004 = vsel %vm1618, %v3003, %v2966
        %v3005 = vsel %vm1545, %v2973, %v2983
        %v3006 = vsel %vm487, %v3005, %v2992
        %v3007 = vsel %vm1618, %v3006, %v3001
        %v3008 = vmul.f32 %v3004, 0.001953125
        %v3009 = vmul.f32 %v3007, 0.001953125
        %v3010 = vadd.f32 %v3008, 1e-05
        %v3011 = vadd.f32 %v3009, 1e-05
        %v3012 = vrsqrt.pop %v3010
        %v3013 = vrsqrt.pop %v3011
        %3015 = vset.pattern.permute.xlu0 0
        %3016 = vperm.xlu0 %3015, %v3012
        %v3017 = vpop.permute.xlu0 %3016
        %3020 = vset.pattern.permute.xlu0 0
        %3021 = vperm.xlu0 %3020, %v3013
        %v3022 = vpop.permute.xlu0 %3021
        %v3024 = vmul.f32 %v2918, %v3017
        %v3025 = vmul.f32 %v2919, %v3017
        %v3026 = vmul.f32 %v2920, %v3022
        %v3027 = vmul.f32 %v2921, %v3022
        %3028 = vset.pattern.permute.xlu0 4
        %3029 = vperm.xlu0 %3028, %v325
        %v3030 = vpop.permute.xlu0 %3029
        %3032 = vset.pattern.permute.xlu0 4
        %3033 = vperm.xlu0 %3032, %v326
        %v3034 = vpop.permute.xlu0 %3033
        %v3036 = vmul.f32 %v3024, %v3030
        %v3037 = vmul.f32 %v3025, %v3030
        %v3038 = vmul.f32 %v3026, %v3034
        %v3039 = vmul.f32 %v3027, %v3034
        %3040 = vset.pattern.permute.xlu0 5
        %3041 = vperm.xlu0 %3040, %v325
        %v3042 = vpop.permute.xlu0 %3041
        %3044 = vset.pattern.permute.xlu0 5
        %3045 = vperm.xlu0 %3044, %v326
        %v3046 = vpop.permute.xlu0 %3045
        %v3048 = vadd.f32 %v3036, %v3042
        %v3049 = vadd.f32 %v3037, %v3042
        %v3050 = vadd.f32 %v3038, %v3046
        %v3051 = vadd.f32 %v3039, %v3046
        %v3052 = vmin.f32 %v3048, 20.0
        %v3053 = vmin.f32 %v3049, 20.0
        %v3054 = vmin.f32 %v3050, 20.0
        %v3055 = vmin.f32 %v3051, 20.0
        %v3056 = vmul.f32 %v3052, 1.442695
        %v3057 = vpow.pop %v3056
        %v3058 = vmul.f32 %v3053, 1.442695
        %v3059 = vpow.pop %v3058
        %v3060 = vmul.f32 %v3054, 1.442695
        %v3061 = vpow.pop %v3060
        %v3062 = vmul.f32 %v3055, 1.442695
        %v3063 = vpow.pop %v3062
        %v3064 = vadd.f32 %v3057, 2.0
        %v3065 = vadd.f32 %v3059, 2.0
        %v3066 = vadd.f32 %v3061, 2.0
        %v3067 = vadd.f32 %v3063, 2.0
        %v3068 = vmul.f32 %v3057, %v3064
        %v3069 = vmul.f32 %v3059, %v3065
        %v3070 = vmul.f32 %v3061, %v3066
        %v3071 = vmul.f32 %v3063, %v3067
        %vm3072 = vcmp.gt.f32.partialorder %v3048, 20.0
        %vm3073 = vcmp.gt.f32.partialorder %v3049, 20.0
        %vm3074 = vcmp.gt.f32.partialorder %v3050, 20.0
        %vm3075 = vcmp.gt.f32.partialorder %v3051, 20.0
        %v3076 = vadd.f32 %v3068, 2.0
        %v3077 = vadd.f32 %v3069, 2.0
        %v3078 = vadd.f32 %v3070, 2.0
        %v3079 = vadd.f32 %v3071, 2.0
        %v3080 = vrcp.pop %v3076
        %v3081 = vmul.f32 %v3068, %v3080
        %v3082 = vrcp.pop %v3077
        %v3083 = vmul.f32 %v3069, %v3082
        %v3084 = vrcp.pop %v3078
        %v3085 = vmul.f32 %v3070, %v3084
        %v3086 = vrcp.pop %v3079
        %v3087 = vmul.f32 %v3071, %v3086
        %v3088 = vmul.f32 %v3048, %v3081
        %v3089 = vmul.f32 %v3049, %v3083
        %v3090 = vmul.f32 %v3050, %v3085
        %v3091 = vmul.f32 %v3051, %v3087
        %v3092 = vsel %vm3072, %v3048, %v3088
        %v3093 = vsel %vm3073, %v3049, %v3089
        %v3094 = vsel %vm3074, %v3050, %v3090
        %v3095 = vsel %vm3075, %v3051, %v3091
        %v3096 = vld [vmem:[%s7] sm:$0xff]
        %v3097 = vld [vmem:[%s7 + $0x8] sm:$0xff]
        %3098 = vset.pattern.permute.xlu0 7
        %3099 = vperm.xlu0 %3098, %v325
        %v3100 = vpop.permute.xlu0 %3099
        %3102 = vset.pattern.permute.xlu0 7
        %3103 = vperm.xlu0 %3102, %v326
        %v3104 = vpop.permute.xlu0 %3103
        %v3107 = vsel %vm480, %v3096, 0
        %v3110 = vsel %vm480, %v3097, 0
        %3112 = vmatprep.subr.mxu0 %v960
        %3113 = vmatpush1.msra.mxu0 %v958
        %3114 = vmatprep.subr.mxu0 0.0
        %3115 = vmatpush1.msra.mxu0 0.0
        %3116 = vmatprep.subr.mxu0 0.0
        %3117 = vmatpush1.msra.mxu0 0.0
        %3118 = vmatprep.subr.mxu0 0.0
        %3119 = vmatpush1.msra.mxu0 0.0
        %3120 = vmatprep.subr.mxu0 0.0
        %3121 = vmatpush1.msra.mxu0 0.0
        %3122 = vmatprep.subr.mxu0 0.0
        %3123 = vmatpush1.msra.mxu0 0.0
        %3124 = vmatprep.subr.mxu0 0.0
        %3125 = vmatpush1.msra.mxu0 0.0
        %3126 = vmatprep.subr.mxu0 0.0
        %3127 = vmatpush1.msra.mxu0 0.0
        %3128 = vmatprep.subr.mxu0 0.0
        %3129 = vmatpush1.msra.mxu0 0.0
        %3130 = vmatprep.subr.mxu0 0.0
        %3131 = vmatpush1.msra.mxu0 0.0
        %3132 = vmatprep.subr.mxu0 0.0
        %3133 = vmatpush1.msra.mxu0 0.0
        %3134 = vmatprep.subr.mxu0 0.0
        %3135 = vmatpush1.msra.mxu0 0.0
        %3136 = vmatprep.subr.mxu0 0.0
        %3137 = vmatpush1.msra.mxu0 0.0
        %3138 = vmatprep.subr.mxu0 0.0
        %3139 = vmatpush1.msra.mxu0 0.0
        %3140 = vmatprep.subr.mxu0 0.0
        %3141 = vmatpush1.msra.mxu0 0.0
        %3142 = vmatprep.subr.mxu0 0.0
        %3143 = vmatpush1.msra.mxu0 0.0
        %3144 = vmatprep.subr.mxu0 0.0
        %3145 = vmatpush1.msra.mxu0 0.0
        %3146 = vmatprep.subr.mxu0 0.0
        %3147 = vmatpush1.msra.mxu0 0.0
        %3148 = vmatprep.subr.mxu0 0.0
        %3149 = vmatpush1.msra.mxu0 0.0
        %3150 = vmatprep.subr.mxu0 0.0
        %3151 = vmatpush1.msra.mxu0 0.0
        %3152 = vmatprep.subr.mxu0 0.0
        %3153 = vmatpush1.msra.mxu0 0.0
        %3154 = vmatprep.subr.mxu0 0.0
        %3155 = vmatpush1.msra.mxu0 0.0
        %3156 = vmatprep.subr.mxu0 0.0
        %3157 = vmatpush1.msra.mxu0 0.0
        %3158 = vmatprep.subr.mxu0 0.0
        %3159 = vmatpush1.msra.mxu0 0.0
        %3160 = vmatprep.subr.mxu0 0.0
        %3161 = vmatpush1.msra.mxu0 0.0
        %3162 = vmatprep.subr.mxu0 0.0
        %3163 = vmatpush1.msra.mxu0 0.0
        %3164 = vmatprep.subr.mxu0 0.0
        %3165 = vmatpush1.msra.mxu0 0.0
        %3166 = vmatprep.subr.mxu0 0.0
        %3167 = vmatpush1.msra.mxu0 0.0
        %3168 = vmatprep.subr.mxu0 0.0
        %3169 = vmatpush1.msra.mxu0 0.0
        %3170 = vmatprep.subr.mxu0 0.0
        %3171 = vmatpush1.msra.mxu0 0.0
        %3172 = vmatprep.subr.mxu0 0.0
        %3173 = vmatpush1.msra.mxu0 0.0
        %3174 = vmatprep.subr.mxu0 0.0
        %3175 = vmatpush1.msra.mxu0 0.0
        %3176 = vmatprep.mubr.f32.mxu0 0.0
        %3177 = vmatmul.mubr.f32.gmra.mrb[0].mxu0 %v3107
        %v3178 = vpop.f32.mrb[0].mxu0
        %v3179 = vadd.f32 %v3100, %v3178
        %v3180 = vpop.f32.mrb[0].mxu0
        %v3181 = vadd.f32 %v3100, %v3180
        %3182 = vmatprep.mubr.f32.mxu0 0.0
        %3183 = vmatmul.mubr.f32.gmra.mrb[0].mxu0 %v3110
        %v3184 = vpop.f32.mrb[0].mxu0
        %v3185 = vadd.f32 %v3104, %v3184
        %v3186 = vpop.f32.mrb[0].mxu0
        %v3187 = vadd.f32 %v3104, %v3186
        %3188 = vdwg.mxu0
        %v3189 = vadd.f32 %v3092, %v3179
        %v3190 = vadd.f32 %v3093, %v3181
        %v3191 = vadd.f32 %v3094, %v3185
        %v3192 = vadd.f32 %v3095, %v3187
        %3193 = vst [vmem:[%s313] sm:$0xff] %v3189
        %3194 = vst [vmem:[%s313 + $0x8] sm:$0xff] %v3190
        %3195 = vst [vmem:[%s313 + $0x10] sm:$0xff] %v3191
        %3196 = vst [vmem:[%s313 + $0x18] sm:$0xff] %v3192
        %s3197 = sand.u32 %s208, 1
        %s3198 = scalar_lea.sflag [#allocation3], %s3197
        %s3199 = sand.u32 %s208, 1
        %s3200 = smul.addr %s3199, 32
        %s3201 = scalar_lea.vmem [#allocation2], %s3200
        // Predicated region
        $region53: #{tpu_custom_call.1} parent=51 // pred_check
          %p3202 = pneg %p218
        $region54: #{tpu_custom_call.1} parent=51 // pred_check_branch
          %3204 = sbr.rel (%p3202) target = $region56
        $region55: #{tpu_custom_call.1} parent=51 // pred_region
          %s3206 = ssub.s32 512, 512
          %3207 = vsyncadd %s3198, %s3206
          %s3208 = smul.addr %s22, 4
          %s3209 = smul.addr %s3208, 128
          %s3210 = scalar_lea.hbm %s8, %s3209
          %s3211 = sshll.u32 %s3201, 4
          %s3212 = int_to_ptr.vmem [resolvable:$true] %s3211
          %3217 = dma.vmem_to_hbm [thread:$0]  %s3212, 512, %s3210, %s3198, 256, 256, 16
        $region56: #{tpu_custom_call.1} parent=51 // pred_fallthru
          _
      $region52: #{tpu_custom_call.1} parent=5 // pred_fallthru
        _
      %p3218 = scmp.le.s32.totalorder 2, %s17
      // Predicated region
      $region57: #{tpu_custom_call.1} parent=5 // pred_check
        %p3219 = pneg %p3218
      $region58: #{tpu_custom_call.1} parent=5 // pred_check_branch
        %3221 = sbr.rel (%p3219) target = $region60
      $region59: #{tpu_custom_call.1} parent=5 // pred_region
        %s3222 = ssub.s32 %s17, 2
        // Predicated region
        $region61: #{tpu_custom_call.1} parent=59 // pred_check
          %p3223 = pneg %p224
        $region62: #{tpu_custom_call.1} parent=59 // pred_check_branch
          %3225 = sbr.rel (%p3223) target = $region64
        $region63: #{tpu_custom_call.1} parent=59 // pred_region
          %s3226 = sand.u32 %s209, 1
          %s3227 = scalar_lea.sflag [#allocation3], %s3226
          %s3228 = sand.u32 %s209, 1
          %s3229 = smul.addr %s3228, 32
          %s3230 = scalar_lea.vmem [#allocation2], %s3229
          %3231 = dma.done %s3227, 512
        $region64: #{tpu_custom_call.1} parent=59 // pred_fallthru
          _
      $region60: #{tpu_custom_call.1} parent=5 // pred_fallthru
        _
    $region6: #{tpu_custom_call.1} parent=1 // loop_footer
      %s21 = sadd.s32 1, %s17
    $region7: #{tpu_custom_call.1} parent=1 // loop_footer_branch
      %16 = sbr.rel target = $region3
    $region8: #{tpu_custom_call.1} parent=1 // loop_exit
      _
    %3232 = vsyncpa [#allocation3], 1
    %s3233 = scalar_lea.sflag [#allocation3], 1
    %3234 = vsyncpa %s3233, 1

</llo_original>
